<compile_context>
chip_gen: v5e
topology: v5e:2x2
jax: 0.10.0
libtpu: 0.0.40
codegen_flags: <defaults>
</compile_context>

<pallas_src>
import functools

import jax
import jax.numpy as jnp
import numpy as np
from jax import lax
from jax.experimental import pallas as pl
from jax.experimental.pallas import tpu as pltpu


# ---------------------------------------------------------------------------
# small in-kernel helpers
# ---------------------------------------------------------------------------
def _rotate_half_lanes(t, half):
    """[a | b] -> [b | a] along the last (lane) axis.

    Shift == half the width, so rotation direction is irrelevant.  Uses the
    XLU lane rotate (pltpu.roll) when the lane dim is a multiple of the
    128-lane vreg width, else a concat of two static slices (always lowers).
    """
    if t.shape[-1] % 128 == 0:
        return pltpu.roll(t, shift=half, axis=t.ndim - 1)
    return jnp.concatenate([t[:, half:], t[:, :half]], axis=-1)


# ---------------------------------------------------------------------------
# fused kernel: projection + ELU+1 + RoPE + linear attention + LePE + residual
# ---------------------------------------------------------------------------
def fused_linear_attention_kernel(x_ref, w_ref, b_ref, cos2_ref, sin2_ref,
                                  lepe_w_ref, lepe_b_ref, o_ref, *,
                                  num_heads, w_img):
    xm = x_ref[0]                                   # (N, C); v = x
    n, c = xm.shape
    d = c // num_heads
    d2 = d // 2
    inv_n = 1.0 / float(n)

    # ---- fused q|k projection: ONE MXU push of lane width 2C (+ bias) -------
    zqk = jnp.dot(xm, w_ref[...], preferred_element_type=jnp.float32) + b_ref[...]
    zq, zk = zqk[:, :c], zqk[:, c:]
    # ELU(alpha=1) + 1  ==  z + 1 if z > 0 else exp(z)
    q = jnp.where(zq > 0, zq + 1.0, jnp.exp(zq))
    k = jnp.where(zk > 0, zk + 1.0, jnp.exp(zk))

    cos2 = cos2_ref[...]                            # (N, C)  per head [cos  | cos]
    sin2 = sin2_ref[...]                            # (N, C)  per head [-sin | sin]

    # ---- hoisted k-mean: one full-width cross-sublane reduce ----------------
    k_mean = jnp.mean(k, axis=0, keepdims=True)     # (1, C)

    # ---- per-head linear attention (num_heads small & static -> unrolled) ---
    head_outs = []
    for hd in range(num_heads):
        c0 = hd * d
        qh = q[:, c0:c0 + d]                        # (N, D)
        kh = k[:, c0:c0 + d]
        vh = xm[:, c0:c0 + d]
        ch = cos2[:, c0:c0 + d]
        sh = sin2[:, c0:c0 + d]

        # z = 1 / (q_h . mean_n(k_h) + 1e-6)   (permutation-invariant)
        z = 1.0 / (jnp.sum(qh * k_mean[:, c0:c0 + d], axis=-1, keepdims=True) + 1e-6)

        # RoPE in rotate-half form (weights de-interleaved per head on host).
        q_rope = ch * qh + sh * _rotate_half_lanes(qh, d2)
        k_rope = ch * kh + sh * _rotate_half_lanes(kh, d2)

        # Single merged MXU pair per head (contraction/output width D, not D/2).
        kv = lax.dot_general(k_rope, vh, (((0,), (0,)), ((), ())),
                             preferred_element_type=jnp.float32)          # (D, D)
        out_h = jnp.dot(q_rope, kv, preferred_element_type=jnp.float32)   # (N, D)
        # 1/N scale folded once into z (not applied to both (N,D) operands).
        head_outs.append(out_h * (z * inv_n))

    attn = head_outs[0] if num_heads == 1 else jnp.concatenate(head_outs, axis=-1)

    # ---- LePE depthwise 3x3 conv on v(=x) + residual, in flat (N, C) form ---
    # n = y*w_img + x is row-major, so an image-x shift is a +/-1 shift along N
    # (masked at row boundaries) and an image-y shift is a +/-w_img shift
    # (zero-filled, sublane-aligned when w_img % 8 == 0).  No pad scratch, no
    # 9 misaligned window reads; taps of each conv row are combined first.
    w9 = lepe_w_ref[...]                            # (9, C), row = ky*3 + kx
    lepe_bias = lepe_b_ref[...]                     # (1, C)

    col = lax.broadcasted_iota(jnp.int32, (n, 1), 0) % w_img
    not_first_col = col != 0
    not_last_col = col != (w_img - 1)
    zero_row = jnp.zeros((1, c), dtype=xm.dtype)
    zero_rows = jnp.zeros((w_img, c), dtype=xm.dtype)

    x_left = jnp.where(not_first_col,
                       jnp.concatenate([zero_row, xm[:-1, :]], axis=0), 0.0)
    x_right = jnp.where(not_last_col,
                        jnp.concatenate([xm[1:, :], zero_row], axis=0), 0.0)
    col_taps = (x_left, xm, x_right)                # source x-1 / x / x+1

    acc = attn + lepe_bias                          # residual + conv bias
    for ky in range(3):
        row_mix = (col_taps[0] * w9[3 * ky + 0]
                   + col_taps[1] * w9[3 * ky + 1]
                   + col_taps[2] * w9[3 * ky + 2])
        if ky == 0:      # source image row y-1
            acc = acc + jnp.concatenate([zero_rows, row_mix[:n - w_img, :]], axis=0)
        elif ky == 2:    # source image row y+1
            acc = acc + jnp.concatenate([row_mix[w_img:, :], zero_rows], axis=0)
        else:
            acc = acc + row_mix

    o_ref[0] = acc                                  # ONE lane-dense (N, C) store


# ---------------------------------------------------------------------------
# host-side setup helpers (tiny, run once)
# ---------------------------------------------------------------------------
def make_rope_tables(h, w, c):
    k_max = c // 4
    theta = 1.0 / (10000.0 ** (jnp.arange(k_max, dtype=jnp.float32) / k_max))
    yi = jnp.arange(h, dtype=jnp.float32)
    xi = jnp.arange(w, dtype=jnp.float32)
    ang_y = jnp.broadcast_to(yi[:, None, None] * theta, (h, w, k_max))
    ang_x = jnp.broadcast_to(xi[None, :, None] * theta, (h, w, k_max))
    angles = jnp.concatenate([ang_y, ang_x], axis=-1)      # (h, w, c//2)
    return jnp.cos(angles), jnp.sin(angles)


def _head_deinterleave_perm(C, num_heads):
    """perm[new_col] = old_col: even(real) RoPE features first, odd(imag)
    second, within each head.  Applied to the q/k projection outputs only."""
    D = C // num_heads
    d2 = D // 2
    perm = np.zeros(C, dtype=np.int32)
    for hd in range(num_heads):
        base = hd * D
        for j in range(d2):
            perm[base + j] = base + 2 * j
            perm[base + d2 + j] = base + 2 * j + 1
    return perm


def apply_rope(t_img, cos, sin):
    # (reference only) original interleaved RoPE, mirrors the PyTorch module.
    B, h, w, C = t_img.shape
    t = t_img.reshape(B, h, w, C // 2, 2)
    re, im = t[..., 0], t[..., 1]
    out = jnp.stack([cos * re - sin * im, cos * im + sin * re], axis=-1)
    return out.reshape(B, h, w, C)


def _default_vmem_limit():
    # v5e/v6e: 128 MiB physical VMEM -> ~96-112 MiB; v7x: 64 MiB -> ~48-56 MiB.
    try:
        cap = pltpu.get_tpu_info().vmem_capacity_bytes
        return int(min(0.85 * cap, 112 * 1024 * 1024))
    except Exception:
        return 48 * 1024 * 1024


# ---------------------------------------------------------------------------
# Full forward (Pallas)
# ---------------------------------------------------------------------------
def linear_attention_forward(x, Wqk, bqk, lepe_w, lepe_b, num_heads):
    B, N, C = x.shape
    h = w = int(round(N ** 0.5))
    assert h * w == N, "square spatial grid assumed (as in the PyTorch module)"
    D = C // num_heads
    assert C % 4 == 0 and D % 2 == 0

    # Fuse Wq|Wk into a single (C, 2C) weight; de-interleave the output
    # features per head so RoPE can be applied in rotate-half form in-kernel.
    perm = _head_deinterleave_perm(C, num_heads)
    w_fused = jnp.concatenate([Wqk[:C][perm], Wqk[C:][perm]], axis=0).T        # (C, 2C)
    b_fused = jnp.concatenate([bqk[:C][perm], bqk[C:][perm]]).reshape(1, 2 * C)

    cos_t, sin_t = make_rope_tables(h, w, C)                                   # (h, w, C//2)
    d2 = D // 2
    cos3 = cos_t.reshape(N, num_heads, d2)
    sin3 = sin_t.reshape(N, num_heads, d2)
    cos2 = jnp.concatenate([cos3, cos3], axis=-1).reshape(N, C)                # [cos | cos]
    sin2 = jnp.concatenate([-sin3, sin3], axis=-1).reshape(N, C)               # [-sin | sin]

    w9c = lepe_w[:, 0].transpose(1, 2, 0).reshape(9, C)                        # (3,3,C)->(9,C)
    lepe_bias = lepe_b.reshape(1, C)

    kernel = functools.partial(fused_linear_attention_kernel,
                               num_heads=num_heads, w_img=w)
    vmem_limit = _default_vmem_limit()

    def build(use_buffered):
        const_kw = dict(pipeline_mode=pl.Buffered(1)) if use_buffered else {}

        def const_spec(shape):
            zeros = (0,) * len(shape)
            return pl.BlockSpec(shape, lambda b, _z=zeros: _z, **const_kw)

        return pl.pallas_call(
            kernel,
            out_shape=jax.ShapeDtypeStruct((B, N, C), jnp.float32),
            grid=(B,),
            in_specs=[
                pl.BlockSpec((1, N, C), lambda b: (b, 0, 0)),
                const_spec((C, 2 * C)),
                const_spec((1, 2 * C)),
                const_spec((N, C)),
                const_spec((N, C)),
                const_spec((9, C)),
                const_spec((1, C)),
            ],
            out_specs=pl.BlockSpec((1, N, C), lambda b: (b, 0, 0)),
            compiler_params=pltpu.CompilerParams(
                dimension_semantics=("parallel",),
                vmem_limit_bytes=vmem_limit,
            ),
        )

    args = (x, w_fused, b_fused, cos2, sin2, w9c, lepe_bias)
    try:
        out = jax.block_until_ready(build(True)(*args))
    except Exception:
        # Fallback if this JAX build rejects pipeline_mode=pl.Buffered(1).
        out = jax.block_until_ready(build(False)(*args))
    return out


# ---------------------------------------------------------------------------
# Pure-JAX reference (mirrors the PyTorch module exactly)
# ---------------------------------------------------------------------------
def linear_attention_reference(x, Wqk, bqk, lepe_w, lepe_b, num_heads):
    B, N, C = x.shape
    h = w = int(round(N ** 0.5))
    D = C // num_heads
    hp = lax.Precision.HIGHEST
    cos, sin = make_rope_tables(h, w, C)

    qk = jnp.einsum('bnc,dc->bnd', x, Wqk, precision=hp) + bqk
    q, k = qk[..., :C], qk[..., C:]
    elu = lambda z: jnp.where(z > 0, z, jnp.exp(z) - 1.0)
    q = elu(q) + 1.0
    k = elu(k) + 1.0
    v = x

    q_rope = apply_rope(q.reshape(B, h, w, C), cos, sin).reshape(B, N, num_heads, D).transpose(0, 2, 1, 3)
    k_rope = apply_rope(k.reshape(B, h, w, C), cos, sin).reshape(B, N, num_heads, D).transpose(0, 2, 1, 3)
    qh = q.reshape(B, N, num_heads, D).transpose(0, 2, 1, 3)
    kh = k.reshape(B, N, num_heads, D).transpose(0, 2, 1, 3)
    vh = v.reshape(B, N, num_heads, D).transpose(0, 2, 1, 3)

    z = 1.0 / (jnp.einsum('bhnd,bhd->bhn', qh, kh.mean(axis=2), precision=hp)[..., None] + 1e-6)
    kv = jnp.einsum('bhnd,bhne->bhde', k_rope * N ** -0.5, vh * N ** -0.5, precision=hp)
    out = jnp.einsum('bhnd,bhde->bhne', q_rope, kv, precision=hp) * z
    out = out.transpose(0, 2, 1, 3).reshape(B, N, C)

    v_img = x.reshape(B, h, w, C)
    vp = jnp.pad(v_img, ((0, 0), (1, 1), (1, 1), (0, 0)))
    conv = jnp.zeros_like(v_img) + lepe_b
    for dy in range(3):
        for dx in range(3):
            conv = conv + vp[:, dy:dy + h, dx:dx + w, :] * lepe_w[:, 0, dy, dx]
    return out + conv.reshape(B, N, C)


# ---------------------------------------------------------------------------
if __name__ == "__main__":
    # Small but TPU-friendly: head_dim = 128 keeps the RoPE lane rotate and all
    # per-head slices on native (8, 128) tile boundaries.
    B, C, num_heads = 2, 256, 2
    Hres = Wres = 8
    N = Hres * Wres

    key = jax.random.PRNGKey(0)
    k0, k1, k2, k3, k4 = jax.random.split(key, 5)
    x = jax.random.normal(k0, (B, N, C), dtype=jnp.float32)
    Wqk = jax.random.normal(k1, (2 * C, C), dtype=jnp.float32) * 0.05       # nn.Linear(dim, 2*dim).weight
    bqk = jax.random.normal(k2, (2 * C,), dtype=jnp.float32) * 0.1          # nn.Linear bias
    lepe_w = jax.random.normal(k3, (C, 1, 3, 3), dtype=jnp.float32) * 0.2   # Conv2d(dim,dim,3,groups=dim).weight
    lepe_b = jax.random.normal(k4, (C,), dtype=jnp.float32) * 0.1           # Conv2d bias

    out = linear_attention_forward(x, Wqk, bqk, lepe_w, lepe_b, num_heads)
    out = jax.block_until_ready(out)

    ref = linear_attention_reference(x, Wqk, bqk, lepe_w, lepe_b, num_heads)
    # Reference runs at HIGHEST precision; tolerance covers the MXU's
    # f32-via-bf16-passes scheme at these contraction sizes.
    np.testing.assert_allclose(np.asarray(out), np.asarray(ref), rtol=2e-4, atol=2e-4)

    print("KERNEL_OK")
</pallas_src>

<mosaic_0001>
module attributes {stable_mosaic.version = 11 : i64} {
  func.func @fused_linear_attention_kernel(%arg0: i32, %arg1: memref<1x64x256xf32, #tpu.memory_space<vmem>>, %arg2: memref<256x512xf32, #tpu.memory_space<vmem>>, %arg3: memref<1x512xf32, #tpu.memory_space<vmem>>, %arg4: memref<64x256xf32, #tpu.memory_space<vmem>>, %arg5: memref<64x256xf32, #tpu.memory_space<vmem>>, %arg6: memref<9x256xf32, #tpu.memory_space<vmem>>, %arg7: memref<1x256xf32, #tpu.memory_space<vmem>>, %arg8: memref<1x64x256xf32, #tpu.memory_space<vmem>>) attributes {dimension_semantics = [#tpu.dimension_semantics<parallel>], iteration_bounds = array<i64: 2>, scalar_prefetch = 0 : i64, scratch_operands = 0 : i64, tpu.core_type = #tpu.core_type<tc>, window_params = [{transform_indices = @transform_0, window_bounds = array<i64: 1, 64, 256>}, {pipeline_mode = #tpu.pipeline_mode<synchronous>, transform_indices = @transform_1, window_bounds = array<i64: 256, 512>}, {pipeline_mode = #tpu.pipeline_mode<synchronous>, transform_indices = @transform_2, window_bounds = array<i64: 1, 512>}, {pipeline_mode = #tpu.pipeline_mode<synchronous>, transform_indices = @transform_3, window_bounds = array<i64: 64, 256>}, {pipeline_mode = #tpu.pipeline_mode<synchronous>, transform_indices = @transform_4, window_bounds = array<i64: 64, 256>}, {pipeline_mode = #tpu.pipeline_mode<synchronous>, transform_indices = @transform_5, window_bounds = array<i64: 9, 256>}, {pipeline_mode = #tpu.pipeline_mode<synchronous>, transform_indices = @transform_6, window_bounds = array<i64: 1, 256>}, {transform_indices = @transform_7, window_bounds = array<i64: 1, 64, 256>}]} {
    %c0 = arith.constant 0 : index
    %c0_0 = arith.constant 0 : index
    %c0_1 = arith.constant 0 : index
    %0 = vector.load %arg1[%c0, %c0_0, %c0_1] : memref<1x64x256xf32, #tpu.memory_space<vmem>>, vector<1x64x256xf32>
    %1 = vector.shape_cast %0 : vector<1x64x256xf32> to vector<64x256xf32>
    %c0_2 = arith.constant 0 : index
    %c0_3 = arith.constant 0 : index
    %2 = vector.load %arg2[%c0_2, %c0_3] : memref<256x512xf32, #tpu.memory_space<vmem>>, vector<256x512xf32>
    %cst = arith.constant dense<0.000000e+00> : vector<64x512xf32>
    %3 = tpu.matmul %1, %2, %cst {dimension_numbers = #tpu.dot_dimension_numbers<[1], [0], [0], [1], [0, 0, 1, 1], [], []>} : vector<64x256xf32>, vector<256x512xf32>, vector<64x512xf32> -> vector<64x512xf32>
    %c0_4 = arith.constant 0 : index
    %c0_5 = arith.constant 0 : index
    %4 = vector.load %arg3[%c0_4, %c0_5] : memref<1x512xf32, #tpu.memory_space<vmem>>, vector<1x512xf32>
    %5 = vector.broadcast %4 : vector<1x512xf32> to vector<64x512xf32>
    %6 = arith.addf %3, %5 : vector<64x512xf32>
    %7 = vector.extract_strided_slice %6 {offsets = [0, 0], sizes = [64, 256], strides = [1, 1]} : vector<64x512xf32> to vector<64x256xf32>
    %8 = vector.extract_strided_slice %6 {offsets = [0, 256], sizes = [64, 256], strides = [1, 1]} : vector<64x512xf32> to vector<64x256xf32>
    %cst_6 = arith.constant 0.000000e+00 : f32
    %9 = vector.broadcast %cst_6 : f32 to vector<64x256xf32>
    %10 = arith.cmpf ogt, %7, %9 : vector<64x256xf32>
    %cst_7 = arith.constant 1.000000e+00 : f32
    %11 = vector.broadcast %cst_7 : f32 to vector<64x256xf32>
    %12 = arith.addf %7, %11 : vector<64x256xf32>
    %13 = math.exp %7 : vector<64x256xf32>
    %14 = arith.select %10, %12, %13 : vector<64x256xi1>, vector<64x256xf32>
    %cst_8 = arith.constant 0.000000e+00 : f32
    %15 = vector.broadcast %cst_8 : f32 to vector<64x256xf32>
    %16 = arith.cmpf ogt, %8, %15 : vector<64x256xf32>
    %cst_9 = arith.constant 1.000000e+00 : f32
    %17 = vector.broadcast %cst_9 : f32 to vector<64x256xf32>
    %18 = arith.addf %8, %17 : vector<64x256xf32>
    %19 = math.exp %8 : vector<64x256xf32>
    %20 = arith.select %16, %18, %19 : vector<64x256xi1>, vector<64x256xf32>
    %c0_10 = arith.constant 0 : index
    %c0_11 = arith.constant 0 : index
    %21 = vector.load %arg4[%c0_10, %c0_11] : memref<64x256xf32, #tpu.memory_space<vmem>>, vector<64x256xf32>
    %c0_12 = arith.constant 0 : index
    %c0_13 = arith.constant 0 : index
    %22 = vector.load %arg5[%c0_12, %c0_13] : memref<64x256xf32, #tpu.memory_space<vmem>>, vector<64x256xf32>
    %cst_14 = arith.constant dense<0.000000e+00> : vector<256xf32>
    %23 = vector.multi_reduction <add>, %20, %cst_14 [0] : vector<64x256xf32> to vector<256xf32>
    %24 = vector.shape_cast %23 : vector<256xf32> to vector<1x256xf32>
    %cst_15 = arith.constant 6.400000e+01 : f32
    %25 = vector.broadcast %cst_15 : f32 to vector<1x256xf32>
    %26 = arith.divf %24, %25 : vector<1x256xf32>
    %27 = vector.extract_strided_slice %14 {offsets = [0, 0], sizes = [64, 128], strides = [1, 1]} : vector<64x256xf32> to vector<64x128xf32>
    %28 = vector.extract_strided_slice %20 {offsets = [0, 0], sizes = [64, 128], strides = [1, 1]} : vector<64x256xf32> to vector<64x128xf32>
    %29 = vector.extract_strided_slice %1 {offsets = [0, 0], sizes = [64, 128], strides = [1, 1]} : vector<64x256xf32> to vector<64x128xf32>
    %30 = vector.extract_strided_slice %21 {offsets = [0, 0], sizes = [64, 128], strides = [1, 1]} : vector<64x256xf32> to vector<64x128xf32>
    %31 = vector.extract_strided_slice %22 {offsets = [0, 0], sizes = [64, 128], strides = [1, 1]} : vector<64x256xf32> to vector<64x128xf32>
    %32 = vector.extract_strided_slice %26 {offsets = [0, 0], sizes = [1, 128], strides = [1, 1]} : vector<1x256xf32> to vector<1x128xf32>
    %33 = vector.broadcast %32 : vector<1x128xf32> to vector<64x128xf32>
    %34 = arith.mulf %27, %33 : vector<64x128xf32>
    %cst_16 = arith.constant dense<0.000000e+00> : vector<64xf32>
    %35 = vector.multi_reduction <add>, %34, %cst_16 [1] : vector<64x128xf32> to vector<64xf32>
    %36 = vector.shape_cast %35 : vector<64xf32> to vector<64x1xf32>
    %cst_17 = arith.constant 9.99999997E-7 : f32
    %37 = vector.broadcast %cst_17 : f32 to vector<64x1xf32>
    %38 = arith.addf %36, %37 : vector<64x1xf32>
    %cst_18 = arith.constant 1.000000e+00 : f32
    %39 = vector.broadcast %cst_18 : f32 to vector<64x1xf32>
    %40 = arith.divf %39, %38 : vector<64x1xf32>
    %41 = arith.mulf %30, %27 : vector<64x128xf32>
    %c64_i32 = arith.constant 64 : i32
    %42 = tpu.dynamic_rotate %27 by %c64_i32 dim 1 : vector<64x128xf32>, i32 -> vector<64x128xf32>
    %43 = arith.mulf %31, %42 : vector<64x128xf32>
    %44 = arith.addf %41, %43 : vector<64x128xf32>
    %45 = arith.mulf %30, %28 : vector<64x128xf32>
    %c64_i32_19 = arith.constant 64 : i32
    %46 = tpu.dynamic_rotate %28 by %c64_i32_19 dim 1 : vector<64x128xf32>, i32 -> vector<64x128xf32>
    %47 = arith.mulf %31, %46 : vector<64x128xf32>
    %48 = arith.addf %45, %47 : vector<64x128xf32>
    %cst_20 = arith.constant dense<0.000000e+00> : vector<128x128xf32>
    %49 = tpu.matmul %48, %29, %cst_20 {dimension_numbers = #tpu.dot_dimension_numbers<[0], [0], [1], [1], [0, 1, 1, 1], [], []>} : vector<64x128xf32>, vector<64x128xf32>, vector<128x128xf32> -> vector<128x128xf32>
    %cst_21 = arith.constant dense<0.000000e+00> : vector<64x128xf32>
    %50 = tpu.matmul %44, %49, %cst_21 {dimension_numbers = #tpu.dot_dimension_numbers<[1], [0], [0], [1], [0, 0, 1, 1], [], []>} : vector<64x128xf32>, vector<128x128xf32>, vector<64x128xf32> -> vector<64x128xf32>
    %cst_22 = arith.constant 1.562500e-02 : f32
    %51 = vector.broadcast %cst_22 : f32 to vector<64x1xf32>
    %52 = arith.mulf %40, %51 : vector<64x1xf32>
    %53 = vector.broadcast %52 : vector<64x1xf32> to vector<64x128xf32>
    %54 = arith.mulf %50, %53 : vector<64x128xf32>
    %55 = vector.extract_strided_slice %14 {offsets = [0, 128], sizes = [64, 128], strides = [1, 1]} : vector<64x256xf32> to vector<64x128xf32>
    %56 = vector.extract_strided_slice %20 {offsets = [0, 128], sizes = [64, 128], strides = [1, 1]} : vector<64x256xf32> to vector<64x128xf32>
    %57 = vector.extract_strided_slice %1 {offsets = [0, 128], sizes = [64, 128], strides = [1, 1]} : vector<64x256xf32> to vector<64x128xf32>
    %58 = vector.extract_strided_slice %21 {offsets = [0, 128], sizes = [64, 128], strides = [1, 1]} : vector<64x256xf32> to vector<64x128xf32>
    %59 = vector.extract_strided_slice %22 {offsets = [0, 128], sizes = [64, 128], strides = [1, 1]} : vector<64x256xf32> to vector<64x128xf32>
    %60 = vector.extract_strided_slice %26 {offsets = [0, 128], sizes = [1, 128], strides = [1, 1]} : vector<1x256xf32> to vector<1x128xf32>
    %61 = vector.broadcast %60 : vector<1x128xf32> to vector<64x128xf32>
    %62 = arith.mulf %55, %61 : vector<64x128xf32>
    %cst_23 = arith.constant dense<0.000000e+00> : vector<64xf32>
    %63 = vector.multi_reduction <add>, %62, %cst_23 [1] : vector<64x128xf32> to vector<64xf32>
    %64 = vector.shape_cast %63 : vector<64xf32> to vector<64x1xf32>
    %cst_24 = arith.constant 9.99999997E-7 : f32
    %65 = vector.broadcast %cst_24 : f32 to vector<64x1xf32>
    %66 = arith.addf %64, %65 : vector<64x1xf32>
    %cst_25 = arith.constant 1.000000e+00 : f32
    %67 = vector.broadcast %cst_25 : f32 to vector<64x1xf32>
    %68 = arith.divf %67, %66 : vector<64x1xf32>
    %69 = arith.mulf %58, %55 : vector<64x128xf32>
    %c64_i32_26 = arith.constant 64 : i32
    %70 = tpu.dynamic_rotate %55 by %c64_i32_26 dim 1 : vector<64x128xf32>, i32 -> vector<64x128xf32>
    %71 = arith.mulf %59, %70 : vector<64x128xf32>
    %72 = arith.addf %69, %71 : vector<64x128xf32>
    %73 = arith.mulf %58, %56 : vector<64x128xf32>
    %c64_i32_27 = arith.constant 64 : i32
    %74 = tpu.dynamic_rotate %56 by %c64_i32_27 dim 1 : vector<64x128xf32>, i32 -> vector<64x128xf32>
    %75 = arith.mulf %59, %74 : vector<64x128xf32>
    %76 = arith.addf %73, %75 : vector<64x128xf32>
    %cst_28 = arith.constant dense<0.000000e+00> : vector<128x128xf32>
    %77 = tpu.matmul %76, %57, %cst_28 {dimension_numbers = #tpu.dot_dimension_numbers<[0], [0], [1], [1], [0, 1, 1, 1], [], []>} : vector<64x128xf32>, vector<64x128xf32>, vector<128x128xf32> -> vector<128x128xf32>
    %cst_29 = arith.constant dense<0.000000e+00> : vector<64x128xf32>
    %78 = tpu.matmul %72, %77, %cst_29 {dimension_numbers = #tpu.dot_dimension_numbers<[1], [0], [0], [1], [0, 0, 1, 1], [], []>} : vector<64x128xf32>, vector<128x128xf32>, vector<64x128xf32> -> vector<64x128xf32>
    %cst_30 = arith.constant 1.562500e-02 : f32
    %79 = vector.broadcast %cst_30 : f32 to vector<64x1xf32>
    %80 = arith.mulf %68, %79 : vector<64x1xf32>
    %81 = vector.broadcast %80 : vector<64x1xf32> to vector<64x128xf32>
    %82 = arith.mulf %78, %81 : vector<64x128xf32>
    %83 = tpu.concatenate %54, %82 in 1 : vector<64x128xf32>, vector<64x128xf32> -> vector<64x256xf32>
    %c0_31 = arith.constant 0 : index
    %c0_32 = arith.constant 0 : index
    %84 = vector.load %arg6[%c0_31, %c0_32] : memref<9x256xf32, #tpu.memory_space<vmem>>, vector<9x256xf32>
    %c0_33 = arith.constant 0 : index
    %c0_34 = arith.constant 0 : index
    %85 = vector.load %arg7[%c0_33, %c0_34] : memref<1x256xf32, #tpu.memory_space<vmem>>, vector<1x256xf32>
    %86 = tpu.iota {dimensions = array<i32: 0>} : vector<64x1xi32>
    %c8_i32 = arith.constant 8 : i32
    %c0_i32 = arith.constant 0 : i32
    %87 = arith.cmpi eq, %c8_i32, %c0_i32 : i32
    %c1_i32 = arith.constant 1 : i32
    %88 = arith.select %87, %c1_i32, %c8_i32 : i32
    %89 = vector.broadcast %88 : i32 to vector<64x1xi32>
    %90 = arith.remsi %86, %89 : vector<64x1xi32>
    %c0_i32_35 = arith.constant 0 : i32
    %91 = vector.broadcast %c0_i32_35 : i32 to vector<64x1xi32>
    %92 = arith.cmpi ne, %90, %91 : vector<64x1xi32>
    %c0_i32_36 = arith.constant 0 : i32
    %93 = vector.broadcast %c0_i32_36 : i32 to vector<64x1xi32>
    %94 = arith.cmpi slt, %90, %93 : vector<64x1xi32>
    %c0_i32_37 = arith.constant 0 : i32
    %95 = arith.cmpi slt, %88, %c0_i32_37 : i32
    %96 = vector.broadcast %95 : i1 to vector<64x1xi1>
    %97 = vector.broadcast %96 : vector<64x1xi1> to vector<64x1xi1>
    %98 = arith.xori %94, %97 : vector<64x1xi1>
    %99 = arith.andi %98, %92 : vector<64x1xi1>
    %100 = vector.broadcast %88 : i32 to vector<64x1xi32>
    %101 = arith.addi %90, %100 : vector<64x1xi32>
    %102 = arith.select %99, %101, %90 : vector<64x1xi1>, vector<64x1xi32>
    %c0_i32_38 = arith.constant 0 : i32
    %103 = vector.broadcast %c0_i32_38 : i32 to vector<64x1xi32>
    %104 = arith.cmpi ne, %102, %103 : vector<64x1xi32>
    %c7_i32 = arith.constant 7 : i32
    %105 = vector.broadcast %c7_i32 : i32 to vector<64x1xi32>
    %106 = arith.cmpi ne, %102, %105 : vector<64x1xi32>
    %cst_39 = arith.constant 0.000000e+00 : f32
    %107 = vector.broadcast %cst_39 : f32 to vector<1x256xf32>
    %cst_40 = arith.constant 0.000000e+00 : f32
    %108 = vector.broadcast %cst_40 : f32 to vector<8x256xf32>
    %109 = vector.extract_strided_slice %1 {offsets = [0, 0], sizes = [63, 256], strides = [1, 1]} : vector<64x256xf32> to vector<63x256xf32>
    %110 = tpu.concatenate %107, %109 in 0 : vector<1x256xf32>, vector<63x256xf32> -> vector<64x256xf32>
    %cst_41 = arith.constant 0.000000e+00 : f32
    %111 = vector.shape_cast %104 : vector<64x1xi1> to vector<64x1xi1>
    %112 = vector.broadcast %111 : vector<64x1xi1> to vector<64x256xi1>
    %113 = vector.broadcast %cst_41 : f32 to vector<64x256xf32>
    %114 = arith.select %112, %110, %113 : vector<64x256xi1>, vector<64x256xf32>
    %115 = vector.extract_strided_slice %1 {offsets = [1, 0], sizes = [63, 256], strides = [1, 1]} : vector<64x256xf32> to vector<63x256xf32>
    %116 = tpu.concatenate %115, %107 in 0 : vector<63x256xf32>, vector<1x256xf32> -> vector<64x256xf32>
    %cst_42 = arith.constant 0.000000e+00 : f32
    %117 = vector.shape_cast %106 : vector<64x1xi1> to vector<64x1xi1>
    %118 = vector.broadcast %117 : vector<64x1xi1> to vector<64x256xi1>
    %119 = vector.broadcast %cst_42 : f32 to vector<64x256xf32>
    %120 = arith.select %118, %116, %119 : vector<64x256xi1>, vector<64x256xf32>
    %121 = vector.broadcast %85 : vector<1x256xf32> to vector<64x256xf32>
    %122 = arith.addf %83, %121 : vector<64x256xf32>
    %123 = vector.extract_strided_slice %84 {offsets = [0, 0], sizes = [1, 256], strides = [1, 1]} : vector<9x256xf32> to vector<1x256xf32>
    %124 = vector.shape_cast %123 : vector<1x256xf32> to vector<256xf32>
    %125 = vector.shape_cast %124 : vector<256xf32> to vector<1x256xf32>
    %126 = vector.broadcast %125 : vector<1x256xf32> to vector<64x256xf32>
    %127 = arith.mulf %114, %126 : vector<64x256xf32>
    %128 = vector.extract_strided_slice %84 {offsets = [1, 0], sizes = [1, 256], strides = [1, 1]} : vector<9x256xf32> to vector<1x256xf32>
    %129 = vector.shape_cast %128 : vector<1x256xf32> to vector<256xf32>
    %130 = vector.shape_cast %129 : vector<256xf32> to vector<1x256xf32>
    %131 = vector.broadcast %130 : vector<1x256xf32> to vector<64x256xf32>
    %132 = arith.mulf %1, %131 : vector<64x256xf32>
    %133 = arith.addf %127, %132 : vector<64x256xf32>
    %134 = vector.extract_strided_slice %84 {offsets = [2, 0], sizes = [1, 256], strides = [1, 1]} : vector<9x256xf32> to vector<1x256xf32>
    %135 = vector.shape_cast %134 : vector<1x256xf32> to vector<256xf32>
    %136 = vector.shape_cast %135 : vector<256xf32> to vector<1x256xf32>
    %137 = vector.broadcast %136 : vector<1x256xf32> to vector<64x256xf32>
    %138 = arith.mulf %120, %137 : vector<64x256xf32>
    %139 = arith.addf %133, %138 : vector<64x256xf32>
    %140 = vector.extract_strided_slice %139 {offsets = [0, 0], sizes = [56, 256], strides = [1, 1]} : vector<64x256xf32> to vector<56x256xf32>
    %141 = tpu.concatenate %108, %140 in 0 : vector<8x256xf32>, vector<56x256xf32> -> vector<64x256xf32>
    %142 = arith.addf %122, %141 : vector<64x256xf32>
    %143 = vector.extract_strided_slice %84 {offsets = [3, 0], sizes = [1, 256], strides = [1, 1]} : vector<9x256xf32> to vector<1x256xf32>
    %144 = vector.shape_cast %143 : vector<1x256xf32> to vector<256xf32>
    %145 = vector.shape_cast %144 : vector<256xf32> to vector<1x256xf32>
    %146 = vector.broadcast %145 : vector<1x256xf32> to vector<64x256xf32>
    %147 = arith.mulf %114, %146 : vector<64x256xf32>
    %148 = vector.extract_strided_slice %84 {offsets = [4, 0], sizes = [1, 256], strides = [1, 1]} : vector<9x256xf32> to vector<1x256xf32>
    %149 = vector.shape_cast %148 : vector<1x256xf32> to vector<256xf32>
    %150 = vector.shape_cast %149 : vector<256xf32> to vector<1x256xf32>
    %151 = vector.broadcast %150 : vector<1x256xf32> to vector<64x256xf32>
    %152 = arith.mulf %1, %151 : vector<64x256xf32>
    %153 = arith.addf %147, %152 : vector<64x256xf32>
    %154 = vector.extract_strided_slice %84 {offsets = [5, 0], sizes = [1, 256], strides = [1, 1]} : vector<9x256xf32> to vector<1x256xf32>
    %155 = vector.shape_cast %154 : vector<1x256xf32> to vector<256xf32>
    %156 = vector.shape_cast %155 : vector<256xf32> to vector<1x256xf32>
    %157 = vector.broadcast %156 : vector<1x256xf32> to vector<64x256xf32>
    %158 = arith.mulf %120, %157 : vector<64x256xf32>
    %159 = arith.addf %153, %158 : vector<64x256xf32>
    %160 = arith.addf %142, %159 : vector<64x256xf32>
    %161 = vector.extract_strided_slice %84 {offsets = [6, 0], sizes = [1, 256], strides = [1, 1]} : vector<9x256xf32> to vector<1x256xf32>
    %162 = vector.shape_cast %161 : vector<1x256xf32> to vector<256xf32>
    %163 = vector.shape_cast %162 : vector<256xf32> to vector<1x256xf32>
    %164 = vector.broadcast %163 : vector<1x256xf32> to vector<64x256xf32>
    %165 = arith.mulf %114, %164 : vector<64x256xf32>
    %166 = vector.extract_strided_slice %84 {offsets = [7, 0], sizes = [1, 256], strides = [1, 1]} : vector<9x256xf32> to vector<1x256xf32>
    %167 = vector.shape_cast %166 : vector<1x256xf32> to vector<256xf32>
    %168 = vector.shape_cast %167 : vector<256xf32> to vector<1x256xf32>
    %169 = vector.broadcast %168 : vector<1x256xf32> to vector<64x256xf32>
    %170 = arith.mulf %1, %169 : vector<64x256xf32>
    %171 = arith.addf %165, %170 : vector<64x256xf32>
    %172 = vector.extract_strided_slice %84 {offsets = [8, 0], sizes = [1, 256], strides = [1, 1]} : vector<9x256xf32> to vector<1x256xf32>
    %173 = vector.shape_cast %172 : vector<1x256xf32> to vector<256xf32>
    %174 = vector.shape_cast %173 : vector<256xf32> to vector<1x256xf32>
    %175 = vector.broadcast %174 : vector<1x256xf32> to vector<64x256xf32>
    %176 = arith.mulf %120, %175 : vector<64x256xf32>
    %177 = arith.addf %171, %176 : vector<64x256xf32>
    %178 = vector.extract_strided_slice %177 {offsets = [8, 0], sizes = [56, 256], strides = [1, 1]} : vector<64x256xf32> to vector<56x256xf32>
    %179 = tpu.concatenate %178, %108 in 0 : vector<56x256xf32>, vector<8x256xf32> -> vector<64x256xf32>
    %180 = arith.addf %160, %179 : vector<64x256xf32>
    %c0_43 = arith.constant 0 : index
    %c0_44 = arith.constant 0 : index
    %c0_45 = arith.constant 0 : index
    %181 = vector.load %arg8[%c0_43, %c0_44, %c0_45] : memref<1x64x256xf32, #tpu.memory_space<vmem>>, vector<1x64x256xf32>
    %182 = vector.shape_cast %181 : vector<1x64x256xf32> to vector<64x256xf32>
    %183 = vector.shape_cast %180 : vector<64x256xf32> to vector<1x64x256xf32>
    tpu.vector_store %arg8[%c0_43, %c0_44, %c0_45], %183 {strides = array<i32>} : memref<1x64x256xf32, #tpu.memory_space<vmem>>, vector<1x64x256xf32>,
    return
  }
  func.func @transform_0(%arg0: i32) -> (i32, i32, i32) {
    %c0_i32 = arith.constant 0 : i32
    %c0_i32_0 = arith.constant 0 : i32
    %c0_i32_1 = arith.constant 0 : i32
    return %arg0, %c0_i32, %c0_i32_0 : i32, i32, i32
  }
  func.func @transform_1(%arg0: i32) -> (i32, i32) {
    %c0_i32 = arith.constant 0 : i32
    %c0_i32_0 = arith.constant 0 : i32
    %c0_i32_1 = arith.constant 0 : i32
    return %c0_i32, %c0_i32_0 : i32, i32
  }
  func.func @transform_2(%arg0: i32) -> (i32, i32) {
    %c0_i32 = arith.constant 0 : i32
    %c0_i32_0 = arith.constant 0 : i32
    %c0_i32_1 = arith.constant 0 : i32
    return %c0_i32, %c0_i32_0 : i32, i32
  }
  func.func @transform_3(%arg0: i32) -> (i32, i32) {
    %c0_i32 = arith.constant 0 : i32
    %c0_i32_0 = arith.constant 0 : i32
    %c0_i32_1 = arith.constant 0 : i32
    return %c0_i32, %c0_i32_0 : i32, i32
  }
  func.func @transform_4(%arg0: i32) -> (i32, i32) {
    %c0_i32 = arith.constant 0 : i32
    %c0_i32_0 = arith.constant 0 : i32
    %c0_i32_1 = arith.constant 0 : i32
    return %c0_i32, %c0_i32_0 : i32, i32
  }
  func.func @transform_5(%arg0: i32) -> (i32, i32) {
    %c0_i32 = arith.constant 0 : i32
    %c0_i32_0 = arith.constant 0 : i32
    %c0_i32_1 = arith.constant 0 : i32
    return %c0_i32, %c0_i32_0 : i32, i32
  }
  func.func @transform_6(%arg0: i32) -> (i32, i32) {
    %c0_i32 = arith.constant 0 : i32
    %c0_i32_0 = arith.constant 0 : i32
    %c0_i32_1 = arith.constant 0 : i32
    return %c0_i32, %c0_i32_0 : i32, i32
  }
  func.func @transform_7(%arg0: i32) -> (i32, i32, i32) {
    %c0_i32 = arith.constant 0 : i32
    %c0_i32_0 = arith.constant 0 : i32
    %c0_i32_1 = arith.constant 0 : i32
    return %arg0, %c0_i32, %c0_i32_0 : i32, i32, i32
  }
}

module attributes {stable_mosaic.version = 11 : i64} {
  func.func @fused_linear_attention_kernel(%arg0: i32, %arg1: memref<1x64x256xf32, #tpu.memory_space<vmem>>, %arg2: memref<256x512xf32, #tpu.memory_space<vmem>>, %arg3: memref<1x512xf32, #tpu.memory_space<vmem>>, %arg4: memref<64x256xf32, #tpu.memory_space<vmem>>, %arg5: memref<64x256xf32, #tpu.memory_space<vmem>>, %arg6: memref<9x256xf32, #tpu.memory_space<vmem>>, %arg7: memref<1x256xf32, #tpu.memory_space<vmem>>, %arg8: memref<1x64x256xf32, #tpu.memory_space<vmem>>) attributes {dimension_semantics = [#tpu.dimension_semantics<parallel>], iteration_bounds = array<i64: 2>, scalar_prefetch = 0 : i64, scratch_operands = 0 : i64, tpu.core_type = #tpu.core_type<tc>, window_params = [{transform_indices = @transform_0, window_bounds = array<i64: 1, 64, 256>}, {pipeline_mode = #tpu.pipeline_mode<synchronous>, transform_indices = @transform_1, window_bounds = array<i64: 256, 512>}, {pipeline_mode = #tpu.pipeline_mode<synchronous>, transform_indices = @transform_2, window_bounds = array<i64: 1, 512>}, {pipeline_mode = #tpu.pipeline_mode<synchronous>, transform_indices = @transform_3, window_bounds = array<i64: 64, 256>}, {pipeline_mode = #tpu.pipeline_mode<synchronous>, transform_indices = @transform_4, window_bounds = array<i64: 64, 256>}, {pipeline_mode = #tpu.pipeline_mode<synchronous>, transform_indices = @transform_5, window_bounds = array<i64: 9, 256>}, {pipeline_mode = #tpu.pipeline_mode<synchronous>, transform_indices = @transform_6, window_bounds = array<i64: 1, 256>}, {transform_indices = @transform_7, window_bounds = array<i64: 1, 64, 256>}]} {
    %c0 = arith.constant 0 : index
    %c0_0 = arith.constant 0 : index
    %c0_1 = arith.constant 0 : index
    %0 = vector.load %arg1[%c0, %c0_0, %c0_1] : memref<1x64x256xf32, #tpu.memory_space<vmem>>, vector<1x64x256xf32>
    %1 = vector.shape_cast %0 : vector<1x64x256xf32> to vector<64x256xf32>
    %c0_2 = arith.constant 0 : index
    %c0_3 = arith.constant 0 : index
    %2 = vector.load %arg2[%c0_2, %c0_3] : memref<256x512xf32, #tpu.memory_space<vmem>>, vector<256x512xf32>
    %cst = arith.constant dense<0.000000e+00> : vector<64x512xf32>
    %3 = tpu.matmul %1, %2, %cst {dimension_numbers = #tpu.dot_dimension_numbers<[1], [0], [0], [1], [0, 0, 1, 1], [], []>} : vector<64x256xf32>, vector<256x512xf32>, vector<64x512xf32> -> vector<64x512xf32>
    %c0_4 = arith.constant 0 : index
    %c0_5 = arith.constant 0 : index
    %4 = vector.load %arg3[%c0_4, %c0_5] : memref<1x512xf32, #tpu.memory_space<vmem>>, vector<1x512xf32>
    %5 = vector.broadcast %4 : vector<1x512xf32> to vector<64x512xf32>
    %6 = arith.addf %3, %5 : vector<64x512xf32>
    %7 = vector.extract_strided_slice %6 {offsets = [0, 0], sizes = [64, 256], strides = [1, 1]} : vector<64x512xf32> to vector<64x256xf32>
    %8 = vector.extract_strided_slice %6 {offsets = [0, 256], sizes = [64, 256], strides = [1, 1]} : vector<64x512xf32> to vector<64x256xf32>
    %cst_6 = arith.constant 0.000000e+00 : f32
    %9 = vector.broadcast %cst_6 : f32 to vector<64x256xf32>
    %10 = arith.cmpf ogt, %7, %9 : vector<64x256xf32>
    %cst_7 = arith.constant 1.000000e+00 : f32
    %11 = vector.broadcast %cst_7 : f32 to vector<64x256xf32>
    %12 = arith.addf %7, %11 : vector<64x256xf32>
    %13 = math.exp %7 : vector<64x256xf32>
    %14 = arith.select %10, %12, %13 : vector<64x256xi1>, vector<64x256xf32>
    %cst_8 = arith.constant 0.000000e+00 : f32
    %15 = vector.broadcast %cst_8 : f32 to vector<64x256xf32>
    %16 = arith.cmpf ogt, %8, %15 : vector<64x256xf32>
    %cst_9 = arith.constant 1.000000e+00 : f32
    %17 = vector.broadcast %cst_9 : f32 to vector<64x256xf32>
    %18 = arith.addf %8, %17 : vector<64x256xf32>
    %19 = math.exp %8 : vector<64x256xf32>
    %20 = arith.select %16, %18, %19 : vector<64x256xi1>, vector<64x256xf32>
    %c0_10 = arith.constant 0 : index
    %c0_11 = arith.constant 0 : index
    %21 = vector.load %arg4[%c0_10, %c0_11] : memref<64x256xf32, #tpu.memory_space<vmem>>, vector<64x256xf32>
    %c0_12 = arith.constant 0 : index
    %c0_13 = arith.constant 0 : index
    %22 = vector.load %arg5[%c0_12, %c0_13] : memref<64x256xf32, #tpu.memory_space<vmem>>, vector<64x256xf32>
    %cst_14 = arith.constant dense<0.000000e+00> : vector<256xf32>
    %23 = vector.multi_reduction <add>, %20, %cst_14 [0] : vector<64x256xf32> to vector<256xf32>
    %24 = vector.shape_cast %23 : vector<256xf32> to vector<1x256xf32>
    %cst_15 = arith.constant 6.400000e+01 : f32
    %25 = vector.broadcast %cst_15 : f32 to vector<1x256xf32>
    %26 = arith.divf %24, %25 : vector<1x256xf32>
    %27 = vector.extract_strided_slice %14 {offsets = [0, 0], sizes = [64, 128], strides = [1, 1]} : vector<64x256xf32> to vector<64x128xf32>
    %28 = vector.extract_strided_slice %20 {offsets = [0, 0], sizes = [64, 128], strides = [1, 1]} : vector<64x256xf32> to vector<64x128xf32>
    %29 = vector.extract_strided_slice %1 {offsets = [0, 0], sizes = [64, 128], strides = [1, 1]} : vector<64x256xf32> to vector<64x128xf32>
    %30 = vector.extract_strided_slice %21 {offsets = [0, 0], sizes = [64, 128], strides = [1, 1]} : vector<64x256xf32> to vector<64x128xf32>
    %31 = vector.extract_strided_slice %22 {offsets = [0, 0], sizes = [64, 128], strides = [1, 1]} : vector<64x256xf32> to vector<64x128xf32>
    %32 = vector.extract_strided_slice %26 {offsets = [0, 0], sizes = [1, 128], strides = [1, 1]} : vector<1x256xf32> to vector<1x128xf32>
    %33 = vector.broadcast %32 : vector<1x128xf32> to vector<64x128xf32>
    %34 = arith.mulf %27, %33 : vector<64x128xf32>
    %cst_16 = arith.constant dense<0.000000e+00> : vector<64xf32>
    %35 = vector.multi_reduction <add>, %34, %cst_16 [1] : vector<64x128xf32> to vector<64xf32>
    %36 = vector.shape_cast %35 : vector<64xf32> to vector<64x1xf32>
    %cst_17 = arith.constant 9.99999997E-7 : f32
    %37 = vector.broadcast %cst_17 : f32 to vector<64x1xf32>
    %38 = arith.addf %36, %37 : vector<64x1xf32>
    %cst_18 = arith.constant 1.000000e+00 : f32
    %39 = vector.broadcast %cst_18 : f32 to vector<64x1xf32>
    %40 = arith.divf %39, %38 : vector<64x1xf32>
    %41 = arith.mulf %30, %27 : vector<64x128xf32>
    %c64_i32 = arith.constant 64 : i32
    %42 = tpu.dynamic_rotate %27 by %c64_i32 dim 1 : vector<64x128xf32>, i32 -> vector<64x128xf32>
    %43 = arith.mulf %31, %42 : vector<64x128xf32>
    %44 = arith.addf %41, %43 : vector<64x128xf32>
    %45 = arith.mulf %30, %28 : vector<64x128xf32>
    %c64_i32_19 = arith.constant 64 : i32
    %46 = tpu.dynamic_rotate %28 by %c64_i32_19 dim 1 : vector<64x128xf32>, i32 -> vector<64x128xf32>
    %47 = arith.mulf %31, %46 : vector<64x128xf32>
    %48 = arith.addf %45, %47 : vector<64x128xf32>
    %cst_20 = arith.constant dense<0.000000e+00> : vector<128x128xf32>
    %49 = tpu.matmul %48, %29, %cst_20 {dimension_numbers = #tpu.dot_dimension_numbers<[0], [0], [1], [1], [0, 1, 1, 1], [], []>} : vector<64x128xf32>, vector<64x128xf32>, vector<128x128xf32> -> vector<128x128xf32>
    %cst_21 = arith.constant dense<0.000000e+00> : vector<64x128xf32>
    %50 = tpu.matmul %44, %49, %cst_21 {dimension_numbers = #tpu.dot_dimension_numbers<[1], [0], [0], [1], [0, 0, 1, 1], [], []>} : vector<64x128xf32>, vector<128x128xf32>, vector<64x128xf32> -> vector<64x128xf32>
    %cst_22 = arith.constant 1.562500e-02 : f32
    %51 = vector.broadcast %cst_22 : f32 to vector<64x1xf32>
    %52 = arith.mulf %40, %51 : vector<64x1xf32>
    %53 = vector.broadcast %52 : vector<64x1xf32> to vector<64x128xf32>
    %54 = arith.mulf %50, %53 : vector<64x128xf32>
    %55 = vector.extract_strided_slice %14 {offsets = [0, 128], sizes = [64, 128], strides = [1, 1]} : vector<64x256xf32> to vector<64x128xf32>
    %56 = vector.extract_strided_slice %20 {offsets = [0, 128], sizes = [64, 128], strides = [1, 1]} : vector<64x256xf32> to vector<64x128xf32>
    %57 = vector.extract_strided_slice %1 {offsets = [0, 128], sizes = [64, 128], strides = [1, 1]} : vector<64x256xf32> to vector<64x128xf32>
    %58 = vector.extract_strided_slice %21 {offsets = [0, 128], sizes = [64, 128], strides = [1, 1]} : vector<64x256xf32> to vector<64x128xf32>
    %59 = vector.extract_strided_slice %22 {offsets = [0, 128], sizes = [64, 128], strides = [1, 1]} : vector<64x256xf32> to vector<64x128xf32>
    %60 = vector.extract_strided_slice %26 {offsets = [0, 128], sizes = [1, 128], strides = [1, 1]} : vector<1x256xf32> to vector<1x128xf32>
    %61 = vector.broadcast %60 : vector<1x128xf32> to vector<64x128xf32>
    %62 = arith.mulf %55, %61 : vector<64x128xf32>
    %cst_23 = arith.constant dense<0.000000e+00> : vector<64xf32>
    %63 = vector.multi_reduction <add>, %62, %cst_23 [1] : vector<64x128xf32> to vector<64xf32>
    %64 = vector.shape_cast %63 : vector<64xf32> to vector<64x1xf32>
    %cst_24 = arith.constant 9.99999997E-7 : f32
    %65 = vector.broadcast %cst_24 : f32 to vector<64x1xf32>
    %66 = arith.addf %64, %65 : vector<64x1xf32>
    %cst_25 = arith.constant 1.000000e+00 : f32
    %67 = vector.broadcast %cst_25 : f32 to vector<64x1xf32>
    %68 = arith.divf %67, %66 : vector<64x1xf32>
    %69 = arith.mulf %58, %55 : vector<64x128xf32>
    %c64_i32_26 = arith.constant 64 : i32
    %70 = tpu.dynamic_rotate %55 by %c64_i32_26 dim 1 : vector<64x128xf32>, i32 -> vector<64x128xf32>
    %71 = arith.mulf %59, %70 : vector<64x128xf32>
    %72 = arith.addf %69, %71 : vector<64x128xf32>
    %73 = arith.mulf %58, %56 : vector<64x128xf32>
    %c64_i32_27 = arith.constant 64 : i32
    %74 = tpu.dynamic_rotate %56 by %c64_i32_27 dim 1 : vector<64x128xf32>, i32 -> vector<64x128xf32>
    %75 = arith.mulf %59, %74 : vector<64x128xf32>
    %76 = arith.addf %73, %75 : vector<64x128xf32>
    %cst_28 = arith.constant dense<0.000000e+00> : vector<128x128xf32>
    %77 = tpu.matmul %76, %57, %cst_28 {dimension_numbers = #tpu.dot_dimension_numbers<[0], [0], [1], [1], [0, 1, 1, 1], [], []>} : vector<64x128xf32>, vector<64x128xf32>, vector<128x128xf32> -> vector<128x128xf32>
    %cst_29 = arith.constant dense<0.000000e+00> : vector<64x128xf32>
    %78 = tpu.matmul %72, %77, %cst_29 {dimension_numbers = #tpu.dot_dimension_numbers<[1], [0], [0], [1], [0, 0, 1, 1], [], []>} : vector<64x128xf32>, vector<128x128xf32>, vector<64x128xf32> -> vector<64x128xf32>
    %cst_30 = arith.constant 1.562500e-02 : f32
    %79 = vector.broadcast %cst_30 : f32 to vector<64x1xf32>
    %80 = arith.mulf %68, %79 : vector<64x1xf32>
    %81 = vector.broadcast %80 : vector<64x1xf32> to vector<64x128xf32>
    %82 = arith.mulf %78, %81 : vector<64x128xf32>
    %83 = tpu.concatenate %54, %82 in 1 : vector<64x128xf32>, vector<64x128xf32> -> vector<64x256xf32>
    %c0_31 = arith.constant 0 : index
    %c0_32 = arith.constant 0 : index
    %84 = vector.load %arg6[%c0_31, %c0_32] : memref<9x256xf32, #tpu.memory_space<vmem>>, vector<9x256xf32>
    %c0_33 = arith.constant 0 : index
    %c0_34 = arith.constant 0 : index
    %85 = vector.load %arg7[%c0_33, %c0_34] : memref<1x256xf32, #tpu.memory_space<vmem>>, vector<1x256xf32>
    %86 = tpu.iota {dimensions = array<i32: 0>} : vector<64x1xi32>
    %c8_i32 = arith.constant 8 : i32
    %c0_i32 = arith.constant 0 : i32
    %87 = arith.cmpi eq, %c8_i32, %c0_i32 : i32
    %c1_i32 = arith.constant 1 : i32
    %88 = arith.select %87, %c1_i32, %c8_i32 : i32
    %89 = vector.broadcast %88 : i32 to vector<64x1xi32>
    %90 = arith.remsi %86, %89 : vector<64x1xi32>
    %c0_i32_35 = arith.constant 0 : i32
    %91 = vector.broadcast %c0_i32_35 : i32 to vector<64x1xi32>
    %92 = arith.cmpi ne, %90, %91 : vector<64x1xi32>
    %c0_i32_36 = arith.constant 0 : i32
    %93 = vector.broadcast %c0_i32_36 : i32 to vector<64x1xi32>
    %94 = arith.cmpi slt, %90, %93 : vector<64x1xi32>
    %c0_i32_37 = arith.constant 0 : i32
    %95 = arith.cmpi slt, %88, %c0_i32_37 : i32
    %96 = vector.broadcast %95 : i1 to vector<64x1xi1>
    %97 = vector.broadcast %96 : vector<64x1xi1> to vector<64x1xi1>
    %98 = arith.xori %94, %97 : vector<64x1xi1>
    %99 = arith.andi %98, %92 : vector<64x1xi1>
    %100 = vector.broadcast %88 : i32 to vector<64x1xi32>
    %101 = arith.addi %90, %100 : vector<64x1xi32>
    %102 = arith.select %99, %101, %90 : vector<64x1xi1>, vector<64x1xi32>
    %c0_i32_38 = arith.constant 0 : i32
    %103 = vector.broadcast %c0_i32_38 : i32 to vector<64x1xi32>
    %104 = arith.cmpi ne, %102, %103 : vector<64x1xi32>
    %c7_i32 = arith.constant 7 : i32
    %105 = vector.broadcast %c7_i32 : i32 to vector<64x1xi32>
    %106 = arith.cmpi ne, %102, %105 : vector<64x1xi32>
    %cst_39 = arith.constant 0.000000e+00 : f32
    %107 = vector.broadcast %cst_39 : f32 to vector<1x256xf32>
    %cst_40 = arith.constant 0.000000e+00 : f32
    %108 = vector.broadcast %cst_40 : f32 to vector<8x256xf32>
    %109 = vector.extract_strided_slice %1 {offsets = [0, 0], sizes = [63, 256], strides = [1, 1]} : vector<64x256xf32> to vector<63x256xf32>
    %110 = tpu.concatenate %107, %109 in 0 : vector<1x256xf32>, vector<63x256xf32> -> vector<64x256xf32>
    %cst_41 = arith.constant 0.000000e+00 : f32
    %111 = vector.shape_cast %104 : vector<64x1xi1> to vector<64x1xi1>
    %112 = vector.broadcast %111 : vector<64x1xi1> to vector<64x256xi1>
    %113 = vector.broadcast %cst_41 : f32 to vector<64x256xf32>
    %114 = arith.select %112, %110, %113 : vector<64x256xi1>, vector<64x256xf32>
    %115 = vector.extract_strided_slice %1 {offsets = [1, 0], sizes = [63, 256], strides = [1, 1]} : vector<64x256xf32> to vector<63x256xf32>
    %116 = tpu.concatenate %115, %107 in 0 : vector<63x256xf32>, vector<1x256xf32> -> vector<64x256xf32>
    %cst_42 = arith.constant 0.000000e+00 : f32
    %117 = vector.shape_cast %106 : vector<64x1xi1> to vector<64x1xi1>
    %118 = vector.broadcast %117 : vector<64x1xi1> to vector<64x256xi1>
    %119 = vector.broadcast %cst_42 : f32 to vector<64x256xf32>
    %120 = arith.select %118, %116, %119 : vector<64x256xi1>, vector<64x256xf32>
    %121 = vector.broadcast %85 : vector<1x256xf32> to vector<64x256xf32>
    %122 = arith.addf %83, %121 : vector<64x256xf32>
    %123 = vector.extract_strided_slice %84 {offsets = [0, 0], sizes = [1, 256], strides = [1, 1]} : vector<9x256xf32> to vector<1x256xf32>
    %124 = vector.shape_cast %123 : vector<1x256xf32> to vector<256xf32>
    %125 = vector.shape_cast %124 : vector<256xf32> to vector<1x256xf32>
    %126 = vector.broadcast %125 : vector<1x256xf32> to vector<64x256xf32>
    %127 = arith.mulf %114, %126 : vector<64x256xf32>
    %128 = vector.extract_strided_slice %84 {offsets = [1, 0], sizes = [1, 256], strides = [1, 1]} : vector<9x256xf32> to vector<1x256xf32>
    %129 = vector.shape_cast %128 : vector<1x256xf32> to vector<256xf32>
    %130 = vector.shape_cast %129 : vector<256xf32> to vector<1x256xf32>
    %131 = vector.broadcast %130 : vector<1x256xf32> to vector<64x256xf32>
    %132 = arith.mulf %1, %131 : vector<64x256xf32>
    %133 = arith.addf %127, %132 : vector<64x256xf32>
    %134 = vector.extract_strided_slice %84 {offsets = [2, 0], sizes = [1, 256], strides = [1, 1]} : vector<9x256xf32> to vector<1x256xf32>
    %135 = vector.shape_cast %134 : vector<1x256xf32> to vector<256xf32>
    %136 = vector.shape_cast %135 : vector<256xf32> to vector<1x256xf32>
    %137 = vector.broadcast %136 : vector<1x256xf32> to vector<64x256xf32>
    %138 = arith.mulf %120, %137 : vector<64x256xf32>
    %139 = arith.addf %133, %138 : vector<64x256xf32>
    %140 = vector.extract_strided_slice %139 {offsets = [0, 0], sizes = [56, 256], strides = [1, 1]} : vector<64x256xf32> to vector<56x256xf32>
    %141 = tpu.concatenate %108, %140 in 0 : vector<8x256xf32>, vector<56x256xf32> -> vector<64x256xf32>
    %142 = arith.addf %122, %141 : vector<64x256xf32>
    %143 = vector.extract_strided_slice %84 {offsets = [3, 0], sizes = [1, 256], strides = [1, 1]} : vector<9x256xf32> to vector<1x256xf32>
    %144 = vector.shape_cast %143 : vector<1x256xf32> to vector<256xf32>
    %145 = vector.shape_cast %144 : vector<256xf32> to vector<1x256xf32>
    %146 = vector.broadcast %145 : vector<1x256xf32> to vector<64x256xf32>
    %147 = arith.mulf %114, %146 : vector<64x256xf32>
    %148 = vector.extract_strided_slice %84 {offsets = [4, 0], sizes = [1, 256], strides = [1, 1]} : vector<9x256xf32> to vector<1x256xf32>
    %149 = vector.shape_cast %148 : vector<1x256xf32> to vector<256xf32>
    %150 = vector.shape_cast %149 : vector<256xf32> to vector<1x256xf32>
    %151 = vector.broadcast %150 : vector<1x256xf32> to vector<64x256xf32>
    %152 = arith.mulf %1, %151 : vector<64x256xf32>
    %153 = arith.addf %147, %152 : vector<64x256xf32>
    %154 = vector.extract_strided_slice %84 {offsets = [5, 0], sizes = [1, 256], strides = [1, 1]} : vector<9x256xf32> to vector<1x256xf32>
    %155 = vector.shape_cast %154 : vector<1x256xf32> to vector<256xf32>
    %156 = vector.shape_cast %155 : vector<256xf32> to vector<1x256xf32>
    %157 = vector.broadcast %156 : vector<1x256xf32> to vector<64x256xf32>
    %158 = arith.mulf %120, %157 : vector<64x256xf32>
    %159 = arith.addf %153, %158 : vector<64x256xf32>
    %160 = arith.addf %142, %159 : vector<64x256xf32>
    %161 = vector.extract_strided_slice %84 {offsets = [6, 0], sizes = [1, 256], strides = [1, 1]} : vector<9x256xf32> to vector<1x256xf32>
    %162 = vector.shape_cast %161 : vector<1x256xf32> to vector<256xf32>
    %163 = vector.shape_cast %162 : vector<256xf32> to vector<1x256xf32>
    %164 = vector.broadcast %163 : vector<1x256xf32> to vector<64x256xf32>
    %165 = arith.mulf %114, %164 : vector<64x256xf32>
    %166 = vector.extract_strided_slice %84 {offsets = [7, 0], sizes = [1, 256], strides = [1, 1]} : vector<9x256xf32> to vector<1x256xf32>
    %167 = vector.shape_cast %166 : vector<1x256xf32> to vector<256xf32>
    %168 = vector.shape_cast %167 : vector<256xf32> to vector<1x256xf32>
    %169 = vector.broadcast %168 : vector<1x256xf32> to vector<64x256xf32>
    %170 = arith.mulf %1, %169 : vector<64x256xf32>
    %171 = arith.addf %165, %170 : vector<64x256xf32>
    %172 = vector.extract_strided_slice %84 {offsets = [8, 0], sizes = [1, 256], strides = [1, 1]} : vector<9x256xf32> to vector<1x256xf32>
    %173 = vector.shape_cast %172 : vector<1x256xf32> to vector<256xf32>
    %174 = vector.shape_cast %173 : vector<256xf32> to vector<1x256xf32>
    %175 = vector.broadcast %174 : vector<1x256xf32> to vector<64x256xf32>
    %176 = arith.mulf %120, %175 : vector<64x256xf32>
    %177 = arith.addf %171, %176 : vector<64x256xf32>
    %178 = vector.extract_strided_slice %177 {offsets = [8, 0], sizes = [56, 256], strides = [1, 1]} : vector<64x256xf32> to vector<56x256xf32>
    %179 = tpu.concatenate %178, %108 in 0 : vector<56x256xf32>, vector<8x256xf32> -> vector<64x256xf32>
    %180 = arith.addf %160, %179 : vector<64x256xf32>
    %c0_43 = arith.constant 0 : index
    %c0_44 = arith.constant 0 : index
    %c0_45 = arith.constant 0 : index
    %181 = vector.load %arg8[%c0_43, %c0_44, %c0_45] : memref<1x64x256xf32, #tpu.memory_space<vmem>>, vector<1x64x256xf32>
    %182 = vector.shape_cast %181 : vector<1x64x256xf32> to vector<64x256xf32>
    %183 = vector.shape_cast %180 : vector<64x256xf32> to vector<1x64x256xf32>
    tpu.vector_store %arg8[%c0_43, %c0_44, %c0_45], %183 {strides = array<i32>} : memref<1x64x256xf32, #tpu.memory_space<vmem>>, vector<1x64x256xf32>,
    return
  }
  func.func @transform_0(%arg0: i32) -> (i32, i32, i32) {
    %c0_i32 = arith.constant 0 : i32
    %c0_i32_0 = arith.constant 0 : i32
    %c0_i32_1 = arith.constant 0 : i32
    return %arg0, %c0_i32, %c0_i32_0 : i32, i32, i32
  }
  func.func @transform_1(%arg0: i32) -> (i32, i32) {
    %c0_i32 = arith.constant 0 : i32
    %c0_i32_0 = arith.constant 0 : i32
    %c0_i32_1 = arith.constant 0 : i32
    return %c0_i32, %c0_i32_0 : i32, i32
  }
  func.func @transform_2(%arg0: i32) -> (i32, i32) {
    %c0_i32 = arith.constant 0 : i32
    %c0_i32_0 = arith.constant 0 : i32
    %c0_i32_1 = arith.constant 0 : i32
    return %c0_i32, %c0_i32_0 : i32, i32
  }
  func.func @transform_3(%arg0: i32) -> (i32, i32) {
    %c0_i32 = arith.constant 0 : i32
    %c0_i32_0 = arith.constant 0 : i32
    %c0_i32_1 = arith.constant 0 : i32
    return %c0_i32, %c0_i32_0 : i32, i32
  }
  func.func @transform_4(%arg0: i32) -> (i32, i32) {
    %c0_i32 = arith.constant 0 : i32
    %c0_i32_0 = arith.constant 0 : i32
    %c0_i32_1 = arith.constant 0 : i32
    return %c0_i32, %c0_i32_0 : i32, i32
  }
  func.func @transform_5(%arg0: i32) -> (i32, i32) {
    %c0_i32 = arith.constant 0 : i32
    %c0_i32_0 = arith.constant 0 : i32
    %c0_i32_1 = arith.constant 0 : i32
    return %c0_i32, %c0_i32_0 : i32, i32
  }
  func.func @transform_6(%arg0: i32) -> (i32, i32) {
    %c0_i32 = arith.constant 0 : i32
    %c0_i32_0 = arith.constant 0 : i32
    %c0_i32_1 = arith.constant 0 : i32
    return %c0_i32, %c0_i32_0 : i32, i32
  }
  func.func @transform_7(%arg0: i32) -> (i32, i32, i32) {
    %c0_i32 = arith.constant 0 : i32
    %c0_i32_0 = arith.constant 0 : i32
    %c0_i32_1 = arith.constant 0 : i32
    return %arg0, %c0_i32, %c0_i32_0 : i32, i32, i32
  }
}

</mosaic_0001>

<llo_original>
// kernel: tpu_custom_call.1
$region0: #{tpu_custom_call.1}
  #allocation0 [shape = 'u32[]', space=smem, size = 0x4, offset = 0x4, fixed_abs, tag = 'smem constant byte address 0x4 - core index']
  #allocation1 [shape = 'u32[72,128]{1,0:T(1,128)}', space=vmem, size = 0x9000, scoped, tag = 'internal scratch']
  %s0 = inlined_call_operand.hbm [shape: f32[2,64,256], index: 0, kind: input, shape index: {}]
  %s1 = inlined_call_operand.hbm [shape: f32[256,512], index: 1, kind: input, shape index: {}]
  %s2 = inlined_call_operand.hbm [shape: f32[1,512], index: 2, kind: input, shape index: {}]
  %s3 = inlined_call_operand.hbm [shape: f32[64,256], index: 3, kind: input, shape index: {}]
  %s4 = inlined_call_operand.hbm [shape: f32[64,256], index: 4, kind: input, shape index: {}]
  %s5 = inlined_call_operand.hbm [shape: f32[9,256], index: 5, kind: input, shape index: {}]
  %s6 = inlined_call_operand.vmem [shape: f32[1,256], index: 6, kind: input, shape index: {}]
  %s7 = inlined_call_operand.hbm [shape: f32[2,64,256], index: 7, kind: output, shape index: {}]
  %s8 = sld [smem:[#allocation0]]
  $region85: #{tpu_custom_call.1} parent=0
    _
  %s10 = ssub.s32 1, %s8
  %s11 = scalar_select 0, %s10, %s8
  $region1: #{tpu_custom_call.1} parent=0
    #allocation2 [shape = 'u8[131072]{0}', space=vmem, size = 0x20000, scoped, tag = 'input window, operand 0']
    #allocation3 [shape = 's32[2]{0}', space=sflag, size = 0x8, scoped, tag = 'scoped memory for tpu_custom_call.1']
    #allocation4 [shape = 's32[2]{0}', space=sflag, size = 0x8, scoped, tag = 'scoped memory for tpu_custom_call.1']
    #allocation5 [shape = 'u8[524288]{0}', space=vmem, size = 0x80000, scoped, tag = 'input window, operand 1, single buffered']
    #allocation6 [shape = 's32[1]{0}', space=sflag, size = 0x4, scoped, tag = 'scoped memory for tpu_custom_call.1']
    #allocation7 [shape = 'u8[2048]{0}', space=vmem, size = 0x800, scoped, tag = 'input window, operand 2, single buffered']
    #allocation8 [shape = 'u8[65536]{0}', space=vmem, size = 0x10000, scoped, tag = 'input window, operand 3, single buffered']
    #allocation9 [shape = 's32[1]{0}', space=sflag, size = 0x4, scoped, tag = 'scoped memory for tpu_custom_call.1']
    #allocation10 [shape = 'u8[65536]{0}', space=vmem, size = 0x10000, scoped, tag = 'input window, operand 4, single buffered']
    #allocation11 [shape = 'u8[16384]{0}', space=vmem, size = 0x4000, scoped, tag = 'input window, operand 5, single buffered']
    #allocation12 [shape = 's32[1]{0}', space=sflag, size = 0x4, scoped, tag = 'scoped memory for tpu_custom_call.1']
    #allocation13 [shape = 'u8[131072]{0}', space=vmem, size = 0x20000, scoped, tag = 'output window, operand 0']
    %12 = vsyncpa [#allocation3], 0
    %s13 = scalar_lea.sflag [#allocation3], 1
    %14 = vsyncpa %s13, 0
    %15 = vsyncpa [#allocation6], 0
    %16 = vsyncpa [#allocation9], 0
    %17 = vsyncpa [#allocation12], 0
    %18 = vsyncpa [#allocation4], 0
    %s19 = scalar_lea.sflag [#allocation4], 1
    %20 = vsyncpa %s19, 0
    loop: start=0, step=1, limit=4
    $region2: #{tpu_custom_call.1} parent=1 // loop_pre_header
      _
    $region3: #{tpu_custom_call.1} parent=1 // loop_header
      %s22 = sphi 0, %s26
      %p23 = scmp.ge.s32.totalorder %s22, 4
      %s32 = sphi 0, %s34
      %s35 = sphi 0, %s32
      %s36 = sphi 0, %s35
      %s52 = sphi 0, %s36
      %s56 = sphi 0, %s56
      %s58 = sphi 0, %s56
      %s59 = sphi 0, %s58
      %s73 = sphi 0, %s59
      %s77 = sphi 0, %s77
      %s79 = sphi 0, %s77
      %s80 = sphi 0, %s79
      %s94 = sphi 0, %s80
      %s98 = sphi 0, %s98
      %s100 = sphi 0, %s98
      %s101 = sphi 0, %s100
      %s115 = sphi 0, %s101
      %s119 = sphi 0, %s119
      %s121 = sphi 0, %s119
      %s122 = sphi 0, %s121
      %s136 = sphi 0, %s122
      %s140 = sphi 0, %s140
      %s142 = sphi 0, %s140
      %s143 = sphi 0, %s142
      %s157 = sphi 0, %s143
      %s161 = sphi 0, %s161
      %s163 = sphi 0, %s161
      %s164 = sphi 0, %s163
      %s178 = sphi 0, %s164
      %s184 = sphi 0, %s186
      %s187 = sphi 0, %s184
      %s188 = sphi 0, %s187
      %s204 = sphi 0, %s188
    $region4: #{tpu_custom_call.1} parent=1 // loop_header_branch
      %25 = sbr.rel (%p23) target = $region8
    $region5: #{tpu_custom_call.1} parent=1 // loop_body
      %s27 = ssub.s32 %s22, 1
      %s28 = ssub.s32 %s22, 2
      %s29 = sadd.s32 %s22, 1
      %s30 = ssub.s32 %s22, %s29
      %p31 = scmp.eq.s32.totalorder %s30, 0
      %s33 = sadd.s32 %s32, 1
      %s34 = scalar_select %p31, %s32, %s33
      %p37 = pneg %p31
      %p38 = scmp.eq.s32.totalorder %s22, 1
      %p39 = por %p37, %p38
      %p40 = scmp.ne.s32.totalorder %s32, %s35
      %p41 = scmp.eq.s32.totalorder %s22, 0
      %p42 = por %p40, %p41
      %p43 = scmp.ne.s32.totalorder %s32, %s35
      %p44 = scmp.eq.s32.totalorder %s27, 1
      %p45 = por %p43, %p44
      %p46 = scmp.ne.s32.totalorder %s35, %s36
      %p47 = scmp.eq.s32.totalorder %s27, 0
      %p48 = por %p46, %p47
      %p49 = scmp.ne.s32.totalorder %s35, %s36
      %p50 = scmp.eq.s32.totalorder %s28, 1
      %p51 = por %p49, %p50
      %p53 = scmp.ne.s32.totalorder %s36, %s52
      %p54 = scmp.eq.s32.totalorder %s28, 0
      %p55 = por %p53, %p54
      %s57 = sadd.s32 %s56, 1
      %p60 = scmp.eq.s32.totalorder %s22, 1
      %p61 = scmp.ne.s32.totalorder %s56, %s58
      %p62 = scmp.eq.s32.totalorder %s22, 0
      %p63 = por %p61, %p62
      %p64 = scmp.ne.s32.totalorder %s56, %s58
      %p65 = scmp.eq.s32.totalorder %s27, 1
      %p66 = por %p64, %p65
      %p67 = scmp.ne.s32.totalorder %s58, %s59
      %p68 = scmp.eq.s32.totalorder %s27, 0
      %p69 = por %p67, %p68
      %p70 = scmp.ne.s32.totalorder %s58, %s59
      %p71 = scmp.eq.s32.totalorder %s28, 1
      %p72 = por %p70, %p71
      %p74 = scmp.ne.s32.totalorder %s59, %s73
      %p75 = scmp.eq.s32.totalorder %s28, 0
      %p76 = por %p74, %p75
      %s78 = sadd.s32 %s77, 1
      %p81 = scmp.eq.s32.totalorder %s22, 1
      %p82 = scmp.ne.s32.totalorder %s77, %s79
      %p83 = scmp.eq.s32.totalorder %s22, 0
      %p84 = por %p82, %p83
      %p85 = scmp.ne.s32.totalorder %s77, %s79
      %p86 = scmp.eq.s32.totalorder %s27, 1
      %p87 = por %p85, %p86
      %p88 = scmp.ne.s32.totalorder %s79, %s80
      %p89 = scmp.eq.s32.totalorder %s27, 0
      %p90 = por %p88, %p89
      %p91 = scmp.ne.s32.totalorder %s79, %s80
      %p92 = scmp.eq.s32.totalorder %s28, 1
      %p93 = por %p91, %p92
      %p95 = scmp.ne.s32.totalorder %s80, %s94
      %p96 = scmp.eq.s32.totalorder %s28, 0
      %p97 = por %p95, %p96
      %s99 = sadd.s32 %s98, 1
      %p102 = scmp.eq.s32.totalorder %s22, 1
      %p103 = scmp.ne.s32.totalorder %s98, %s100
      %p104 = scmp.eq.s32.totalorder %s22, 0
      %p105 = por %p103, %p104
      %p106 = scmp.ne.s32.totalorder %s98, %s100
      %p107 = scmp.eq.s32.totalorder %s27, 1
      %p108 = por %p106, %p107
      %p109 = scmp.ne.s32.totalorder %s100, %s101
      %p110 = scmp.eq.s32.totalorder %s27, 0
      %p111 = por %p109, %p110
      %p112 = scmp.ne.s32.totalorder %s100, %s101
      %p113 = scmp.eq.s32.totalorder %s28, 1
      %p114 = por %p112, %p113
      %p116 = scmp.ne.s32.totalorder %s101, %s115
      %p117 = scmp.eq.s32.totalorder %s28, 0
      %p118 = por %p116, %p117
      %s120 = sadd.s32 %s119, 1
      %p123 = scmp.eq.s32.totalorder %s22, 1
      %p124 = scmp.ne.s32.totalorder %s119, %s121
      %p125 = scmp.eq.s32.totalorder %s22, 0
      %p126 = por %p124, %p125
      %p127 = scmp.ne.s32.totalorder %s119, %s121
      %p128 = scmp.eq.s32.totalorder %s27, 1
      %p129 = por %p127, %p128
      %p130 = scmp.ne.s32.totalorder %s121, %s122
      %p131 = scmp.eq.s32.totalorder %s27, 0
      %p132 = por %p130, %p131
      %p133 = scmp.ne.s32.totalorder %s121, %s122
      %p134 = scmp.eq.s32.totalorder %s28, 1
      %p135 = por %p133, %p134
      %p137 = scmp.ne.s32.totalorder %s122, %s136
      %p138 = scmp.eq.s32.totalorder %s28, 0
      %p139 = por %p137, %p138
      %s141 = sadd.s32 %s140, 1
      %p144 = scmp.eq.s32.totalorder %s22, 1
      %p145 = scmp.ne.s32.totalorder %s140, %s142
      %p146 = scmp.eq.s32.totalorder %s22, 0
      %p147 = por %p145, %p146
      %p148 = scmp.ne.s32.totalorder %s140, %s142
      %p149 = scmp.eq.s32.totalorder %s27, 1
      %p150 = por %p148, %p149
      %p151 = scmp.ne.s32.totalorder %s142, %s143
      %p152 = scmp.eq.s32.totalorder %s27, 0
      %p153 = por %p151, %p152
      %p154 = scmp.ne.s32.totalorder %s142, %s143
      %p155 = scmp.eq.s32.totalorder %s28, 1
      %p156 = por %p154, %p155
      %p158 = scmp.ne.s32.totalorder %s143, %s157
      %p159 = scmp.eq.s32.totalorder %s28, 0
      %p160 = por %p158, %p159
      %s162 = sadd.s32 %s161, 1
      %p165 = scmp.eq.s32.totalorder %s22, 1
      %p166 = scmp.ne.s32.totalorder %s161, %s163
      %p167 = scmp.eq.s32.totalorder %s22, 0
      %p168 = por %p166, %p167
      %p169 = scmp.ne.s32.totalorder %s161, %s163
      %p170 = scmp.eq.s32.totalorder %s27, 1
      %p171 = por %p169, %p170
      %p172 = scmp.ne.s32.totalorder %s163, %s164
      %p173 = scmp.eq.s32.totalorder %s27, 0
      %p174 = por %p172, %p173
      %p175 = scmp.ne.s32.totalorder %s163, %s164
      %p176 = scmp.eq.s32.totalorder %s28, 1
      %p177 = por %p175, %p176
      %p179 = scmp.ne.s32.totalorder %s164, %s178
      %p180 = scmp.eq.s32.totalorder %s28, 0
      %p181 = por %p179, %p180
      %s182 = ssub.s32 %s22, %s29
      %p183 = scmp.eq.s32.totalorder %s182, 0
      %s185 = sadd.s32 %s184, 1
      %s186 = scalar_select %p183, %s184, %s185
      %p189 = pneg %p183
      %p190 = scmp.eq.s32.totalorder %s22, 1
      %p191 = por %p189, %p190
      %p192 = scmp.ne.s32.totalorder %s184, %s187
      %p193 = scmp.eq.s32.totalorder %s22, 0
      %p194 = por %p192, %p193
      %p195 = scmp.ne.s32.totalorder %s184, %s187
      %p196 = scmp.eq.s32.totalorder %s27, 1
      %p197 = por %p195, %p196
      %p198 = scmp.ne.s32.totalorder %s187, %s188
      %p199 = scmp.eq.s32.totalorder %s27, 0
      %p200 = por %p198, %p199
      %p201 = scmp.ne.s32.totalorder %s187, %s188
      %p202 = scmp.eq.s32.totalorder %s28, 1
      %p203 = por %p201, %p202
      %p205 = scmp.ne.s32.totalorder %s188, %s204
      %p206 = scmp.eq.s32.totalorder %s28, 0
      %p207 = por %p205, %p206
      %p208 = scmp.le.s32.totalorder 1, %s22
      %p209 = scmp.lt.s32.totalorder %s22, 3
      %p210 = pnand %p208, %p209
      %p211 = pneg %p210
      // Predicated region
      $region9: #{tpu_custom_call.1} parent=5 // pred_check
        _
      $region10: #{tpu_custom_call.1} parent=5 // pred_check_branch
        %213 = sbr.rel (%p210) target = $region12
      $region11: #{tpu_custom_call.1} parent=5 // pred_region
        %s214 = ssub.s32 %s22, 1
        // Predicated region
        $region13: #{tpu_custom_call.1} parent=11 // pred_check
          %p215 = pneg %p69
        $region14: #{tpu_custom_call.1} parent=11 // pred_check_branch
          %217 = sbr.rel (%p215) target = $region16
        $region15: #{tpu_custom_call.1} parent=11 // pred_region
          %219 = vsyncadd [#allocation6], 0
          %s220 = sshll.u32 %s1, 4
          %s221 = int_to_ptr.hbm [resolvable:$true] %s220
          %s222 = sshll.u32 [#allocation5], 4
          %s223 = int_to_ptr.vmem [resolvable:$true] %s222
          %228 = dma.hbm_to_vmem [thread:$0]  %s221, 16384, %s223, [#allocation6], 512, 512, 32
        $region16: #{tpu_custom_call.1} parent=11 // pred_fallthru
          _
        // Predicated region
        $region17: #{tpu_custom_call.1} parent=11 // pred_check
          %p229 = pneg %p90
        $region18: #{tpu_custom_call.1} parent=11 // pred_check_branch
          %231 = sbr.rel (%p229) target = $region20
        $region19: #{tpu_custom_call.1} parent=11 // pred_region
          %233 = vsyncadd [#allocation6], 0
          %s235 = sshll.u32 %s2, 4
          %s236 = int_to_ptr.hbm [resolvable:$true] %s235
          %s237 = sshll.u32 [#allocation7], 4
          %s238 = int_to_ptr.vmem [resolvable:$true] %s237
          %240 = dma.hbm_to_vmem [thread:$0]  %s236, 64, %s238, [#allocation6]
        $region20: #{tpu_custom_call.1} parent=11 // pred_fallthru
          _
        // Predicated region
        $region21: #{tpu_custom_call.1} parent=11 // pred_check
          %p241 = pneg %p111
        $region22: #{tpu_custom_call.1} parent=11 // pred_check_branch
          %243 = sbr.rel (%p241) target = $region24
        $region23: #{tpu_custom_call.1} parent=11 // pred_region
          %245 = vsyncadd [#allocation9], 0
          %s246 = sshll.u32 %s3, 4
          %s247 = int_to_ptr.hbm [resolvable:$true] %s246
          %s248 = sshll.u32 [#allocation8], 4
          %s249 = int_to_ptr.vmem [resolvable:$true] %s248
          %254 = dma.hbm_to_vmem [thread:$0]  %s247, 2048, %s249, [#allocation9], 256, 256, 16
        $region24: #{tpu_custom_call.1} parent=11 // pred_fallthru
          _
        // Predicated region
        $region25: #{tpu_custom_call.1} parent=11 // pred_check
          %p255 = pneg %p132
        $region26: #{tpu_custom_call.1} parent=11 // pred_check_branch
          %257 = sbr.rel (%p255) target = $region28
        $region27: #{tpu_custom_call.1} parent=11 // pred_region
          %259 = vsyncadd [#allocation9], 0
          %s260 = sshll.u32 %s4, 4
          %s261 = int_to_ptr.hbm [resolvable:$true] %s260
          %s262 = sshll.u32 [#allocation10], 4
          %s263 = int_to_ptr.vmem [resolvable:$true] %s262
          %268 = dma.hbm_to_vmem [thread:$0]  %s261, 2048, %s263, [#allocation9], 256, 256, 16
        $region28: #{tpu_custom_call.1} parent=11 // pred_fallthru
          _
        // Predicated region
        $region29: #{tpu_custom_call.1} parent=11 // pred_check
          %p269 = pneg %p153
        $region30: #{tpu_custom_call.1} parent=11 // pred_check_branch
          %271 = sbr.rel (%p269) target = $region32
        $region31: #{tpu_custom_call.1} parent=11 // pred_region
          %273 = vsyncadd [#allocation12], 0
          %s274 = sshll.u32 %s5, 4
          %s275 = int_to_ptr.hbm [resolvable:$true] %s274
          %s276 = sshll.u32 [#allocation11], 4
          %s277 = int_to_ptr.vmem [resolvable:$true] %s276
          %282 = dma.hbm_to_vmem [thread:$0]  %s275, 512, %s277, [#allocation12], 256, 256, 16
        $region32: #{tpu_custom_call.1} parent=11 // pred_fallthru
          _
        // Predicated region
        $region33: #{tpu_custom_call.1} parent=11 // pred_check
          %p283 = pneg %p174
        $region34: #{tpu_custom_call.1} parent=11 // pred_check_branch
          %285 = sbr.rel (%p283) target = $region36
        $region35: #{tpu_custom_call.1} parent=11 // pred_region
          _
        $region36: #{tpu_custom_call.1} parent=11 // pred_fallthru
          _
      $region12: #{tpu_custom_call.1} parent=5 // pred_fallthru
        _
      %p286 = scmp.lt.s32.totalorder %s22, 2
      // Predicated region
      $region37: #{tpu_custom_call.1} parent=5 // pred_check
        %p287 = pneg %p286
      $region38: #{tpu_custom_call.1} parent=5 // pred_check_branch
        %289 = sbr.rel (%p287) target = $region40
      $region39: #{tpu_custom_call.1} parent=5 // pred_region
        // Predicated region
        $region41: #{tpu_custom_call.1} parent=39 // pred_check
          %p290 = pneg %p42
        $region42: #{tpu_custom_call.1} parent=39 // pred_check_branch
          %292 = sbr.rel (%p290) target = $region44
        $region43: #{tpu_custom_call.1} parent=39 // pred_region
          %s293 = sand.u32 %s32, 1
          %s294 = scalar_lea.sflag [#allocation3], %s293
          %s295 = sand.u32 %s32, 1
          %s296 = smul.addr %s295, 128
          %s297 = scalar_lea.vmem [#allocation2], %s296
          %299 = vsyncadd %s294, 0
          %s300 = smul.addr %s22, 16
          %s301 = smul.addr %s300, 8
          %s302 = scalar_lea.hbm %s0, %s301
          %s303 = sshll.u32 %s302, 4
          %s304 = int_to_ptr.hbm [resolvable:$true] %s303
          %s305 = sshll.u32 %s297, 4
          %s306 = int_to_ptr.vmem [resolvable:$true] %s305
          %311 = dma.hbm_to_vmem [thread:$0]  %s304, 2048, %s306, %s294, 256, 256, 16
        $region44: #{tpu_custom_call.1} parent=39 // pred_fallthru
          _
      $region40: #{tpu_custom_call.1} parent=5 // pred_fallthru
        _
      %p312 = scmp.le.s32.totalorder 1, %s22
      %p313 = scmp.lt.s32.totalorder %s22, 3
      %p314 = pnand %p312, %p313
      %p315 = pneg %p314
      // Predicated region
      $region45: #{tpu_custom_call.1} parent=5 // pred_check
        _
      $region46: #{tpu_custom_call.1} parent=5 // pred_check_branch
        %317 = sbr.rel (%p314) target = $region48
      $region47: #{tpu_custom_call.1} parent=5 // pred_region
        %s318 = ssub.s32 %s22, 1
        %s319 = sand.u32 %s35, 1
        %s320 = scalar_lea.sflag [#allocation3], %s319
        %s321 = sand.u32 %s35, 1
        %s322 = smul.addr %s321, 128
        %s323 = scalar_lea.vmem [#allocation2], %s322
        // Predicated region
        $region49: #{tpu_custom_call.1} parent=47 // pred_check
          %p324 = pneg %p48
        $region50: #{tpu_custom_call.1} parent=47 // pred_check_branch
          %326 = sbr.rel (%p324) target = $region52
        $region51: #{tpu_custom_call.1} parent=47 // pred_region
          %328 = dma.done %s320, 2048
        $region52: #{tpu_custom_call.1} parent=47 // pred_fallthru
          _
        // Predicated region
        $region53: #{tpu_custom_call.1} parent=47 // pred_check
          %p329 = pneg %p69
        $region54: #{tpu_custom_call.1} parent=47 // pred_check_branch
          %331 = sbr.rel (%p329) target = $region56
        $region55: #{tpu_custom_call.1} parent=47 // pred_region
          %333 = dma.done [#allocation6], 16384
        $region56: #{tpu_custom_call.1} parent=47 // pred_fallthru
          _
        // Predicated region
        $region57: #{tpu_custom_call.1} parent=47 // pred_check
          %p334 = pneg %p90
        $region58: #{tpu_custom_call.1} parent=47 // pred_check_branch
          %336 = sbr.rel (%p334) target = $region60
        $region59: #{tpu_custom_call.1} parent=47 // pred_region
          %338 = dma.done [#allocation6], 64
        $region60: #{tpu_custom_call.1} parent=47 // pred_fallthru
          _
        // Predicated region
        $region61: #{tpu_custom_call.1} parent=47 // pred_check
          %p339 = pneg %p111
        $region62: #{tpu_custom_call.1} parent=47 // pred_check_branch
          %341 = sbr.rel (%p339) target = $region64
        $region63: #{tpu_custom_call.1} parent=47 // pred_region
          %343 = dma.done [#allocation9], 2048
        $region64: #{tpu_custom_call.1} parent=47 // pred_fallthru
          _
        // Predicated region
        $region65: #{tpu_custom_call.1} parent=47 // pred_check
          %p344 = pneg %p132
        $region66: #{tpu_custom_call.1} parent=47 // pred_check_branch
          %346 = sbr.rel (%p344) target = $region68
        $region67: #{tpu_custom_call.1} parent=47 // pred_region
          %348 = dma.done [#allocation9], 2048
        $region68: #{tpu_custom_call.1} parent=47 // pred_fallthru
          _
        // Predicated region
        $region69: #{tpu_custom_call.1} parent=47 // pred_check
          %p349 = pneg %p153
        $region70: #{tpu_custom_call.1} parent=47 // pred_check_branch
          %351 = sbr.rel (%p349) target = $region72
        $region71: #{tpu_custom_call.1} parent=47 // pred_region
          %353 = dma.done [#allocation12], 512
        $region72: #{tpu_custom_call.1} parent=47 // pred_fallthru
          _
        %s354 = sand.u32 %s35, 1
        %s355 = scalar_lea.sflag [#allocation3], %s354
        %s356 = sand.u32 %s35, 1
        %s357 = smul.addr %s356, 128
        %s358 = scalar_lea.vmem [#allocation2], %s357
        %p359 = pneg %p48
        %p360 = pneg %p45
        %p361 = pneg %p69
        %p362 = pneg %p66
        %p363 = pneg %p90
        %p364 = pneg %p87
        %p365 = pneg %p111
        %p366 = pneg %p108
        %p367 = pneg %p132
        %p368 = pneg %p129
        %p369 = pneg %p153
        %p370 = pneg %p150
        %p371 = pneg %p174
        %p372 = pneg %p171
        %p373 = pneg %p200
        %p374 = pneg %p197
        %s375 = sand.u32 %s187, 1
        %s376 = scalar_lea.sflag [#allocation4], %s375
        %s377 = sand.u32 %s187, 1
        %s378 = smul.addr %s377, 128
        %s379 = scalar_lea.vmem [#allocation13], %s378
        %v380 = vld [vmem:[%s323] sm:$0xff]
        %v381 = vld [vmem:[%s323 + $0x8] sm:$0xff]
        %v382 = vld [vmem:[%s323 + $0x10] sm:$0xff]
        %v383 = vld [vmem:[%s323 + $0x18] sm:$0xff]
        %v384 = vld [vmem:[%s323 + $0x20] sm:$0xff]
        %v385 = vld [vmem:[%s323 + $0x28] sm:$0xff]
        %v386 = vld [vmem:[%s323 + $0x30] sm:$0xff]
        %v387 = vld [vmem:[%s323 + $0x38] sm:$0xff]
        %v388 = vld [vmem:[%s323 + $0x40] sm:$0xff]
        %v389 = vld [vmem:[%s323 + $0x48] sm:$0xff]
        %v390 = vld [vmem:[%s323 + $0x50] sm:$0xff]
        %v391 = vld [vmem:[%s323 + $0x58] sm:$0xff]
        %v392 = vld [vmem:[%s323 + $0x60] sm:$0xff]
        %v393 = vld [vmem:[%s323 + $0x68] sm:$0xff]
        %v394 = vld [vmem:[%s323 + $0x70] sm:$0xff]
        %v395 = vld [vmem:[%s323 + $0x78] sm:$0xff]
        %v396 = vld [vmem:[#allocation5] sm:$0xff]
        %v397 = vld [vmem:[#allocation5 + $0x8] sm:$0xff]
        %v398 = vld [vmem:[#allocation5 + $0x10] sm:$0xff]
        %v399 = vld [vmem:[#allocation5 + $0x18] sm:$0xff]
        %v400 = vld [vmem:[#allocation5 + $0x20] sm:$0xff]
        %v401 = vld [vmem:[#allocation5 + $0x28] sm:$0xff]
        %v402 = vld [vmem:[#allocation5 + $0x30] sm:$0xff]
        %v403 = vld [vmem:[#allocation5 + $0x38] sm:$0xff]
        %v404 = vld [vmem:[#allocation5 + $0x40] sm:$0xff]
        %v405 = vld [vmem:[#allocation5 + $0x48] sm:$0xff]
        %v406 = vld [vmem:[#allocation5 + $0x50] sm:$0xff]
        %v407 = vld [vmem:[#allocation5 + $0x58] sm:$0xff]
        %v408 = vld [vmem:[#allocation5 + $0x60] sm:$0xff]
        %v409 = vld [vmem:[#allocation5 + $0x68] sm:$0xff]
        %v410 = vld [vmem:[#allocation5 + $0x70] sm:$0xff]
        %v411 = vld [vmem:[#allocation5 + $0x78] sm:$0xff]
        %v412 = vld [vmem:[#allocation5 + $0x80] sm:$0xff]
        %v413 = vld [vmem:[#allocation5 + $0x88] sm:$0xff]
        %v414 = vld [vmem:[#allocation5 + $0x90] sm:$0xff]
        %v415 = vld [vmem:[#allocation5 + $0x98] sm:$0xff]
        %v416 = vld [vmem:[#allocation5 + $0xa0] sm:$0xff]
        %v417 = vld [vmem:[#allocation5 + $0xa8] sm:$0xff]
        %v418 = vld [vmem:[#allocation5 + $0xb0] sm:$0xff]
        %v419 = vld [vmem:[#allocation5 + $0xb8] sm:$0xff]
        %v420 = vld [vmem:[#allocation5 + $0xc0] sm:$0xff]
        %v421 = vld [vmem:[#allocation5 + $0xc8] sm:$0xff]
        %v422 = vld [vmem:[#allocation5 + $0xd0] sm:$0xff]
        %v423 = vld [vmem:[#allocation5 + $0xd8] sm:$0xff]
        %v424 = vld [vmem:[#allocation5 + $0xe0] sm:$0xff]
        %v425 = vld [vmem:[#allocation5 + $0xe8] sm:$0xff]
        %v426 = vld [vmem:[#allocation5 + $0xf0] sm:$0xff]
        %v427 = vld [vmem:[#allocation5 + $0xf8] sm:$0xff]
        %v428 = vld [vmem:[#allocation5 + $0x100] sm:$0xff]
        %v429 = vld [vmem:[#allocation5 + $0x108] sm:$0xff]
        %v430 = vld [vmem:[#allocation5 + $0x110] sm:$0xff]
        %v431 = vld [vmem:[#allocation5 + $0x118] sm:$0xff]
        %v432 = vld [vmem:[#allocation5 + $0x120] sm:$0xff]
        %v433 = vld [vmem:[#allocation5 + $0x128] sm:$0xff]
        %v434 = vld [vmem:[#allocation5 + $0x130] sm:$0xff]
        %v435 = vld [vmem:[#allocation5 + $0x138] sm:$0xff]
        %v436 = vld [vmem:[#allocation5 + $0x140] sm:$0xff]
        %v437 = vld [vmem:[#allocation5 + $0x148] sm:$0xff]
        %v438 = vld [vmem:[#allocation5 + $0x150] sm:$0xff]
        %v439 = vld [vmem:[#allocation5 + $0x158] sm:$0xff]
        %v440 = vld [vmem:[#allocation5 + $0x160] sm:$0xff]
        %v441 = vld [vmem:[#allocation5 + $0x168] sm:$0xff]
        %v442 = vld [vmem:[#allocation5 + $0x170] sm:$0xff]
        %v443 = vld [vmem:[#allocation5 + $0x178] sm:$0xff]
        %v444 = vld [vmem:[#allocation5 + $0x180] sm:$0xff]
        %v445 = vld [vmem:[#allocation5 + $0x188] sm:$0xff]
        %v446 = vld [vmem:[#allocation5 + $0x190] sm:$0xff]
        %v447 = vld [vmem:[#allocation5 + $0x198] sm:$0xff]
        %v448 = vld [vmem:[#allocation5 + $0x1a0] sm:$0xff]
        %v449 = vld [vmem:[#allocation5 + $0x1a8] sm:$0xff]
        %v450 = vld [vmem:[#allocation5 + $0x1b0] sm:$0xff]
        %v451 = vld [vmem:[#allocation5 + $0x1b8] sm:$0xff]
        %v452 = vld [vmem:[#allocation5 + $0x1c0] sm:$0xff]
        %v453 = vld [vmem:[#allocation5 + $0x1c8] sm:$0xff]
        %v454 = vld [vmem:[#allocation5 + $0x1d0] sm:$0xff]
        %v455 = vld [vmem:[#allocation5 + $0x1d8] sm:$0xff]
        %v456 = vld [vmem:[#allocation5 + $0x1e0] sm:$0xff]
        %v457 = vld [vmem:[#allocation5 + $0x1e8] sm:$0xff]
        %v458 = vld [vmem:[#allocation5 + $0x1f0] sm:$0xff]
        %v459 = vld [vmem:[#allocation5 + $0x1f8] sm:$0xff]
        %v460 = vld [vmem:[#allocation5 + $0x200] sm:$0xff]
        %v461 = vld [vmem:[#allocation5 + $0x208] sm:$0xff]
        %v462 = vld [vmem:[#allocation5 + $0x210] sm:$0xff]
        %v463 = vld [vmem:[#allocation5 + $0x218] sm:$0xff]
        %v464 = vld [vmem:[#allocation5 + $0x220] sm:$0xff]
        %v465 = vld [vmem:[#allocation5 + $0x228] sm:$0xff]
        %v466 = vld [vmem:[#allocation5 + $0x230] sm:$0xff]
        %v467 = vld [vmem:[#allocation5 + $0x238] sm:$0xff]
        %v468 = vld [vmem:[#allocation5 + $0x240] sm:$0xff]
        %v469 = vld [vmem:[#allocation5 + $0x248] sm:$0xff]
        %v470 = vld [vmem:[#allocation5 + $0x250] sm:$0xff]
        %v471 = vld [vmem:[#allocation5 + $0x258] sm:$0xff]
        %v472 = vld [vmem:[#allocation5 + $0x260] sm:$0xff]
        %v473 = vld [vmem:[#allocation5 + $0x268] sm:$0xff]
        %v474 = vld [vmem:[#allocation5 + $0x270] sm:$0xff]
        %v475 = vld [vmem:[#allocation5 + $0x278] sm:$0xff]
        %v476 = vld [vmem:[#allocation5 + $0x280] sm:$0xff]
        %v477 = vld [vmem:[#allocation5 + $0x288] sm:$0xff]
        %v478 = vld [vmem:[#allocation5 + $0x290] sm:$0xff]
        %v479 = vld [vmem:[#allocation5 + $0x298] sm:$0xff]
        %v480 = vld [vmem:[#allocation5 + $0x2a0] sm:$0xff]
        %v481 = vld [vmem:[#allocation5 + $0x2a8] sm:$0xff]
        %v482 = vld [vmem:[#allocation5 + $0x2b0] sm:$0xff]
        %v483 = vld [vmem:[#allocation5 + $0x2b8] sm:$0xff]
        %v484 = vld [vmem:[#allocation5 + $0x2c0] sm:$0xff]
        %v485 = vld [vmem:[#allocation5 + $0x2c8] sm:$0xff]
        %v486 = vld [vmem:[#allocation5 + $0x2d0] sm:$0xff]
        %v487 = vld [vmem:[#allocation5 + $0x2d8] sm:$0xff]
        %v488 = vld [vmem:[#allocation5 + $0x2e0] sm:$0xff]
        %v489 = vld [vmem:[#allocation5 + $0x2e8] sm:$0xff]
        %v490 = vld [vmem:[#allocation5 + $0x2f0] sm:$0xff]
        %v491 = vld [vmem:[#allocation5 + $0x2f8] sm:$0xff]
        %v492 = vld [vmem:[#allocation5 + $0x300] sm:$0xff]
        %v493 = vld [vmem:[#allocation5 + $0x308] sm:$0xff]
        %v494 = vld [vmem:[#allocation5 + $0x310] sm:$0xff]
        %v495 = vld [vmem:[#allocation5 + $0x318] sm:$0xff]
        %v496 = vld [vmem:[#allocation5 + $0x320] sm:$0xff]
        %v497 = vld [vmem:[#allocation5 + $0x328] sm:$0xff]
        %v498 = vld [vmem:[#allocation5 + $0x330] sm:$0xff]
        %v499 = vld [vmem:[#allocation5 + $0x338] sm:$0xff]
        %v500 = vld [vmem:[#allocation5 + $0x340] sm:$0xff]
        %v501 = vld [vmem:[#allocation5 + $0x348] sm:$0xff]
        %v502 = vld [vmem:[#allocation5 + $0x350] sm:$0xff]
        %v503 = vld [vmem:[#allocation5 + $0x358] sm:$0xff]
        %v504 = vld [vmem:[#allocation5 + $0x360] sm:$0xff]
        %v505 = vld [vmem:[#allocation5 + $0x368] sm:$0xff]
        %v506 = vld [vmem:[#allocation5 + $0x370] sm:$0xff]
        %v507 = vld [vmem:[#allocation5 + $0x378] sm:$0xff]
        %v508 = vld [vmem:[#allocation5 + $0x380] sm:$0xff]
        %v509 = vld [vmem:[#allocation5 + $0x388] sm:$0xff]
        %v510 = vld [vmem:[#allocation5 + $0x390] sm:$0xff]
        %v511 = vld [vmem:[#allocation5 + $0x398] sm:$0xff]
        %v512 = vld [vmem:[#allocation5 + $0x3a0] sm:$0xff]
        %v513 = vld [vmem:[#allocation5 + $0x3a8] sm:$0xff]
        %v514 = vld [vmem:[#allocation5 + $0x3b0] sm:$0xff]
        %v515 = vld [vmem:[#allocation5 + $0x3b8] sm:$0xff]
        %v516 = vld [vmem:[#allocation5 + $0x3c0] sm:$0xff]
        %v517 = vld [vmem:[#allocation5 + $0x3c8] sm:$0xff]
        %v518 = vld [vmem:[#allocation5 + $0x3d0] sm:$0xff]
        %v519 = vld [vmem:[#allocation5 + $0x3d8] sm:$0xff]
        %v520 = vld [vmem:[#allocation5 + $0x3e0] sm:$0xff]
        %v521 = vld [vmem:[#allocation5 + $0x3e8] sm:$0xff]
        %v522 = vld [vmem:[#allocation5 + $0x3f0] sm:$0xff]
        %v523 = vld [vmem:[#allocation5 + $0x3f8] sm:$0xff]
        %v524 = vld [vmem:[#allocation7] sm:$0xf]
        %v526 = vperm.slane %v524, 0
        %v527 = vperm.slane %v524, 1
        %v528 = vperm.slane %v524, 2
        %v529 = vperm.slane %v524, 3
        %534 = vmatpush.msra.mxu0 %v456
        %535 = vmatpush.msra.mxu0 %v452
        %536 = vmatpush.msra.mxu0 %v448
        %537 = vmatpush.msra.mxu0 %v444
        %538 = vmatpush.msra.mxu0 %v440
        %539 = vmatpush.msra.mxu0 %v436
        %540 = vmatpush.msra.mxu0 %v432
        %541 = vmatpush.msra.mxu0 %v428
        %542 = vmatpush.msra.mxu0 %v424
        %543 = vmatpush.msra.mxu0 %v420
        %544 = vmatpush.msra.mxu0 %v416
        %545 = vmatpush.msra.mxu0 %v412
        %546 = vmatpush.msra.mxu0 %v408
        %547 = vmatpush.msra.mxu0 %v404
        %548 = vmatpush.msra.mxu0 %v400
        %549 = vmatpush.msra.mxu0 %v396
        %550 = vmatmul.f32.gmra.mxu0 %v380
        %v551 = vpop.f32.mrf.mxu0
        %v552 = vadd.f32 %v526, %v551
        %553 = vmatmul.f32.gmra.mxu0 %v382
        %v554 = vpop.f32.mrf.mxu0
        %v555 = vadd.f32 %v526, %v554
        %556 = vmatmul.f32.gmra.mxu0 %v384
        %v557 = vpop.f32.mrf.mxu0
        %v558 = vadd.f32 %v526, %v557
        %559 = vmatmul.f32.gmra.mxu0 %v386
        %v560 = vpop.f32.mrf.mxu0
        %v561 = vadd.f32 %v526, %v560
        %562 = vmatmul.f32.gmra.mxu0 %v388
        %v563 = vpop.f32.mrf.mxu0
        %v564 = vadd.f32 %v526, %v563
        %565 = vmatmul.f32.gmra.mxu0 %v390
        %v566 = vpop.f32.mrf.mxu0
        %v567 = vadd.f32 %v526, %v566
        %568 = vmatmul.f32.gmra.mxu0 %v392
        %v569 = vpop.f32.mrf.mxu0
        %v570 = vadd.f32 %v526, %v569
        %571 = vmatmul.f32.gmra.mxu0 %v394
        %v572 = vpop.f32.mrf.mxu0
        %v573 = vadd.f32 %v526, %v572
        %574 = vdwg.mxu0
        %575 = vmatpush.msra.mxu0 %v520
        %576 = vmatpush.msra.mxu0 %v516
        %577 = vmatpush.msra.mxu0 %v512
        %578 = vmatpush.msra.mxu0 %v508
        %579 = vmatpush.msra.mxu0 %v504
        %580 = vmatpush.msra.mxu0 %v500
        %581 = vmatpush.msra.mxu0 %v496
        %582 = vmatpush.msra.mxu0 %v492
        %583 = vmatpush.msra.mxu0 %v488
        %584 = vmatpush.msra.mxu0 %v484
        %585 = vmatpush.msra.mxu0 %v480
        %586 = vmatpush.msra.mxu0 %v476
        %587 = vmatpush.msra.mxu0 %v472
        %588 = vmatpush.msra.mxu0 %v468
        %589 = vmatpush.msra.mxu0 %v464
        %590 = vmatpush.msra.mxu0 %v460
        %591 = vmatmul.f32.gmra.mxu0 %v381
        %v592 = vpop.f32.mrf.mxu0
        %v593 = vadd.f32 %v552, %v592
        %594 = vmatmul.f32.gmra.mxu0 %v383
        %v595 = vpop.f32.mrf.mxu0
        %v596 = vadd.f32 %v555, %v595
        %597 = vmatmul.f32.gmra.mxu0 %v385
        %v598 = vpop.f32.mrf.mxu0
        %v599 = vadd.f32 %v558, %v598
        %600 = vmatmul.f32.gmra.mxu0 %v387
        %v601 = vpop.f32.mrf.mxu0
        %v602 = vadd.f32 %v561, %v601
        %603 = vmatmul.f32.gmra.mxu0 %v389
        %v604 = vpop.f32.mrf.mxu0
        %v605 = vadd.f32 %v564, %v604
        %606 = vmatmul.f32.gmra.mxu0 %v391
        %v607 = vpop.f32.mrf.mxu0
        %v608 = vadd.f32 %v567, %v607
        %609 = vmatmul.f32.gmra.mxu0 %v393
        %v610 = vpop.f32.mrf.mxu0
        %v611 = vadd.f32 %v570, %v610
        %612 = vmatmul.f32.gmra.mxu0 %v395
        %v613 = vpop.f32.mrf.mxu0
        %v614 = vadd.f32 %v573, %v613
        %615 = vdwg.mxu0
        %616 = vmatpush.msra.mxu0 %v457
        %617 = vmatpush.msra.mxu0 %v453
        %618 = vmatpush.msra.mxu0 %v449
        %619 = vmatpush.msra.mxu0 %v445
        %620 = vmatpush.msra.mxu0 %v441
        %621 = vmatpush.msra.mxu0 %v437
        %622 = vmatpush.msra.mxu0 %v433
        %623 = vmatpush.msra.mxu0 %v429
        %624 = vmatpush.msra.mxu0 %v425
        %625 = vmatpush.msra.mxu0 %v421
        %626 = vmatpush.msra.mxu0 %v417
        %627 = vmatpush.msra.mxu0 %v413
        %628 = vmatpush.msra.mxu0 %v409
        %629 = vmatpush.msra.mxu0 %v405
        %630 = vmatpush.msra.mxu0 %v401
        %631 = vmatpush.msra.mxu0 %v397
        %632 = vmatmul.f32.gmra.mxu0 %v380
        %v633 = vpop.f32.mrf.mxu0
        %v634 = vadd.f32 %v527, %v633
        %635 = vmatmul.f32.gmra.mxu0 %v382
        %v636 = vpop.f32.mrf.mxu0
        %v637 = vadd.f32 %v527, %v636
        %638 = vmatmul.f32.gmra.mxu0 %v384
        %v639 = vpop.f32.mrf.mxu0
        %v640 = vadd.f32 %v527, %v639
        %641 = vmatmul.f32.gmra.mxu0 %v386
        %v642 = vpop.f32.mrf.mxu0
        %v643 = vadd.f32 %v527, %v642
        %644 = vmatmul.f32.gmra.mxu0 %v388
        %v645 = vpop.f32.mrf.mxu0
        %v646 = vadd.f32 %v527, %v645
        %647 = vmatmul.f32.gmra.mxu0 %v390
        %v648 = vpop.f32.mrf.mxu0
        %v649 = vadd.f32 %v527, %v648
        %650 = vmatmul.f32.gmra.mxu0 %v392
        %v651 = vpop.f32.mrf.mxu0
        %v652 = vadd.f32 %v527, %v651
        %653 = vmatmul.f32.gmra.mxu0 %v394
        %v654 = vpop.f32.mrf.mxu0
        %v655 = vadd.f32 %v527, %v654
        %656 = vdwg.mxu0
        %657 = vmatpush.msra.mxu0 %v521
        %658 = vmatpush.msra.mxu0 %v517
        %659 = vmatpush.msra.mxu0 %v513
        %660 = vmatpush.msra.mxu0 %v509
        %661 = vmatpush.msra.mxu0 %v505
        %662 = vmatpush.msra.mxu0 %v501
        %663 = vmatpush.msra.mxu0 %v497
        %664 = vmatpush.msra.mxu0 %v493
        %665 = vmatpush.msra.mxu0 %v489
        %666 = vmatpush.msra.mxu0 %v485
        %667 = vmatpush.msra.mxu0 %v481
        %668 = vmatpush.msra.mxu0 %v477
        %669 = vmatpush.msra.mxu0 %v473
        %670 = vmatpush.msra.mxu0 %v469
        %671 = vmatpush.msra.mxu0 %v465
        %672 = vmatpush.msra.mxu0 %v461
        %673 = vmatmul.f32.gmra.mxu0 %v381
        %v674 = vpop.f32.mrf.mxu0
        %v675 = vadd.f32 %v634, %v674
        %676 = vmatmul.f32.gmra.mxu0 %v383
        %v677 = vpop.f32.mrf.mxu0
        %v678 = vadd.f32 %v637, %v677
        %679 = vmatmul.f32.gmra.mxu0 %v385
        %v680 = vpop.f32.mrf.mxu0
        %v681 = vadd.f32 %v640, %v680
        %682 = vmatmul.f32.gmra.mxu0 %v387
        %v683 = vpop.f32.mrf.mxu0
        %v684 = vadd.f32 %v643, %v683
        %685 = vmatmul.f32.gmra.mxu0 %v389
        %v686 = vpop.f32.mrf.mxu0
        %v687 = vadd.f32 %v646, %v686
        %688 = vmatmul.f32.gmra.mxu0 %v391
        %v689 = vpop.f32.mrf.mxu0
        %v690 = vadd.f32 %v649, %v689
        %691 = vmatmul.f32.gmra.mxu0 %v393
        %v692 = vpop.f32.mrf.mxu0
        %v693 = vadd.f32 %v652, %v692
        %694 = vmatmul.f32.gmra.mxu0 %v395
        %v695 = vpop.f32.mrf.mxu0
        %v696 = vadd.f32 %v655, %v695
        %697 = vdwg.mxu0
        %698 = vmatpush.msra.mxu0 %v458
        %699 = vmatpush.msra.mxu0 %v454
        %700 = vmatpush.msra.mxu0 %v450
        %701 = vmatpush.msra.mxu0 %v446
        %702 = vmatpush.msra.mxu0 %v442
        %703 = vmatpush.msra.mxu0 %v438
        %704 = vmatpush.msra.mxu0 %v434
        %705 = vmatpush.msra.mxu0 %v430
        %706 = vmatpush.msra.mxu0 %v426
        %707 = vmatpush.msra.mxu0 %v422
        %708 = vmatpush.msra.mxu0 %v418
        %709 = vmatpush.msra.mxu0 %v414
        %710 = vmatpush.msra.mxu0 %v410
        %711 = vmatpush.msra.mxu0 %v406
        %712 = vmatpush.msra.mxu0 %v402
        %713 = vmatpush.msra.mxu0 %v398
        %714 = vmatmul.f32.gmra.mxu0 %v380
        %v715 = vpop.f32.mrf.mxu0
        %v716 = vadd.f32 %v528, %v715
        %717 = vmatmul.f32.gmra.mxu0 %v382
        %v718 = vpop.f32.mrf.mxu0
        %v719 = vadd.f32 %v528, %v718
        %720 = vmatmul.f32.gmra.mxu0 %v384
        %v721 = vpop.f32.mrf.mxu0
        %v722 = vadd.f32 %v528, %v721
        %723 = vmatmul.f32.gmra.mxu0 %v386
        %v724 = vpop.f32.mrf.mxu0
        %v725 = vadd.f32 %v528, %v724
        %726 = vmatmul.f32.gmra.mxu0 %v388
        %v727 = vpop.f32.mrf.mxu0
        %v728 = vadd.f32 %v528, %v727
        %729 = vmatmul.f32.gmra.mxu0 %v390
        %v730 = vpop.f32.mrf.mxu0
        %v731 = vadd.f32 %v528, %v730
        %732 = vmatmul.f32.gmra.mxu0 %v392
        %v733 = vpop.f32.mrf.mxu0
        %v734 = vadd.f32 %v528, %v733
        %735 = vmatmul.f32.gmra.mxu0 %v394
        %v736 = vpop.f32.mrf.mxu0
        %v737 = vadd.f32 %v528, %v736
        %738 = vdwg.mxu0
        %739 = vmatpush.msra.mxu0 %v522
        %740 = vmatpush.msra.mxu0 %v518
        %741 = vmatpush.msra.mxu0 %v514
        %742 = vmatpush.msra.mxu0 %v510
        %743 = vmatpush.msra.mxu0 %v506
        %744 = vmatpush.msra.mxu0 %v502
        %745 = vmatpush.msra.mxu0 %v498
        %746 = vmatpush.msra.mxu0 %v494
        %747 = vmatpush.msra.mxu0 %v490
        %748 = vmatpush.msra.mxu0 %v486
        %749 = vmatpush.msra.mxu0 %v482
        %750 = vmatpush.msra.mxu0 %v478
        %751 = vmatpush.msra.mxu0 %v474
        %752 = vmatpush.msra.mxu0 %v470
        %753 = vmatpush.msra.mxu0 %v466
        %754 = vmatpush.msra.mxu0 %v462
        %755 = vmatmul.f32.gmra.mxu0 %v381
        %v756 = vpop.f32.mrf.mxu0
        %v757 = vadd.f32 %v716, %v756
        %758 = vmatmul.f32.gmra.mxu0 %v383
        %v759 = vpop.f32.mrf.mxu0
        %v760 = vadd.f32 %v719, %v759
        %761 = vmatmul.f32.gmra.mxu0 %v385
        %v762 = vpop.f32.mrf.mxu0
        %v763 = vadd.f32 %v722, %v762
        %764 = vmatmul.f32.gmra.mxu0 %v387
        %v765 = vpop.f32.mrf.mxu0
        %v766 = vadd.f32 %v725, %v765
        %767 = vmatmul.f32.gmra.mxu0 %v389
        %v768 = vpop.f32.mrf.mxu0
        %v769 = vadd.f32 %v728, %v768
        %770 = vmatmul.f32.gmra.mxu0 %v391
        %v771 = vpop.f32.mrf.mxu0
        %v772 = vadd.f32 %v731, %v771
        %773 = vmatmul.f32.gmra.mxu0 %v393
        %v774 = vpop.f32.mrf.mxu0
        %v775 = vadd.f32 %v734, %v774
        %776 = vmatmul.f32.gmra.mxu0 %v395
        %v777 = vpop.f32.mrf.mxu0
        %v778 = vadd.f32 %v737, %v777
        %779 = vdwg.mxu0
        %780 = vmatpush.msra.mxu0 %v459
        %781 = vmatpush.msra.mxu0 %v455
        %782 = vmatpush.msra.mxu0 %v451
        %783 = vmatpush.msra.mxu0 %v447
        %784 = vmatpush.msra.mxu0 %v443
        %785 = vmatpush.msra.mxu0 %v439
        %786 = vmatpush.msra.mxu0 %v435
        %787 = vmatpush.msra.mxu0 %v431
        %788 = vmatpush.msra.mxu0 %v427
        %789 = vmatpush.msra.mxu0 %v423
        %790 = vmatpush.msra.mxu0 %v419
        %791 = vmatpush.msra.mxu0 %v415
        %792 = vmatpush.msra.mxu0 %v411
        %793 = vmatpush.msra.mxu0 %v407
        %794 = vmatpush.msra.mxu0 %v403
        %795 = vmatpush.msra.mxu0 %v399
        %796 = vmatmul.f32.gmra.mxu0 %v380
        %v797 = vpop.f32.mrf.mxu0
        %v798 = vadd.f32 %v529, %v797
        %799 = vmatmul.f32.gmra.mxu0 %v382
        %v800 = vpop.f32.mrf.mxu0
        %v801 = vadd.f32 %v529, %v800
        %802 = vmatmul.f32.gmra.mxu0 %v384
        %v803 = vpop.f32.mrf.mxu0
        %v804 = vadd.f32 %v529, %v803
        %805 = vmatmul.f32.gmra.mxu0 %v386
        %v806 = vpop.f32.mrf.mxu0
        %v807 = vadd.f32 %v529, %v806
        %808 = vmatmul.f32.gmra.mxu0 %v388
        %v809 = vpop.f32.mrf.mxu0
        %v810 = vadd.f32 %v529, %v809
        %811 = vmatmul.f32.gmra.mxu0 %v390
        %v812 = vpop.f32.mrf.mxu0
        %v813 = vadd.f32 %v529, %v812
        %814 = vmatmul.f32.gmra.mxu0 %v392
        %v815 = vpop.f32.mrf.mxu0
        %v816 = vadd.f32 %v529, %v815
        %817 = vmatmul.f32.gmra.mxu0 %v394
        %v818 = vpop.f32.mrf.mxu0
        %v819 = vadd.f32 %v529, %v818
        %820 = vdwg.mxu0
        %821 = vmatpush.msra.mxu0 %v523
        %822 = vmatpush.msra.mxu0 %v519
        %823 = vmatpush.msra.mxu0 %v515
        %824 = vmatpush.msra.mxu0 %v511
        %825 = vmatpush.msra.mxu0 %v507
        %826 = vmatpush.msra.mxu0 %v503
        %827 = vmatpush.msra.mxu0 %v499
        %828 = vmatpush.msra.mxu0 %v495
        %829 = vmatpush.msra.mxu0 %v491
        %830 = vmatpush.msra.mxu0 %v487
        %831 = vmatpush.msra.mxu0 %v483
        %832 = vmatpush.msra.mxu0 %v479
        %833 = vmatpush.msra.mxu0 %v475
        %834 = vmatpush.msra.mxu0 %v471
        %835 = vmatpush.msra.mxu0 %v467
        %836 = vmatpush.msra.mxu0 %v463
        %837 = vmatmul.f32.gmra.mxu0 %v381
        %v838 = vpop.f32.mrf.mxu0
        %v839 = vadd.f32 %v798, %v838
        %840 = vmatmul.f32.gmra.mxu0 %v383
        %v841 = vpop.f32.mrf.mxu0
        %v842 = vadd.f32 %v801, %v841
        %843 = vmatmul.f32.gmra.mxu0 %v385
        %v844 = vpop.f32.mrf.mxu0
        %v845 = vadd.f32 %v804, %v844
        %846 = vmatmul.f32.gmra.mxu0 %v387
        %v847 = vpop.f32.mrf.mxu0
        %v848 = vadd.f32 %v807, %v847
        %849 = vmatmul.f32.gmra.mxu0 %v389
        %v850 = vpop.f32.mrf.mxu0
        %v851 = vadd.f32 %v810, %v850
        %852 = vmatmul.f32.gmra.mxu0 %v391
        %v853 = vpop.f32.mrf.mxu0
        %v854 = vadd.f32 %v813, %v853
        %855 = vmatmul.f32.gmra.mxu0 %v393
        %v856 = vpop.f32.mrf.mxu0
        %v857 = vadd.f32 %v816, %v856
        %858 = vmatmul.f32.gmra.mxu0 %v395
        %v859 = vpop.f32.mrf.mxu0
        %v860 = vadd.f32 %v819, %v859
        %861 = vdwg.mxu0
        %vm862 = vcmp.gt.f32.partialorder %v593, 0.0
        %vm863 = vcmp.gt.f32.partialorder %v675, 0.0
        %vm864 = vcmp.gt.f32.partialorder %v596, 0.0
        %vm865 = vcmp.gt.f32.partialorder %v678, 0.0
        %vm866 = vcmp.gt.f32.partialorder %v599, 0.0
        %vm867 = vcmp.gt.f32.partialorder %v681, 0.0
        %vm868 = vcmp.gt.f32.partialorder %v602, 0.0
        %vm869 = vcmp.gt.f32.partialorder %v684, 0.0
        %vm870 = vcmp.gt.f32.partialorder %v605, 0.0
        %vm871 = vcmp.gt.f32.partialorder %v687, 0.0
        %vm872 = vcmp.gt.f32.partialorder %v608, 0.0
        %vm873 = vcmp.gt.f32.partialorder %v690, 0.0
        %vm874 = vcmp.gt.f32.partialorder %v611, 0.0
        %vm875 = vcmp.gt.f32.partialorder %v693, 0.0
        %vm876 = vcmp.gt.f32.partialorder %v614, 0.0
        %vm877 = vcmp.gt.f32.partialorder %v696, 0.0
        %v878 = vadd.f32 %v593, 1.0
        %v879 = vadd.f32 %v675, 1.0
        %v880 = vadd.f32 %v596, 1.0
        %v881 = vadd.f32 %v678, 1.0
        %v882 = vadd.f32 %v599, 1.0
        %v883 = vadd.f32 %v681, 1.0
        %v884 = vadd.f32 %v602, 1.0
        %v885 = vadd.f32 %v684, 1.0
        %v886 = vadd.f32 %v605, 1.0
        %v887 = vadd.f32 %v687, 1.0
        %v888 = vadd.f32 %v608, 1.0
        %v889 = vadd.f32 %v690, 1.0
        %v890 = vadd.f32 %v611, 1.0
        %v891 = vadd.f32 %v693, 1.0
        %v892 = vadd.f32 %v614, 1.0
        %v893 = vadd.f32 %v696, 1.0
        %v894 = vmul.f32 %v593, 1.442695
        %v895 = vpow.pop %v894
        %v896 = vmul.f32 %v675, 1.442695
        %v897 = vpow.pop %v896
        %v898 = vmul.f32 %v596, 1.442695
        %v899 = vpow.pop %v898
        %v900 = vmul.f32 %v678, 1.442695
        %v901 = vpow.pop %v900
        %v902 = vmul.f32 %v599, 1.442695
        %v903 = vpow.pop %v902
        %v904 = vmul.f32 %v681, 1.442695
        %v905 = vpow.pop %v904
        %v906 = vmul.f32 %v602, 1.442695
        %v907 = vpow.pop %v906
        %v908 = vmul.f32 %v684, 1.442695
        %v909 = vpow.pop %v908
        %v910 = vmul.f32 %v605, 1.442695
        %v911 = vpow.pop %v910
        %v912 = vmul.f32 %v687, 1.442695
        %v913 = vpow.pop %v912
        %v914 = vmul.f32 %v608, 1.442695
        %v915 = vpow.pop %v914
        %v916 = vmul.f32 %v690, 1.442695
        %v917 = vpow.pop %v916
        %v918 = vmul.f32 %v611, 1.442695
        %v919 = vpow.pop %v918
        %v920 = vmul.f32 %v693, 1.442695
        %v921 = vpow.pop %v920
        %v922 = vmul.f32 %v614, 1.442695
        %v923 = vpow.pop %v922
        %v924 = vmul.f32 %v696, 1.442695
        %v925 = vpow.pop %v924
        %v926 = vsel %vm862, %v878, %v895
        %v927 = vsel %vm863, %v879, %v897
        %v928 = vsel %vm864, %v880, %v899
        %v929 = vsel %vm865, %v881, %v901
        %v930 = vsel %vm866, %v882, %v903
        %v931 = vsel %vm867, %v883, %v905
        %v932 = vsel %vm868, %v884, %v907
        %v933 = vsel %vm869, %v885, %v909
        %v934 = vsel %vm870, %v886, %v911
        %v935 = vsel %vm871, %v887, %v913
        %v936 = vsel %vm872, %v888, %v915
        %v937 = vsel %vm873, %v889, %v917
        %v938 = vsel %vm874, %v890, %v919
        %v939 = vsel %vm875, %v891, %v921
        %v940 = vsel %vm876, %v892, %v923
        %v941 = vsel %vm877, %v893, %v925
        %vm942 = vcmp.gt.f32.partialorder %v757, 0.0
        %vm943 = vcmp.gt.f32.partialorder %v839, 0.0
        %vm944 = vcmp.gt.f32.partialorder %v760, 0.0
        %vm945 = vcmp.gt.f32.partialorder %v842, 0.0
        %vm946 = vcmp.gt.f32.partialorder %v763, 0.0
        %vm947 = vcmp.gt.f32.partialorder %v845, 0.0
        %vm948 = vcmp.gt.f32.partialorder %v766, 0.0
        %vm949 = vcmp.gt.f32.partialorder %v848, 0.0
        %vm950 = vcmp.gt.f32.partialorder %v769, 0.0
        %vm951 = vcmp.gt.f32.partialorder %v851, 0.0
        %vm952 = vcmp.gt.f32.partialorder %v772, 0.0
        %vm953 = vcmp.gt.f32.partialorder %v854, 0.0
        %vm954 = vcmp.gt.f32.partialorder %v775, 0.0
        %vm955 = vcmp.gt.f32.partialorder %v857, 0.0
        %vm956 = vcmp.gt.f32.partialorder %v778, 0.0
        %vm957 = vcmp.gt.f32.partialorder %v860, 0.0
        %v958 = vadd.f32 %v757, 1.0
        %v959 = vadd.f32 %v839, 1.0
        %v960 = vadd.f32 %v760, 1.0
        %v961 = vadd.f32 %v842, 1.0
        %v962 = vadd.f32 %v763, 1.0
        %v963 = vadd.f32 %v845, 1.0
        %v964 = vadd.f32 %v766, 1.0
        %v965 = vadd.f32 %v848, 1.0
        %v966 = vadd.f32 %v769, 1.0
        %v967 = vadd.f32 %v851, 1.0
        %v968 = vadd.f32 %v772, 1.0
        %v969 = vadd.f32 %v854, 1.0
        %v970 = vadd.f32 %v775, 1.0
        %v971 = vadd.f32 %v857, 1.0
        %v972 = vadd.f32 %v778, 1.0
        %v973 = vadd.f32 %v860, 1.0
        %v974 = vmul.f32 %v757, 1.442695
        %v975 = vpow.pop %v974
        %v976 = vmul.f32 %v839, 1.442695
        %v977 = vpow.pop %v976
        %v978 = vmul.f32 %v760, 1.442695
        %v979 = vpow.pop %v978
        %v980 = vmul.f32 %v842, 1.442695
        %v981 = vpow.pop %v980
        %v982 = vmul.f32 %v763, 1.442695
        %v983 = vpow.pop %v982
        %v984 = vmul.f32 %v845, 1.442695
        %v985 = vpow.pop %v984
        %v986 = vmul.f32 %v766, 1.442695
        %v987 = vpow.pop %v986
        %v988 = vmul.f32 %v848, 1.442695
        %v989 = vpow.pop %v988
        %v990 = vmul.f32 %v769, 1.442695
        %v991 = vpow.pop %v990
        %v992 = vmul.f32 %v851, 1.442695
        %v993 = vpow.pop %v992
        %v994 = vmul.f32 %v772, 1.442695
        %v995 = vpow.pop %v994
        %v996 = vmul.f32 %v854, 1.442695
        %v997 = vpow.pop %v996
        %v998 = vmul.f32 %v775, 1.442695
        %v999 = vpow.pop %v998
        %v1000 = vmul.f32 %v857, 1.442695
        %v1001 = vpow.pop %v1000
        %v1002 = vmul.f32 %v778, 1.442695
        %v1003 = vpow.pop %v1002
        %v1004 = vmul.f32 %v860, 1.442695
        %v1005 = vpow.pop %v1004
        %v1006 = vsel %vm942, %v958, %v975
        %v1007 = vsel %vm943, %v959, %v977
        %v1008 = vsel %vm944, %v960, %v979
        %v1009 = vsel %vm945, %v961, %v981
        %v1010 = vsel %vm946, %v962, %v983
        %v1011 = vsel %vm947, %v963, %v985
        %v1012 = vsel %vm948, %v964, %v987
        %v1013 = vsel %vm949, %v965, %v989
        %v1014 = vsel %vm950, %v966, %v991
        %v1015 = vsel %vm951, %v967, %v993
        %v1016 = vsel %vm952, %v968, %v995
        %v1017 = vsel %vm953, %v969, %v997
        %v1018 = vsel %vm954, %v970, %v999
        %v1019 = vsel %vm955, %v971, %v1001
        %v1020 = vsel %vm956, %v972, %v1003
        %v1021 = vsel %vm957, %v973, %v1005
        %v1022 = vld [vmem:[#allocation8] sm:$0xff]
        %v1023 = vld [vmem:[#allocation8 + $0x8] sm:$0xff]
        %v1024 = vld [vmem:[#allocation8 + $0x10] sm:$0xff]
        %v1025 = vld [vmem:[#allocation8 + $0x18] sm:$0xff]
        %v1026 = vld [vmem:[#allocation8 + $0x20] sm:$0xff]
        %v1027 = vld [vmem:[#allocation8 + $0x28] sm:$0xff]
        %v1028 = vld [vmem:[#allocation8 + $0x30] sm:$0xff]
        %v1029 = vld [vmem:[#allocation8 + $0x38] sm:$0xff]
        %v1030 = vld [vmem:[#allocation8 + $0x40] sm:$0xff]
        %v1031 = vld [vmem:[#allocation8 + $0x48] sm:$0xff]
        %v1032 = vld [vmem:[#allocation8 + $0x50] sm:$0xff]
        %v1033 = vld [vmem:[#allocation8 + $0x58] sm:$0xff]
        %v1034 = vld [vmem:[#allocation8 + $0x60] sm:$0xff]
        %v1035 = vld [vmem:[#allocation8 + $0x68] sm:$0xff]
        %v1036 = vld [vmem:[#allocation8 + $0x70] sm:$0xff]
        %v1037 = vld [vmem:[#allocation8 + $0x78] sm:$0xff]
        %v1038 = vld [vmem:[#allocation10] sm:$0xff]
        %v1039 = vld [vmem:[#allocation10 + $0x8] sm:$0xff]
        %v1040 = vld [vmem:[#allocation10 + $0x10] sm:$0xff]
        %v1041 = vld [vmem:[#allocation10 + $0x18] sm:$0xff]
        %v1042 = vld [vmem:[#allocation10 + $0x20] sm:$0xff]
        %v1043 = vld [vmem:[#allocation10 + $0x28] sm:$0xff]
        %v1044 = vld [vmem:[#allocation10 + $0x30] sm:$0xff]
        %v1045 = vld [vmem:[#allocation10 + $0x38] sm:$0xff]
        %v1046 = vld [vmem:[#allocation10 + $0x40] sm:$0xff]
        %v1047 = vld [vmem:[#allocation10 + $0x48] sm:$0xff]
        %v1048 = vld [vmem:[#allocation10 + $0x50] sm:$0xff]
        %v1049 = vld [vmem:[#allocation10 + $0x58] sm:$0xff]
        %v1050 = vld [vmem:[#allocation10 + $0x60] sm:$0xff]
        %v1051 = vld [vmem:[#allocation10 + $0x68] sm:$0xff]
        %v1052 = vld [vmem:[#allocation10 + $0x70] sm:$0xff]
        %v1053 = vld [vmem:[#allocation10 + $0x78] sm:$0xff]
        %v1054 = vadd.f32 %v1006, %v1008
        %v1055 = vadd.f32 %v1054, %v1010
        %v1056 = vadd.f32 %v1055, %v1012
        %v1057 = vadd.f32 %v1056, %v1014
        %v1058 = vadd.f32 %v1057, %v1016
        %v1059 = vadd.f32 %v1058, %v1018
        %v1060 = vadd.f32 %v1059, %v1020
        %v1061 = vrot.slane %v1060, 4
        %v1062 = vadd.f32 %v1060, %v1061
        %v1063 = vrot.slane %v1062, 2
        %v1064 = vadd.f32 %v1062, %v1063
        %v1065 = vrot.slane %v1064, 1
        %v1066 = vadd.f32 %v1064, %v1065
        %v1067 = vadd.f32 %v1007, %v1009
        %v1068 = vadd.f32 %v1067, %v1011
        %v1069 = vadd.f32 %v1068, %v1013
        %v1070 = vadd.f32 %v1069, %v1015
        %v1071 = vadd.f32 %v1070, %v1017
        %v1072 = vadd.f32 %v1071, %v1019
        %v1073 = vadd.f32 %v1072, %v1021
        %v1074 = vrot.slane %v1073, 4
        %v1075 = vadd.f32 %v1073, %v1074
        %v1076 = vrot.slane %v1075, 2
        %v1077 = vadd.f32 %v1075, %v1076
        %v1078 = vrot.slane %v1077, 1
        %v1079 = vadd.f32 %v1077, %v1078
        %v1080 = vrcp.pop 64.0
        %v1081 = vmul.f32 64.0, %v1080
        %v1082 = vsub.f32 1.0, %v1081
        %v1083 = vmul.f32 %v1080, %v1082
        %v1084 = vadd.f32 %v1080, %v1083
        %vm1085 = vweird.f32 %v1080
        %v1086 = vsel %vm1085, %v1080, %v1084
        %v1087 = vmul.f32 %v1066, %v1086
        %v1088 = vmul.f32 %v1079, %v1086
        %v1089 = vmul.f32 %v926, %v1087
        %v1090 = vmul.f32 %v928, %v1087
        %v1091 = vmul.f32 %v930, %v1087
        %v1092 = vmul.f32 %v932, %v1087
        %v1093 = vmul.f32 %v934, %v1087
        %v1094 = vmul.f32 %v936, %v1087
        %v1095 = vmul.f32 %v938, %v1087
        %v1096 = vmul.f32 %v940, %v1087
        %1097 = vadd.xlane.f32.xlu0 %v1089
        %v1098 = vpop.xlane.xlu0 %1097
        %1099 = vadd.xlane.f32.xlu0 %v1090
        %v1100 = vpop.xlane.xlu0 %1099
        %1101 = vadd.xlane.f32.xlu0 %v1091
        %v1102 = vpop.xlane.xlu0 %1101
        %1103 = vadd.xlane.f32.xlu0 %v1092
        %v1104 = vpop.xlane.xlu0 %1103
        %1105 = vadd.xlane.f32.xlu0 %v1093
        %v1106 = vpop.xlane.xlu0 %1105
        %1107 = vadd.xlane.f32.xlu0 %v1094
        %v1108 = vpop.xlane.xlu0 %1107
        %1109 = vadd.xlane.f32.xlu0 %v1095
        %v1110 = vpop.xlane.xlu0 %1109
        %1111 = vadd.xlane.f32.xlu0 %v1096
        %v1112 = vpop.xlane.xlu0 %1111
        %v1113 = vadd.f32 %v1098, 1e-06
        %v1114 = vadd.f32 %v1100, 1e-06
        %v1115 = vadd.f32 %v1102, 1e-06
        %v1116 = vadd.f32 %v1104, 1e-06
        %v1117 = vadd.f32 %v1106, 1e-06
        %v1118 = vadd.f32 %v1108, 1e-06
        %v1119 = vadd.f32 %v1110, 1e-06
        %v1120 = vadd.f32 %v1112, 1e-06
        %v1121 = vrcp.pop %v1113
        %v1122 = vmul.f32 %v1113, %v1121
        %v1123 = vsub.f32 1.0, %v1122
        %v1124 = vmul.f32 %v1121, %v1123
        %v1125 = vadd.f32 %v1121, %v1124
        %vm1126 = vweird.f32 %v1113
        %vm1127 = vweird.f32 %v1121
        %vm1128 = vmor %vm1126, %vm1127
        %v1129 = vsel %vm1128, %v1121, %v1125
        %v1130 = vand.u32 2147483647, %v1113
        %vm1131 = vcmp.eq.f32.partialorder %v1130, 8.507059e+37
        %v1132 = vand.u32 %v1113, 2147483648
        %v1133 = vor.u32 1.1754944e-38, %v1132
        %v1134 = vsel %vm1131, %v1133, %v1129
        %v1135 = vmul.f32 1.0, %v1134
        %v1136 = vrcp.pop %v1114
        %v1137 = vmul.f32 %v1114, %v1136
        %v1138 = vsub.f32 1.0, %v1137
        %v1139 = vmul.f32 %v1136, %v1138
        %v1140 = vadd.f32 %v1136, %v1139
        %vm1141 = vweird.f32 %v1114
        %vm1142 = vweird.f32 %v1136
        %vm1143 = vmor %vm1141, %vm1142
        %v1144 = vsel %vm1143, %v1136, %v1140
        %v1145 = vand.u32 2147483647, %v1114
        %vm1146 = vcmp.eq.f32.partialorder %v1145, 8.507059e+37
        %v1147 = vand.u32 %v1114, 2147483648
        %v1148 = vor.u32 1.1754944e-38, %v1147
        %v1149 = vsel %vm1146, %v1148, %v1144
        %v1150 = vmul.f32 1.0, %v1149
        %v1151 = vrcp.pop %v1115
        %v1152 = vmul.f32 %v1115, %v1151
        %v1153 = vsub.f32 1.0, %v1152
        %v1154 = vmul.f32 %v1151, %v1153
        %v1155 = vadd.f32 %v1151, %v1154
        %vm1156 = vweird.f32 %v1115
        %vm1157 = vweird.f32 %v1151
        %vm1158 = vmor %vm1156, %vm1157
        %v1159 = vsel %vm1158, %v1151, %v1155
        %v1160 = vand.u32 2147483647, %v1115
        %vm1161 = vcmp.eq.f32.partialorder %v1160, 8.507059e+37
        %v1162 = vand.u32 %v1115, 2147483648
        %v1163 = vor.u32 1.1754944e-38, %v1162
        %v1164 = vsel %vm1161, %v1163, %v1159
        %v1165 = vmul.f32 1.0, %v1164
        %v1166 = vrcp.pop %v1116
        %v1167 = vmul.f32 %v1116, %v1166
        %v1168 = vsub.f32 1.0, %v1167
        %v1169 = vmul.f32 %v1166, %v1168
        %v1170 = vadd.f32 %v1166, %v1169
        %vm1171 = vweird.f32 %v1116
        %vm1172 = vweird.f32 %v1166
        %vm1173 = vmor %vm1171, %vm1172
        %v1174 = vsel %vm1173, %v1166, %v1170
        %v1175 = vand.u32 2147483647, %v1116
        %vm1176 = vcmp.eq.f32.partialorder %v1175, 8.507059e+37
        %v1177 = vand.u32 %v1116, 2147483648
        %v1178 = vor.u32 1.1754944e-38, %v1177
        %v1179 = vsel %vm1176, %v1178, %v1174
        %v1180 = vmul.f32 1.0, %v1179
        %v1181 = vrcp.pop %v1117
        %v1182 = vmul.f32 %v1117, %v1181
        %v1183 = vsub.f32 1.0, %v1182
        %v1184 = vmul.f32 %v1181, %v1183
        %v1185 = vadd.f32 %v1181, %v1184
        %vm1186 = vweird.f32 %v1117
        %vm1187 = vweird.f32 %v1181
        %vm1188 = vmor %vm1186, %vm1187
        %v1189 = vsel %vm1188, %v1181, %v1185
        %v1190 = vand.u32 2147483647, %v1117
        %vm1191 = vcmp.eq.f32.partialorder %v1190, 8.507059e+37
        %v1192 = vand.u32 %v1117, 2147483648
        %v1193 = vor.u32 1.1754944e-38, %v1192
        %v1194 = vsel %vm1191, %v1193, %v1189
        %v1195 = vmul.f32 1.0, %v1194
        %v1196 = vrcp.pop %v1118
        %v1197 = vmul.f32 %v1118, %v1196
        %v1198 = vsub.f32 1.0, %v1197
        %v1199 = vmul.f32 %v1196, %v1198
        %v1200 = vadd.f32 %v1196, %v1199
        %vm1201 = vweird.f32 %v1118
        %vm1202 = vweird.f32 %v1196
        %vm1203 = vmor %vm1201, %vm1202
        %v1204 = vsel %vm1203, %v1196, %v1200
        %v1205 = vand.u32 2147483647, %v1118
        %vm1206 = vcmp.eq.f32.partialorder %v1205, 8.507059e+37
        %v1207 = vand.u32 %v1118, 2147483648
        %v1208 = vor.u32 1.1754944e-38, %v1207
        %v1209 = vsel %vm1206, %v1208, %v1204
        %v1210 = vmul.f32 1.0, %v1209
        %v1211 = vrcp.pop %v1119
        %v1212 = vmul.f32 %v1119, %v1211
        %v1213 = vsub.f32 1.0, %v1212
        %v1214 = vmul.f32 %v1211, %v1213
        %v1215 = vadd.f32 %v1211, %v1214
        %vm1216 = vweird.f32 %v1119
        %vm1217 = vweird.f32 %v1211
        %vm1218 = vmor %vm1216, %vm1217
        %v1219 = vsel %vm1218, %v1211, %v1215
        %v1220 = vand.u32 2147483647, %v1119
        %vm1221 = vcmp.eq.f32.partialorder %v1220, 8.507059e+37
        %v1222 = vand.u32 %v1119, 2147483648
        %v1223 = vor.u32 1.1754944e-38, %v1222
        %v1224 = vsel %vm1221, %v1223, %v1219
        %v1225 = vmul.f32 1.0, %v1224
        %v1226 = vrcp.pop %v1120
        %v1227 = vmul.f32 %v1120, %v1226
        %v1228 = vsub.f32 1.0, %v1227
        %v1229 = vmul.f32 %v1226, %v1228
        %v1230 = vadd.f32 %v1226, %v1229
        %vm1231 = vweird.f32 %v1120
        %vm1232 = vweird.f32 %v1226
        %vm1233 = vmor %vm1231, %vm1232
        %v1234 = vsel %vm1233, %v1226, %v1230
        %v1235 = vand.u32 2147483647, %v1120
        %vm1236 = vcmp.eq.f32.partialorder %v1235, 8.507059e+37
        %v1237 = vand.u32 %v1120, 2147483648
        %v1238 = vor.u32 1.1754944e-38, %v1237
        %v1239 = vsel %vm1236, %v1238, %v1234
        %v1240 = vmul.f32 1.0, %v1239
        %v1241 = vmul.f32 %v1022, %v926
        %v1242 = vmul.f32 %v1024, %v928
        %v1243 = vmul.f32 %v1026, %v930
        %v1244 = vmul.f32 %v1028, %v932
        %v1245 = vmul.f32 %v1030, %v934
        %v1246 = vmul.f32 %v1032, %v936
        %v1247 = vmul.f32 %v1034, %v938
        %v1248 = vmul.f32 %v1036, %v940
        %1249 = vrot.lane.b32.xlu0 %v926, 64
        %v1250 = vpop.permute.xlu0 %1249
        %1251 = vrot.lane.b32.xlu0 %v928, 64
        %v1252 = vpop.permute.xlu0 %1251
        %1253 = vrot.lane.b32.xlu0 %v930, 64
        %v1254 = vpop.permute.xlu0 %1253
        %1255 = vrot.lane.b32.xlu0 %v932, 64
        %v1256 = vpop.permute.xlu0 %1255
        %1257 = vrot.lane.b32.xlu0 %v934, 64
        %v1258 = vpop.permute.xlu0 %1257
        %1259 = vrot.lane.b32.xlu0 %v936, 64
        %v1260 = vpop.permute.xlu0 %1259
        %1261 = vrot.lane.b32.xlu0 %v938, 64
        %v1262 = vpop.permute.xlu0 %1261
        %1263 = vrot.lane.b32.xlu0 %v940, 64
        %v1264 = vpop.permute.xlu0 %1263
        %v1265 = vmul.f32 %v1038, %v1250
        %v1266 = vmul.f32 %v1040, %v1252
        %v1267 = vmul.f32 %v1042, %v1254
        %v1268 = vmul.f32 %v1044, %v1256
        %v1269 = vmul.f32 %v1046, %v1258
        %v1270 = vmul.f32 %v1048, %v1260
        %v1271 = vmul.f32 %v1050, %v1262
        %v1272 = vmul.f32 %v1052, %v1264
        %v1273 = vadd.f32 %v1241, %v1265
        %v1274 = vadd.f32 %v1242, %v1266
        %v1275 = vadd.f32 %v1243, %v1267
        %v1276 = vadd.f32 %v1244, %v1268
        %v1277 = vadd.f32 %v1245, %v1269
        %v1278 = vadd.f32 %v1246, %v1270
        %v1279 = vadd.f32 %v1247, %v1271
        %v1280 = vadd.f32 %v1248, %v1272
        %v1281 = vmul.f32 %v1022, %v1006
        %v1282 = vmul.f32 %v1024, %v1008
        %v1283 = vmul.f32 %v1026, %v1010
        %v1284 = vmul.f32 %v1028, %v1012
        %v1285 = vmul.f32 %v1030, %v1014
        %v1286 = vmul.f32 %v1032, %v1016
        %v1287 = vmul.f32 %v1034, %v1018
        %v1288 = vmul.f32 %v1036, %v1020
        %1289 = vrot.lane.b32.xlu0 %v1006, 64
        %v1290 = vpop.permute.xlu0 %1289
        %1291 = vrot.lane.b32.xlu0 %v1008, 64
        %v1292 = vpop.permute.xlu0 %1291
        %1293 = vrot.lane.b32.xlu0 %v1010, 64
        %v1294 = vpop.permute.xlu0 %1293
        %1295 = vrot.lane.b32.xlu0 %v1012, 64
        %v1296 = vpop.permute.xlu0 %1295
        %1297 = vrot.lane.b32.xlu0 %v1014, 64
        %v1298 = vpop.permute.xlu0 %1297
        %1299 = vrot.lane.b32.xlu0 %v1016, 64
        %v1300 = vpop.permute.xlu0 %1299
        %1301 = vrot.lane.b32.xlu0 %v1018, 64
        %v1302 = vpop.permute.xlu0 %1301
        %1303 = vrot.lane.b32.xlu0 %v1020, 64
        %v1304 = vpop.permute.xlu0 %1303
        %v1305 = vmul.f32 %v1038, %v1290
        %v1306 = vmul.f32 %v1040, %v1292
        %v1307 = vmul.f32 %v1042, %v1294
        %v1308 = vmul.f32 %v1044, %v1296
        %v1309 = vmul.f32 %v1046, %v1298
        %v1310 = vmul.f32 %v1048, %v1300
        %v1311 = vmul.f32 %v1050, %v1302
        %v1312 = vmul.f32 %v1052, %v1304
        %v1313 = vadd.f32 %v1281, %v1305
        %v1314 = vadd.f32 %v1282, %v1306
        %v1315 = vadd.f32 %v1283, %v1307
        %v1316 = vadd.f32 %v1284, %v1308
        %v1317 = vadd.f32 %v1285, %v1309
        %v1318 = vadd.f32 %v1286, %v1310
        %v1319 = vadd.f32 %v1287, %v1311
        %v1320 = vadd.f32 %v1288, %v1312
        %1321 = vxpose.xlu0.b32.start [1/16] %v1313, 128
        %1322 = vxpose.xlu0.b32.cont [2/16] %v1314, 128
        %1323 = vxpose.xlu0.b32.cont [3/16] %v1315, 128
        %1324 = vxpose.xlu0.b32.cont [4/16] %v1316, 128
        %1325 = vxpose.xlu0.b32.cont [5/16] %v1317, 128
        %1326 = vxpose.xlu0.b32.cont [6/16] %v1318, 128
        %1327 = vxpose.xlu0.b32.cont [7/16] %v1319, 128
        %1328 = vxpose.xlu0.b32.cont [8/16] %v1320, 128
        %1329 = vxpose.xlu0.b32.cont [9/16] 0.0, 128
        %1330 = vxpose.xlu0.b32.cont [10/16] 0.0, 128
        %1331 = vxpose.xlu0.b32.cont [11/16] 0.0, 128
        %1332 = vxpose.xlu0.b32.cont [12/16] 0.0, 128
        %1333 = vxpose.xlu0.b32.cont [13/16] 0.0, 128
        %1334 = vxpose.xlu0.b32.cont [14/16] 0.0, 128
        %1335 = vxpose.xlu0.b32.cont [15/16] 0.0, 128
        %1336 = vxpose.xlu0.b32.end [16/16] 0.0, 128
        %v1337 = vpop.trf.xlu0
        %v1338 = vpop.trf.xlu0
        %v1339 = vpop.trf.xlu0
        %v1340 = vpop.trf.xlu0
        %v1341 = vpop.trf.xlu0
        %v1342 = vpop.trf.xlu0
        %v1343 = vpop.trf.xlu0
        %v1344 = vpop.trf.xlu0
        %v1345 = vpop.trf.xlu0
        %v1346 = vpop.trf.xlu0
        %v1347 = vpop.trf.xlu0
        %v1348 = vpop.trf.xlu0
        %v1349 = vpop.trf.xlu0
        %v1350 = vpop.trf.xlu0
        %v1351 = vpop.trf.xlu0
        %v1352 = vpop.trf.xlu0
        %vm1353 = vcmask 523264
        %v1355 = vsel %vm1353, %v1337, 0
        %v1358 = vsel %vm1353, %v1338, 0
        %v1361 = vsel %vm1353, %v1339, 0
        %v1364 = vsel %vm1353, %v1340, 0
        %v1367 = vsel %vm1353, %v1341, 0
        %v1370 = vsel %vm1353, %v1342, 0
        %v1373 = vsel %vm1353, %v1343, 0
        %v1376 = vsel %vm1353, %v1344, 0
        %v1379 = vsel %vm1353, %v1345, 0
        %v1382 = vsel %vm1353, %v1346, 0
        %v1385 = vsel %vm1353, %v1347, 0
        %v1388 = vsel %vm1353, %v1348, 0
        %v1391 = vsel %vm1353, %v1349, 0
        %v1394 = vsel %vm1353, %v1350, 0
        %v1397 = vsel %vm1353, %v1351, 0
        %v1400 = vsel %vm1353, %v1352, 0
        %1402 = vmatpush.msra.mxu0 0.0
        %1403 = vmatpush.msra.mxu0 0.0
        %1404 = vmatpush.msra.mxu0 0.0
        %1405 = vmatpush.msra.mxu0 0.0
        %1406 = vmatpush.msra.mxu0 0.0
        %1407 = vmatpush.msra.mxu0 0.0
        %1408 = vmatpush.msra.mxu0 0.0
        %1409 = vmatpush.msra.mxu0 0.0
        %1410 = vmatpush.msra.mxu0 %v394
        %1411 = vmatpush.msra.mxu0 %v392
        %1412 = vmatpush.msra.mxu0 %v390
        %1413 = vmatpush.msra.mxu0 %v388
        %1414 = vmatpush.msra.mxu0 %v386
        %1415 = vmatpush.msra.mxu0 %v384
        %1416 = vmatpush.msra.mxu0 %v382
        %1417 = vmatpush.msra.mxu0 %v380
        %1418 = vmatmul.f32.gmra.mxu0 %v1355
        %v1419 = vpop.f32.mrf.mxu0
        %v1420 = vadd.f32 0.0, %v1419
        %1421 = vmatmul.f32.gmra.mxu0 %v1358
        %v1422 = vpop.f32.mrf.mxu0
        %v1423 = vadd.f32 0.0, %v1422
        %1424 = vmatmul.f32.gmra.mxu0 %v1361
        %v1425 = vpop.f32.mrf.mxu0
        %v1426 = vadd.f32 0.0, %v1425
        %1427 = vmatmul.f32.gmra.mxu0 %v1364
        %v1428 = vpop.f32.mrf.mxu0
        %v1429 = vadd.f32 0.0, %v1428
        %1430 = vmatmul.f32.gmra.mxu0 %v1367
        %v1431 = vpop.f32.mrf.mxu0
        %v1432 = vadd.f32 0.0, %v1431
        %1433 = vmatmul.f32.gmra.mxu0 %v1370
        %v1434 = vpop.f32.mrf.mxu0
        %v1435 = vadd.f32 0.0, %v1434
        %1436 = vmatmul.f32.gmra.mxu0 %v1373
        %v1437 = vpop.f32.mrf.mxu0
        %v1438 = vadd.f32 0.0, %v1437
        %1439 = vmatmul.f32.gmra.mxu0 %v1376
        %v1440 = vpop.f32.mrf.mxu0
        %v1441 = vadd.f32 0.0, %v1440
        %1442 = vmatmul.f32.gmra.mxu0 %v1379
        %v1443 = vpop.f32.mrf.mxu0
        %v1444 = vadd.f32 0.0, %v1443
        %1445 = vmatmul.f32.gmra.mxu0 %v1382
        %v1446 = vpop.f32.mrf.mxu0
        %v1447 = vadd.f32 0.0, %v1446
        %1448 = vmatmul.f32.gmra.mxu0 %v1385
        %v1449 = vpop.f32.mrf.mxu0
        %v1450 = vadd.f32 0.0, %v1449
        %1451 = vmatmul.f32.gmra.mxu0 %v1388
        %v1452 = vpop.f32.mrf.mxu0
        %v1453 = vadd.f32 0.0, %v1452
        %1454 = vmatmul.f32.gmra.mxu0 %v1391
        %v1455 = vpop.f32.mrf.mxu0
        %v1456 = vadd.f32 0.0, %v1455
        %1457 = vmatmul.f32.gmra.mxu0 %v1394
        %v1458 = vpop.f32.mrf.mxu0
        %v1459 = vadd.f32 0.0, %v1458
        %1460 = vmatmul.f32.gmra.mxu0 %v1397
        %v1461 = vpop.f32.mrf.mxu0
        %v1462 = vadd.f32 0.0, %v1461
        %1463 = vmatmul.f32.gmra.mxu0 %v1400
        %v1464 = vpop.f32.mrf.mxu0
        %v1465 = vadd.f32 0.0, %v1464
        %1466 = vdwg.mxu0
        %1467 = vmatpush.msra.mxu0 %v1465
        %1468 = vmatpush.msra.mxu0 %v1462
        %1469 = vmatpush.msra.mxu0 %v1459
        %1470 = vmatpush.msra.mxu0 %v1456
        %1471 = vmatpush.msra.mxu0 %v1453
        %1472 = vmatpush.msra.mxu0 %v1450
        %1473 = vmatpush.msra.mxu0 %v1447
        %1474 = vmatpush.msra.mxu0 %v1444
        %1475 = vmatpush.msra.mxu0 %v1441
        %1476 = vmatpush.msra.mxu0 %v1438
        %1477 = vmatpush.msra.mxu0 %v1435
        %1478 = vmatpush.msra.mxu0 %v1432
        %1479 = vmatpush.msra.mxu0 %v1429
        %1480 = vmatpush.msra.mxu0 %v1426
        %1481 = vmatpush.msra.mxu0 %v1423
        %1482 = vmatpush.msra.mxu0 %v1420
        %1483 = vmatmul.f32.gmra.mxu0 %v1273
        %v1484 = vpop.f32.mrf.mxu0
        %v1485 = vadd.f32 0.0, %v1484
        %1486 = vmatmul.f32.gmra.mxu0 %v1274
        %v1487 = vpop.f32.mrf.mxu0
        %v1488 = vadd.f32 0.0, %v1487
        %1489 = vmatmul.f32.gmra.mxu0 %v1275
        %v1490 = vpop.f32.mrf.mxu0
        %v1491 = vadd.f32 0.0, %v1490
        %1492 = vmatmul.f32.gmra.mxu0 %v1276
        %v1493 = vpop.f32.mrf.mxu0
        %v1494 = vadd.f32 0.0, %v1493
        %1495 = vmatmul.f32.gmra.mxu0 %v1277
        %v1496 = vpop.f32.mrf.mxu0
        %v1497 = vadd.f32 0.0, %v1496
        %1498 = vmatmul.f32.gmra.mxu0 %v1278
        %v1499 = vpop.f32.mrf.mxu0
        %v1500 = vadd.f32 0.0, %v1499
        %1501 = vmatmul.f32.gmra.mxu0 %v1279
        %v1502 = vpop.f32.mrf.mxu0
        %v1503 = vadd.f32 0.0, %v1502
        %1504 = vmatmul.f32.gmra.mxu0 %v1280
        %v1505 = vpop.f32.mrf.mxu0
        %v1506 = vadd.f32 0.0, %v1505
        %1507 = vdwg.mxu0
        %v1508 = vmul.f32 %v1135, 0.015625
        %v1509 = vmul.f32 %v1150, 0.015625
        %v1510 = vmul.f32 %v1165, 0.015625
        %v1511 = vmul.f32 %v1180, 0.015625
        %v1512 = vmul.f32 %v1195, 0.015625
        %v1513 = vmul.f32 %v1210, 0.015625
        %v1514 = vmul.f32 %v1225, 0.015625
        %v1515 = vmul.f32 %v1240, 0.015625
        %v1516 = vmul.f32 %v1485, %v1508
        %v1517 = vmul.f32 %v1488, %v1509
        %v1518 = vmul.f32 %v1491, %v1510
        %v1519 = vmul.f32 %v1494, %v1511
        %v1520 = vmul.f32 %v1497, %v1512
        %v1521 = vmul.f32 %v1500, %v1513
        %v1522 = vmul.f32 %v1503, %v1514
        %v1523 = vmul.f32 %v1506, %v1515
        %v1524 = vmul.f32 %v927, %v1088
        %v1525 = vmul.f32 %v929, %v1088
        %v1526 = vmul.f32 %v931, %v1088
        %v1527 = vmul.f32 %v933, %v1088
        %v1528 = vmul.f32 %v935, %v1088
        %v1529 = vmul.f32 %v937, %v1088
        %v1530 = vmul.f32 %v939, %v1088
        %v1531 = vmul.f32 %v941, %v1088
        %1532 = vadd.xlane.f32.xlu0 %v1524
        %v1533 = vpop.xlane.xlu0 %1532
        %1534 = vadd.xlane.f32.xlu0 %v1525
        %v1535 = vpop.xlane.xlu0 %1534
        %1536 = vadd.xlane.f32.xlu0 %v1526
        %v1537 = vpop.xlane.xlu0 %1536
        %1538 = vadd.xlane.f32.xlu0 %v1527
        %v1539 = vpop.xlane.xlu0 %1538
        %1540 = vadd.xlane.f32.xlu0 %v1528
        %v1541 = vpop.xlane.xlu0 %1540
        %1542 = vadd.xlane.f32.xlu0 %v1529
        %v1543 = vpop.xlane.xlu0 %1542
        %1544 = vadd.xlane.f32.xlu0 %v1530
        %v1545 = vpop.xlane.xlu0 %1544
        %1546 = vadd.xlane.f32.xlu0 %v1531
        %v1547 = vpop.xlane.xlu0 %1546
        %v1548 = vadd.f32 %v1533, 1e-06
        %v1549 = vadd.f32 %v1535, 1e-06
        %v1550 = vadd.f32 %v1537, 1e-06
        %v1551 = vadd.f32 %v1539, 1e-06
        %v1552 = vadd.f32 %v1541, 1e-06
        %v1553 = vadd.f32 %v1543, 1e-06
        %v1554 = vadd.f32 %v1545, 1e-06
        %v1555 = vadd.f32 %v1547, 1e-06
        %v1556 = vrcp.pop %v1548
        %v1557 = vmul.f32 %v1548, %v1556
        %v1558 = vsub.f32 1.0, %v1557
        %v1559 = vmul.f32 %v1556, %v1558
        %v1560 = vadd.f32 %v1556, %v1559
        %vm1561 = vweird.f32 %v1548
        %vm1562 = vweird.f32 %v1556
        %vm1563 = vmor %vm1561, %vm1562
        %v1564 = vsel %vm1563, %v1556, %v1560
        %v1565 = vand.u32 2147483647, %v1548
        %vm1566 = vcmp.eq.f32.partialorder %v1565, 8.507059e+37
        %v1567 = vand.u32 %v1548, 2147483648
        %v1568 = vor.u32 1.1754944e-38, %v1567
        %v1569 = vsel %vm1566, %v1568, %v1564
        %v1570 = vmul.f32 1.0, %v1569
        %v1571 = vrcp.pop %v1549
        %v1572 = vmul.f32 %v1549, %v1571
        %v1573 = vsub.f32 1.0, %v1572
        %v1574 = vmul.f32 %v1571, %v1573
        %v1575 = vadd.f32 %v1571, %v1574
        %vm1576 = vweird.f32 %v1549
        %vm1577 = vweird.f32 %v1571
        %vm1578 = vmor %vm1576, %vm1577
        %v1579 = vsel %vm1578, %v1571, %v1575
        %v1580 = vand.u32 2147483647, %v1549
        %vm1581 = vcmp.eq.f32.partialorder %v1580, 8.507059e+37
        %v1582 = vand.u32 %v1549, 2147483648
        %v1583 = vor.u32 1.1754944e-38, %v1582
        %v1584 = vsel %vm1581, %v1583, %v1579
        %v1585 = vmul.f32 1.0, %v1584
        %v1586 = vrcp.pop %v1550
        %v1587 = vmul.f32 %v1550, %v1586
        %v1588 = vsub.f32 1.0, %v1587
        %v1589 = vmul.f32 %v1586, %v1588
        %v1590 = vadd.f32 %v1586, %v1589
        %vm1591 = vweird.f32 %v1550
        %vm1592 = vweird.f32 %v1586
        %vm1593 = vmor %vm1591, %vm1592
        %v1594 = vsel %vm1593, %v1586, %v1590
        %v1595 = vand.u32 2147483647, %v1550
        %vm1596 = vcmp.eq.f32.partialorder %v1595, 8.507059e+37
        %v1597 = vand.u32 %v1550, 2147483648
        %v1598 = vor.u32 1.1754944e-38, %v1597
        %v1599 = vsel %vm1596, %v1598, %v1594
        %v1600 = vmul.f32 1.0, %v1599
        %v1601 = vrcp.pop %v1551
        %v1602 = vmul.f32 %v1551, %v1601
        %v1603 = vsub.f32 1.0, %v1602
        %v1604 = vmul.f32 %v1601, %v1603
        %v1605 = vadd.f32 %v1601, %v1604
        %vm1606 = vweird.f32 %v1551
        %vm1607 = vweird.f32 %v1601
        %vm1608 = vmor %vm1606, %vm1607
        %v1609 = vsel %vm1608, %v1601, %v1605
        %v1610 = vand.u32 2147483647, %v1551
        %vm1611 = vcmp.eq.f32.partialorder %v1610, 8.507059e+37
        %v1612 = vand.u32 %v1551, 2147483648
        %v1613 = vor.u32 1.1754944e-38, %v1612
        %v1614 = vsel %vm1611, %v1613, %v1609
        %v1615 = vmul.f32 1.0, %v1614
        %v1616 = vrcp.pop %v1552
        %v1617 = vmul.f32 %v1552, %v1616
        %v1618 = vsub.f32 1.0, %v1617
        %v1619 = vmul.f32 %v1616, %v1618
        %v1620 = vadd.f32 %v1616, %v1619
        %vm1621 = vweird.f32 %v1552
        %vm1622 = vweird.f32 %v1616
        %vm1623 = vmor %vm1621, %vm1622
        %v1624 = vsel %vm1623, %v1616, %v1620
        %v1625 = vand.u32 2147483647, %v1552
        %vm1626 = vcmp.eq.f32.partialorder %v1625, 8.507059e+37
        %v1627 = vand.u32 %v1552, 2147483648
        %v1628 = vor.u32 1.1754944e-38, %v1627
        %v1629 = vsel %vm1626, %v1628, %v1624
        %v1630 = vmul.f32 1.0, %v1629
        %v1631 = vrcp.pop %v1553
        %v1632 = vmul.f32 %v1553, %v1631
        %v1633 = vsub.f32 1.0, %v1632
        %v1634 = vmul.f32 %v1631, %v1633
        %v1635 = vadd.f32 %v1631, %v1634
        %vm1636 = vweird.f32 %v1553
        %vm1637 = vweird.f32 %v1631
        %vm1638 = vmor %vm1636, %vm1637
        %v1639 = vsel %vm1638, %v1631, %v1635
        %v1640 = vand.u32 2147483647, %v1553
        %vm1641 = vcmp.eq.f32.partialorder %v1640, 8.507059e+37
        %v1642 = vand.u32 %v1553, 2147483648
        %v1643 = vor.u32 1.1754944e-38, %v1642
        %v1644 = vsel %vm1641, %v1643, %v1639
        %v1645 = vmul.f32 1.0, %v1644
        %v1646 = vrcp.pop %v1554
        %v1647 = vmul.f32 %v1554, %v1646
        %v1648 = vsub.f32 1.0, %v1647
        %v1649 = vmul.f32 %v1646, %v1648
        %v1650 = vadd.f32 %v1646, %v1649
        %vm1651 = vweird.f32 %v1554
        %vm1652 = vweird.f32 %v1646
        %vm1653 = vmor %vm1651, %vm1652
        %v1654 = vsel %vm1653, %v1646, %v1650
        %v1655 = vand.u32 2147483647, %v1554
        %vm1656 = vcmp.eq.f32.partialorder %v1655, 8.507059e+37
        %v1657 = vand.u32 %v1554, 2147483648
        %v1658 = vor.u32 1.1754944e-38, %v1657
        %v1659 = vsel %vm1656, %v1658, %v1654
        %v1660 = vmul.f32 1.0, %v1659
        %v1661 = vrcp.pop %v1555
        %v1662 = vmul.f32 %v1555, %v1661
        %v1663 = vsub.f32 1.0, %v1662
        %v1664 = vmul.f32 %v1661, %v1663
        %v1665 = vadd.f32 %v1661, %v1664
        %vm1666 = vweird.f32 %v1555
        %vm1667 = vweird.f32 %v1661
        %vm1668 = vmor %vm1666, %vm1667
        %v1669 = vsel %vm1668, %v1661, %v1665
        %v1670 = vand.u32 2147483647, %v1555
        %vm1671 = vcmp.eq.f32.partialorder %v1670, 8.507059e+37
        %v1672 = vand.u32 %v1555, 2147483648
        %v1673 = vor.u32 1.1754944e-38, %v1672
        %v1674 = vsel %vm1671, %v1673, %v1669
        %v1675 = vmul.f32 1.0, %v1674
        %v1676 = vmul.f32 %v1023, %v927
        %v1677 = vmul.f32 %v1025, %v929
        %v1678 = vmul.f32 %v1027, %v931
        %v1679 = vmul.f32 %v1029, %v933
        %v1680 = vmul.f32 %v1031, %v935
        %v1681 = vmul.f32 %v1033, %v937
        %v1682 = vmul.f32 %v1035, %v939
        %v1683 = vmul.f32 %v1037, %v941
        %1684 = vrot.lane.b32.xlu0 %v927, 64
        %v1685 = vpop.permute.xlu0 %1684
        %1686 = vrot.lane.b32.xlu0 %v929, 64
        %v1687 = vpop.permute.xlu0 %1686
        %1688 = vrot.lane.b32.xlu0 %v931, 64
        %v1689 = vpop.permute.xlu0 %1688
        %1690 = vrot.lane.b32.xlu0 %v933, 64
        %v1691 = vpop.permute.xlu0 %1690
        %1692 = vrot.lane.b32.xlu0 %v935, 64
        %v1693 = vpop.permute.xlu0 %1692
        %1694 = vrot.lane.b32.xlu0 %v937, 64
        %v1695 = vpop.permute.xlu0 %1694
        %1696 = vrot.lane.b32.xlu0 %v939, 64
        %v1697 = vpop.permute.xlu0 %1696
        %1698 = vrot.lane.b32.xlu0 %v941, 64
        %v1699 = vpop.permute.xlu0 %1698
        %v1700 = vmul.f32 %v1039, %v1685
        %v1701 = vmul.f32 %v1041, %v1687
        %v1702 = vmul.f32 %v1043, %v1689
        %v1703 = vmul.f32 %v1045, %v1691
        %v1704 = vmul.f32 %v1047, %v1693
        %v1705 = vmul.f32 %v1049, %v1695
        %v1706 = vmul.f32 %v1051, %v1697
        %v1707 = vmul.f32 %v1053, %v1699
        %v1708 = vadd.f32 %v1676, %v1700
        %v1709 = vadd.f32 %v1677, %v1701
        %v1710 = vadd.f32 %v1678, %v1702
        %v1711 = vadd.f32 %v1679, %v1703
        %v1712 = vadd.f32 %v1680, %v1704
        %v1713 = vadd.f32 %v1681, %v1705
        %v1714 = vadd.f32 %v1682, %v1706
        %v1715 = vadd.f32 %v1683, %v1707
        %v1716 = vmul.f32 %v1023, %v1007
        %v1717 = vmul.f32 %v1025, %v1009
        %v1718 = vmul.f32 %v1027, %v1011
        %v1719 = vmul.f32 %v1029, %v1013
        %v1720 = vmul.f32 %v1031, %v1015
        %v1721 = vmul.f32 %v1033, %v1017
        %v1722 = vmul.f32 %v1035, %v1019
        %v1723 = vmul.f32 %v1037, %v1021
        %1724 = vrot.lane.b32.xlu0 %v1007, 64
        %v1725 = vpop.permute.xlu0 %1724
        %1726 = vrot.lane.b32.xlu0 %v1009, 64
        %v1727 = vpop.permute.xlu0 %1726
        %1728 = vrot.lane.b32.xlu0 %v1011, 64
        %v1729 = vpop.permute.xlu0 %1728
        %1730 = vrot.lane.b32.xlu0 %v1013, 64
        %v1731 = vpop.permute.xlu0 %1730
        %1732 = vrot.lane.b32.xlu0 %v1015, 64
        %v1733 = vpop.permute.xlu0 %1732
        %1734 = vrot.lane.b32.xlu0 %v1017, 64
        %v1735 = vpop.permute.xlu0 %1734
        %1736 = vrot.lane.b32.xlu0 %v1019, 64
        %v1737 = vpop.permute.xlu0 %1736
        %1738 = vrot.lane.b32.xlu0 %v1021, 64
        %v1739 = vpop.permute.xlu0 %1738
        %v1740 = vmul.f32 %v1039, %v1725
        %v1741 = vmul.f32 %v1041, %v1727
        %v1742 = vmul.f32 %v1043, %v1729
        %v1743 = vmul.f32 %v1045, %v1731
        %v1744 = vmul.f32 %v1047, %v1733
        %v1745 = vmul.f32 %v1049, %v1735
        %v1746 = vmul.f32 %v1051, %v1737
        %v1747 = vmul.f32 %v1053, %v1739
        %v1748 = vadd.f32 %v1716, %v1740
        %v1749 = vadd.f32 %v1717, %v1741
        %v1750 = vadd.f32 %v1718, %v1742
        %v1751 = vadd.f32 %v1719, %v1743
        %v1752 = vadd.f32 %v1720, %v1744
        %v1753 = vadd.f32 %v1721, %v1745
        %v1754 = vadd.f32 %v1722, %v1746
        %v1755 = vadd.f32 %v1723, %v1747
        %1756 = vxpose.xlu0.b32.start [1/16] %v1748, 128
        %1757 = vxpose.xlu0.b32.cont [2/16] %v1749, 128
        %1758 = vxpose.xlu0.b32.cont [3/16] %v1750, 128
        %1759 = vxpose.xlu0.b32.cont [4/16] %v1751, 128
        %1760 = vxpose.xlu0.b32.cont [5/16] %v1752, 128
        %1761 = vxpose.xlu0.b32.cont [6/16] %v1753, 128
        %1762 = vxpose.xlu0.b32.cont [7/16] %v1754, 128
        %1763 = vxpose.xlu0.b32.cont [8/16] %v1755, 128
        %1764 = vxpose.xlu0.b32.cont [9/16] 0.0, 128
        %1765 = vxpose.xlu0.b32.cont [10/16] 0.0, 128
        %1766 = vxpose.xlu0.b32.cont [11/16] 0.0, 128
        %1767 = vxpose.xlu0.b32.cont [12/16] 0.0, 128
        %1768 = vxpose.xlu0.b32.cont [13/16] 0.0, 128
        %1769 = vxpose.xlu0.b32.cont [14/16] 0.0, 128
        %1770 = vxpose.xlu0.b32.cont [15/16] 0.0, 128
        %1771 = vxpose.xlu0.b32.end [16/16] 0.0, 128
        %v1772 = vpop.trf.xlu0
        %v1773 = vpop.trf.xlu0
        %v1774 = vpop.trf.xlu0
        %v1775 = vpop.trf.xlu0
        %v1776 = vpop.trf.xlu0
        %v1777 = vpop.trf.xlu0
        %v1778 = vpop.trf.xlu0
        %v1779 = vpop.trf.xlu0
        %v1780 = vpop.trf.xlu0
        %v1781 = vpop.trf.xlu0
        %v1782 = vpop.trf.xlu0
        %v1783 = vpop.trf.xlu0
        %v1784 = vpop.trf.xlu0
        %v1785 = vpop.trf.xlu0
        %v1786 = vpop.trf.xlu0
        %v1787 = vpop.trf.xlu0
        %v1789 = vsel %vm1353, %v1772, 0
        %v1792 = vsel %vm1353, %v1773, 0
        %v1795 = vsel %vm1353, %v1774, 0
        %v1798 = vsel %vm1353, %v1775, 0
        %v1801 = vsel %vm1353, %v1776, 0
        %v1804 = vsel %vm1353, %v1777, 0
        %v1807 = vsel %vm1353, %v1778, 0
        %v1810 = vsel %vm1353, %v1779, 0
        %v1813 = vsel %vm1353, %v1780, 0
        %v1816 = vsel %vm1353, %v1781, 0
        %v1819 = vsel %vm1353, %v1782, 0
        %v1822 = vsel %vm1353, %v1783, 0
        %v1825 = vsel %vm1353, %v1784, 0
        %v1828 = vsel %vm1353, %v1785, 0
        %v1831 = vsel %vm1353, %v1786, 0
        %v1834 = vsel %vm1353, %v1787, 0
        %1836 = vmatpush.msra.mxu0 0.0
        %1837 = vmatpush.msra.mxu0 0.0
        %1838 = vmatpush.msra.mxu0 0.0
        %1839 = vmatpush.msra.mxu0 0.0
        %1840 = vmatpush.msra.mxu0 0.0
        %1841 = vmatpush.msra.mxu0 0.0
        %1842 = vmatpush.msra.mxu0 0.0
        %1843 = vmatpush.msra.mxu0 0.0
        %1844 = vmatpush.msra.mxu0 %v395
        %1845 = vmatpush.msra.mxu0 %v393
        %1846 = vmatpush.msra.mxu0 %v391
        %1847 = vmatpush.msra.mxu0 %v389
        %1848 = vmatpush.msra.mxu0 %v387
        %1849 = vmatpush.msra.mxu0 %v385
        %1850 = vmatpush.msra.mxu0 %v383
        %1851 = vmatpush.msra.mxu0 %v381
        %1852 = vmatmul.f32.gmra.mxu0 %v1789
        %v1853 = vpop.f32.mrf.mxu0
        %v1854 = vadd.f32 0.0, %v1853
        %1855 = vmatmul.f32.gmra.mxu0 %v1792
        %v1856 = vpop.f32.mrf.mxu0
        %v1857 = vadd.f32 0.0, %v1856
        %1858 = vmatmul.f32.gmra.mxu0 %v1795
        %v1859 = vpop.f32.mrf.mxu0
        %v1860 = vadd.f32 0.0, %v1859
        %1861 = vmatmul.f32.gmra.mxu0 %v1798
        %v1862 = vpop.f32.mrf.mxu0
        %v1863 = vadd.f32 0.0, %v1862
        %1864 = vmatmul.f32.gmra.mxu0 %v1801
        %v1865 = vpop.f32.mrf.mxu0
        %v1866 = vadd.f32 0.0, %v1865
        %1867 = vmatmul.f32.gmra.mxu0 %v1804
        %v1868 = vpop.f32.mrf.mxu0
        %v1869 = vadd.f32 0.0, %v1868
        %1870 = vmatmul.f32.gmra.mxu0 %v1807
        %v1871 = vpop.f32.mrf.mxu0
        %v1872 = vadd.f32 0.0, %v1871
        %1873 = vmatmul.f32.gmra.mxu0 %v1810
        %v1874 = vpop.f32.mrf.mxu0
        %v1875 = vadd.f32 0.0, %v1874
        %1876 = vmatmul.f32.gmra.mxu0 %v1813
        %v1877 = vpop.f32.mrf.mxu0
        %v1878 = vadd.f32 0.0, %v1877
        %1879 = vmatmul.f32.gmra.mxu0 %v1816
        %v1880 = vpop.f32.mrf.mxu0
        %v1881 = vadd.f32 0.0, %v1880
        %1882 = vmatmul.f32.gmra.mxu0 %v1819
        %v1883 = vpop.f32.mrf.mxu0
        %v1884 = vadd.f32 0.0, %v1883
        %1885 = vmatmul.f32.gmra.mxu0 %v1822
        %v1886 = vpop.f32.mrf.mxu0
        %v1887 = vadd.f32 0.0, %v1886
        %1888 = vmatmul.f32.gmra.mxu0 %v1825
        %v1889 = vpop.f32.mrf.mxu0
        %v1890 = vadd.f32 0.0, %v1889
        %1891 = vmatmul.f32.gmra.mxu0 %v1828
        %v1892 = vpop.f32.mrf.mxu0
        %v1893 = vadd.f32 0.0, %v1892
        %1894 = vmatmul.f32.gmra.mxu0 %v1831
        %v1895 = vpop.f32.mrf.mxu0
        %v1896 = vadd.f32 0.0, %v1895
        %1897 = vmatmul.f32.gmra.mxu0 %v1834
        %v1898 = vpop.f32.mrf.mxu0
        %v1899 = vadd.f32 0.0, %v1898
        %1900 = vdwg.mxu0
        %1901 = vmatpush.msra.mxu0 %v1899
        %1902 = vmatpush.msra.mxu0 %v1896
        %1903 = vmatpush.msra.mxu0 %v1893
        %1904 = vmatpush.msra.mxu0 %v1890
        %1905 = vmatpush.msra.mxu0 %v1887
        %1906 = vmatpush.msra.mxu0 %v1884
        %1907 = vmatpush.msra.mxu0 %v1881
        %1908 = vmatpush.msra.mxu0 %v1878
        %1909 = vmatpush.msra.mxu0 %v1875
        %1910 = vmatpush.msra.mxu0 %v1872
        %1911 = vmatpush.msra.mxu0 %v1869
        %1912 = vmatpush.msra.mxu0 %v1866
        %1913 = vmatpush.msra.mxu0 %v1863
        %1914 = vmatpush.msra.mxu0 %v1860
        %1915 = vmatpush.msra.mxu0 %v1857
        %1916 = vmatpush.msra.mxu0 %v1854
        %1917 = vmatmul.f32.gmra.mxu0 %v1708
        %v1918 = vpop.f32.mrf.mxu0
        %v1919 = vadd.f32 0.0, %v1918
        %1920 = vmatmul.f32.gmra.mxu0 %v1709
        %v1921 = vpop.f32.mrf.mxu0
        %v1922 = vadd.f32 0.0, %v1921
        %1923 = vmatmul.f32.gmra.mxu0 %v1710
        %v1924 = vpop.f32.mrf.mxu0
        %v1925 = vadd.f32 0.0, %v1924
        %1926 = vmatmul.f32.gmra.mxu0 %v1711
        %v1927 = vpop.f32.mrf.mxu0
        %v1928 = vadd.f32 0.0, %v1927
        %1929 = vmatmul.f32.gmra.mxu0 %v1712
        %v1930 = vpop.f32.mrf.mxu0
        %v1931 = vadd.f32 0.0, %v1930
        %1932 = vmatmul.f32.gmra.mxu0 %v1713
        %v1933 = vpop.f32.mrf.mxu0
        %v1934 = vadd.f32 0.0, %v1933
        %1935 = vmatmul.f32.gmra.mxu0 %v1714
        %v1936 = vpop.f32.mrf.mxu0
        %v1937 = vadd.f32 0.0, %v1936
        %1938 = vmatmul.f32.gmra.mxu0 %v1715
        %v1939 = vpop.f32.mrf.mxu0
        %v1940 = vadd.f32 0.0, %v1939
        %1941 = vdwg.mxu0
        %v1942 = vmul.f32 %v1570, 0.015625
        %v1943 = vmul.f32 %v1585, 0.015625
        %v1944 = vmul.f32 %v1600, 0.015625
        %v1945 = vmul.f32 %v1615, 0.015625
        %v1946 = vmul.f32 %v1630, 0.015625
        %v1947 = vmul.f32 %v1645, 0.015625
        %v1948 = vmul.f32 %v1660, 0.015625
        %v1949 = vmul.f32 %v1675, 0.015625
        %v1950 = vmul.f32 %v1919, %v1942
        %v1951 = vmul.f32 %v1922, %v1943
        %v1952 = vmul.f32 %v1925, %v1944
        %v1953 = vmul.f32 %v1928, %v1945
        %v1954 = vmul.f32 %v1931, %v1946
        %v1955 = vmul.f32 %v1934, %v1947
        %v1956 = vmul.f32 %v1937, %v1948
        %v1957 = vmul.f32 %v1940, %v1949
        %v1958 = vld [vmem:[#allocation11] sm:$0xff]
        %v1959 = vld [vmem:[#allocation11 + $0x8] sm:$0xff]
        %v1960 = vld [vmem:[#allocation11 + $0x10] sm:$0x1]
        %v1961 = vld [vmem:[#allocation11 + $0x18] sm:$0x1]
        %v1962 = vld [vmem:[%s6] sm:$0x3]
        %v1963 = vlaneseq
        %v1964 = vshrl.u32 %v1963, 7
        %v1965 = vadd.s32 %v1964, 8
        %v1966 = vadd.s32 %v1964, 16
        %v1967 = vadd.s32 %v1964, 24
        %v1968 = vadd.s32 %v1964, 32
        %v1969 = vadd.s32 %v1964, 40
        %v1970 = vadd.s32 %v1964, 48
        %v1971 = vadd.s32 %v1964, 56
        %vm1972 = vcmp.lt.s32.totalorder %v1964, 0
        %v1973 = vsub.s32 0, %v1964
        %v1974 = vsel %vm1972, %v1973, %v1964
        %v1975 = vshrl.u32 %v1974, 3
        %v1976 = vand.u32 %v1974, 7
        %v1977 = vsub.s32 0, %v1976
        %v1978 = vsel %vm1972, %v1977, %v1976
        %vm1979 = vcmp.lt.s32.totalorder %v1965, 0
        %v1980 = vsub.s32 0, %v1965
        %v1981 = vsel %vm1979, %v1980, %v1965
        %v1982 = vshrl.u32 %v1981, 3
        %v1983 = vand.u32 %v1981, 7
        %v1984 = vsub.s32 0, %v1983
        %v1985 = vsel %vm1979, %v1984, %v1983
        %vm1986 = vcmp.lt.s32.totalorder %v1966, 0
        %v1987 = vsub.s32 0, %v1966
        %v1988 = vsel %vm1986, %v1987, %v1966
        %v1989 = vshrl.u32 %v1988, 3
        %v1990 = vand.u32 %v1988, 7
        %v1991 = vsub.s32 0, %v1990
        %v1992 = vsel %vm1986, %v1991, %v1990
        %vm1993 = vcmp.lt.s32.totalorder %v1967, 0
        %v1994 = vsub.s32 0, %v1967
        %v1995 = vsel %vm1993, %v1994, %v1967
        %v1996 = vshrl.u32 %v1995, 3
        %v1997 = vand.u32 %v1995, 7
        %v1998 = vsub.s32 0, %v1997
        %v1999 = vsel %vm1993, %v1998, %v1997
        %vm2000 = vcmp.lt.s32.totalorder %v1968, 0
        %v2001 = vsub.s32 0, %v1968
        %v2002 = vsel %vm2000, %v2001, %v1968
        %v2003 = vshrl.u32 %v2002, 3
        %v2004 = vand.u32 %v2002, 7
        %v2005 = vsub.s32 0, %v2004
        %v2006 = vsel %vm2000, %v2005, %v2004
        %vm2007 = vcmp.lt.s32.totalorder %v1969, 0
        %v2008 = vsub.s32 0, %v1969
        %v2009 = vsel %vm2007, %v2008, %v1969
        %v2010 = vshrl.u32 %v2009, 3
        %v2011 = vand.u32 %v2009, 7
        %v2012 = vsub.s32 0, %v2011
        %v2013 = vsel %vm2007, %v2012, %v2011
        %vm2014 = vcmp.lt.s32.totalorder %v1970, 0
        %v2015 = vsub.s32 0, %v1970
        %v2016 = vsel %vm2014, %v2015, %v1970
        %v2017 = vshrl.u32 %v2016, 3
        %v2018 = vand.u32 %v2016, 7
        %v2019 = vsub.s32 0, %v2018
        %v2020 = vsel %vm2014, %v2019, %v2018
        %vm2021 = vcmp.lt.s32.totalorder %v1971, 0
        %v2022 = vsub.s32 0, %v1971
        %v2023 = vsel %vm2021, %v2022, %v1971
        %v2024 = vshrl.u32 %v2023, 3
        %v2025 = vand.u32 %v2023, 7
        %v2026 = vsub.s32 0, %v2025
        %v2027 = vsel %vm2021, %v2026, %v2025
        %vm2028 = vcmp.ne.s32.totalorder %v1978, 0
        %vm2029 = vcmp.ne.s32.totalorder %v1985, 0
        %vm2030 = vcmp.ne.s32.totalorder %v1992, 0
        %vm2031 = vcmp.ne.s32.totalorder %v1999, 0
        %vm2032 = vcmp.ne.s32.totalorder %v2006, 0
        %vm2033 = vcmp.ne.s32.totalorder %v2013, 0
        %vm2034 = vcmp.ne.s32.totalorder %v2020, 0
        %vm2035 = vcmp.ne.s32.totalorder %v2027, 0
        %vm2036 = vcmp.lt.s32.totalorder %v1978, 0
        %vm2037 = vcmp.lt.s32.totalorder %v1985, 0
        %vm2038 = vcmp.lt.s32.totalorder %v1992, 0
        %vm2039 = vcmp.lt.s32.totalorder %v1999, 0
        %vm2040 = vcmp.lt.s32.totalorder %v2006, 0
        %vm2041 = vcmp.lt.s32.totalorder %v2013, 0
        %vm2042 = vcmp.lt.s32.totalorder %v2020, 0
        %vm2043 = vcmp.lt.s32.totalorder %v2027, 0
        %vm2044 = vmand %vm2036, %vm2028
        %vm2045 = vmand %vm2037, %vm2029
        %vm2046 = vmand %vm2038, %vm2030
        %vm2047 = vmand %vm2039, %vm2031
        %vm2048 = vmand %vm2040, %vm2032
        %vm2049 = vmand %vm2041, %vm2033
        %vm2050 = vmand %vm2042, %vm2034
        %vm2051 = vmand %vm2043, %vm2035
        %v2052 = vadd.s32 %v1978, 8
        %v2053 = vadd.s32 %v1985, 8
        %v2054 = vadd.s32 %v1992, 8
        %v2055 = vadd.s32 %v1999, 8
        %v2056 = vadd.s32 %v2006, 8
        %v2057 = vadd.s32 %v2013, 8
        %v2058 = vadd.s32 %v2020, 8
        %v2059 = vadd.s32 %v2027, 8
        %v2060 = vsel %vm2044, %v2052, %v1978
        %v2061 = vsel %vm2045, %v2053, %v1985
        %v2062 = vsel %vm2046, %v2054, %v1992
        %v2063 = vsel %vm2047, %v2055, %v1999
        %v2064 = vsel %vm2048, %v2056, %v2006
        %v2065 = vsel %vm2049, %v2057, %v2013
        %v2066 = vsel %vm2050, %v2058, %v2020
        %v2067 = vsel %vm2051, %v2059, %v2027
        %vm2068 = vcmp.ne.s32.totalorder %v2060, 0
        %vm2069 = vcmp.ne.s32.totalorder %v2061, 0
        %vm2070 = vcmp.ne.s32.totalorder %v2062, 0
        %vm2071 = vcmp.ne.s32.totalorder %v2063, 0
        %vm2072 = vcmp.ne.s32.totalorder %v2064, 0
        %vm2073 = vcmp.ne.s32.totalorder %v2065, 0
        %vm2074 = vcmp.ne.s32.totalorder %v2066, 0
        %vm2075 = vcmp.ne.s32.totalorder %v2067, 0
        %vm2076 = vcmp.ne.s32.totalorder %v2060, 7
        %vm2077 = vcmp.ne.s32.totalorder %v2061, 7
        %vm2078 = vcmp.ne.s32.totalorder %v2062, 7
        %vm2079 = vcmp.ne.s32.totalorder %v2063, 7
        %vm2080 = vcmp.ne.s32.totalorder %v2064, 7
        %vm2081 = vcmp.ne.s32.totalorder %v2065, 7
        %vm2082 = vcmp.ne.s32.totalorder %v2066, 7
        %vm2083 = vcmp.ne.s32.totalorder %v2067, 7
        %vm2100 = vcmask 1040384
        %v2101 = vrot.slane %v380, 7
        %v2102 = vrot.slane %v381, 7
        %v2103 = vrot.slane %v382, 7
        %v2104 = vsel %vm2100, %v2101, %v2103
        %v2105 = vrot.slane %v383, 7
        %v2106 = vsel %vm2100, %v2102, %v2105
        %v2107 = vrot.slane %v384, 7
        %v2108 = vsel %vm2100, %v2103, %v2107
        %v2109 = vrot.slane %v385, 7
        %v2110 = vsel %vm2100, %v2105, %v2109
        %v2111 = vrot.slane %v386, 7
        %v2112 = vsel %vm2100, %v2107, %v2111
        %v2113 = vrot.slane %v387, 7
        %v2114 = vsel %vm2100, %v2109, %v2113
        %v2115 = vrot.slane %v388, 7
        %v2116 = vsel %vm2100, %v2111, %v2115
        %v2117 = vrot.slane %v389, 7
        %v2118 = vsel %vm2100, %v2113, %v2117
        %v2119 = vrot.slane %v390, 7
        %v2120 = vsel %vm2100, %v2115, %v2119
        %v2121 = vrot.slane %v391, 7
        %v2122 = vsel %vm2100, %v2117, %v2121
        %v2123 = vrot.slane %v392, 7
        %v2124 = vsel %vm2100, %v2119, %v2123
        %v2125 = vrot.slane %v393, 7
        %v2126 = vsel %vm2100, %v2121, %v2125
        %v2127 = vrot.slane %v394, 7
        %v2128 = vsel %vm2100, %v2123, %v2127
        %v2129 = vrot.slane %v395, 7
        %v2130 = vsel %vm2100, %v2125, %v2129
        %v2147 = vsel %vm2100, 0.0, %v2101
        %v2148 = vsel %vm2100, 0.0, %v2102
        %v2149 = vsel %vm2068, 1, 0
        %v2150 = vsel %vm2069, 1, 0
        %v2151 = vsel %vm2070, 1, 0
        %v2152 = vsel %vm2071, 1, 0
        %v2153 = vsel %vm2072, 1, 0
        %v2154 = vsel %vm2073, 1, 0
        %v2155 = vsel %vm2074, 1, 0
        %v2156 = vsel %vm2075, 1, 0
        %vm2157 = vcmp.eq.s32.totalorder %v2149, 1
        %vm2158 = vcmp.eq.s32.totalorder %v2150, 1
        %vm2159 = vcmp.eq.s32.totalorder %v2151, 1
        %vm2160 = vcmp.eq.s32.totalorder %v2152, 1
        %vm2161 = vcmp.eq.s32.totalorder %v2153, 1
        %vm2162 = vcmp.eq.s32.totalorder %v2154, 1
        %vm2163 = vcmp.eq.s32.totalorder %v2155, 1
        %vm2164 = vcmp.eq.s32.totalorder %v2156, 1
        %v2165 = vsel %vm2157, %v2147, 0.0
        %v2166 = vsel %vm2157, %v2148, 0.0
        %v2167 = vsel %vm2158, %v2104, 0.0
        %v2168 = vsel %vm2158, %v2106, 0.0
        %v2169 = vsel %vm2159, %v2108, 0.0
        %v2170 = vsel %vm2159, %v2110, 0.0
        %v2171 = vsel %vm2160, %v2112, 0.0
        %v2172 = vsel %vm2160, %v2114, 0.0
        %v2173 = vsel %vm2161, %v2116, 0.0
        %v2174 = vsel %vm2161, %v2118, 0.0
        %v2175 = vsel %vm2162, %v2120, 0.0
        %v2176 = vsel %vm2162, %v2122, 0.0
        %v2177 = vsel %vm2163, %v2124, 0.0
        %v2178 = vsel %vm2163, %v2126, 0.0
        %v2179 = vsel %vm2164, %v2128, 0.0
        %v2180 = vsel %vm2164, %v2130, 0.0
        %vm2181 = vcmask 1046528
        %v2182 = vrot.slane %v380, 1
        %v2183 = vrot.slane %v382, 1
        %v2184 = vsel %vm2181, %v2182, %v2183
        %v2185 = vrot.slane %v381, 1
        %v2186 = vrot.slane %v383, 1
        %v2187 = vsel %vm2181, %v2185, %v2186
        %v2188 = vrot.slane %v384, 1
        %v2189 = vsel %vm2181, %v2183, %v2188
        %v2190 = vrot.slane %v385, 1
        %v2191 = vsel %vm2181, %v2186, %v2190
        %v2192 = vrot.slane %v386, 1
        %v2193 = vsel %vm2181, %v2188, %v2192
        %v2194 = vrot.slane %v387, 1
        %v2195 = vsel %vm2181, %v2190, %v2194
        %v2196 = vrot.slane %v388, 1
        %v2197 = vsel %vm2181, %v2192, %v2196
        %v2198 = vrot.slane %v389, 1
        %v2199 = vsel %vm2181, %v2194, %v2198
        %v2200 = vrot.slane %v390, 1
        %v2201 = vsel %vm2181, %v2196, %v2200
        %v2202 = vrot.slane %v391, 1
        %v2203 = vsel %vm2181, %v2198, %v2202
        %v2204 = vrot.slane %v392, 1
        %v2205 = vsel %vm2181, %v2200, %v2204
        %v2206 = vrot.slane %v393, 1
        %v2207 = vsel %vm2181, %v2202, %v2206
        %v2208 = vrot.slane %v394, 1
        %v2209 = vsel %vm2181, %v2204, %v2208
        %v2210 = vrot.slane %v395, 1
        %v2211 = vsel %vm2181, %v2206, %v2210
        %v2228 = vsel %vm2181, %v2208, 0.0
        %v2229 = vsel %vm2181, %v2210, 0.0
        %v2230 = vsel %vm2076, 1, 0
        %v2231 = vsel %vm2077, 1, 0
        %v2232 = vsel %vm2078, 1, 0
        %v2233 = vsel %vm2079, 1, 0
        %v2234 = vsel %vm2080, 1, 0
        %v2235 = vsel %vm2081, 1, 0
        %v2236 = vsel %vm2082, 1, 0
        %v2237 = vsel %vm2083, 1, 0
        %vm2238 = vcmp.eq.s32.totalorder %v2230, 1
        %vm2239 = vcmp.eq.s32.totalorder %v2231, 1
        %vm2240 = vcmp.eq.s32.totalorder %v2232, 1
        %vm2241 = vcmp.eq.s32.totalorder %v2233, 1
        %vm2242 = vcmp.eq.s32.totalorder %v2234, 1
        %vm2243 = vcmp.eq.s32.totalorder %v2235, 1
        %vm2244 = vcmp.eq.s32.totalorder %v2236, 1
        %vm2245 = vcmp.eq.s32.totalorder %v2237, 1
        %v2246 = vsel %vm2238, %v2184, 0.0
        %v2247 = vsel %vm2238, %v2187, 0.0
        %v2248 = vsel %vm2239, %v2189, 0.0
        %v2249 = vsel %vm2239, %v2191, 0.0
        %v2250 = vsel %vm2240, %v2193, 0.0
        %v2251 = vsel %vm2240, %v2195, 0.0
        %v2252 = vsel %vm2241, %v2197, 0.0
        %v2253 = vsel %vm2241, %v2199, 0.0
        %v2254 = vsel %vm2242, %v2201, 0.0
        %v2255 = vsel %vm2242, %v2203, 0.0
        %v2256 = vsel %vm2243, %v2205, 0.0
        %v2257 = vsel %vm2243, %v2207, 0.0
        %v2258 = vsel %vm2244, %v2209, 0.0
        %v2259 = vsel %vm2244, %v2211, 0.0
        %v2260 = vsel %vm2245, %v2228, 0.0
        %v2261 = vsel %vm2245, %v2229, 0.0
        %v2263 = vperm.slane %v1962, 0
        %v2264 = vperm.slane %v1962, 1
        %v2267 = vadd.f32 %v1516, %v2263
        %v2268 = vadd.f32 %v1950, %v2264
        %v2269 = vadd.f32 %v1517, %v2263
        %v2270 = vadd.f32 %v1951, %v2264
        %v2271 = vadd.f32 %v1518, %v2263
        %v2272 = vadd.f32 %v1952, %v2264
        %v2273 = vadd.f32 %v1519, %v2263
        %v2274 = vadd.f32 %v1953, %v2264
        %v2275 = vadd.f32 %v1520, %v2263
        %v2276 = vadd.f32 %v1954, %v2264
        %v2277 = vadd.f32 %v1521, %v2263
        %v2278 = vadd.f32 %v1955, %v2264
        %v2279 = vadd.f32 %v1522, %v2263
        %v2280 = vadd.f32 %v1956, %v2264
        %v2281 = vadd.f32 %v1523, %v2263
        %v2282 = vadd.f32 %v1957, %v2264
        %v2283 = vperm.slane %v1958, 0
        %v2284 = vperm.slane %v1959, 0
        %v2285 = vmul.f32 %v2165, %v2283
        %v2286 = vmul.f32 %v2166, %v2284
        %v2287 = vmul.f32 %v2167, %v2283
        %v2288 = vmul.f32 %v2168, %v2284
        %v2289 = vmul.f32 %v2169, %v2283
        %v2290 = vmul.f32 %v2170, %v2284
        %v2291 = vmul.f32 %v2171, %v2283
        %v2292 = vmul.f32 %v2172, %v2284
        %v2293 = vmul.f32 %v2173, %v2283
        %v2294 = vmul.f32 %v2174, %v2284
        %v2295 = vmul.f32 %v2175, %v2283
        %v2296 = vmul.f32 %v2176, %v2284
        %v2297 = vmul.f32 %v2177, %v2283
        %v2298 = vmul.f32 %v2178, %v2284
        %v2299 = vperm.slane %v1958, 1
        %v2300 = vperm.slane %v1959, 1
        %v2301 = vmul.f32 %v380, %v2299
        %v2302 = vmul.f32 %v381, %v2300
        %v2303 = vmul.f32 %v382, %v2299
        %v2304 = vmul.f32 %v383, %v2300
        %v2305 = vmul.f32 %v384, %v2299
        %v2306 = vmul.f32 %v385, %v2300
        %v2307 = vmul.f32 %v386, %v2299
        %v2308 = vmul.f32 %v387, %v2300
        %v2309 = vmul.f32 %v388, %v2299
        %v2310 = vmul.f32 %v389, %v2300
        %v2311 = vmul.f32 %v390, %v2299
        %v2312 = vmul.f32 %v391, %v2300
        %v2313 = vmul.f32 %v392, %v2299
        %v2314 = vmul.f32 %v393, %v2300
        %v2315 = vadd.f32 %v2285, %v2301
        %v2316 = vadd.f32 %v2286, %v2302
        %v2317 = vadd.f32 %v2287, %v2303
        %v2318 = vadd.f32 %v2288, %v2304
        %v2319 = vadd.f32 %v2289, %v2305
        %v2320 = vadd.f32 %v2290, %v2306
        %v2321 = vadd.f32 %v2291, %v2307
        %v2322 = vadd.f32 %v2292, %v2308
        %v2323 = vadd.f32 %v2293, %v2309
        %v2324 = vadd.f32 %v2294, %v2310
        %v2325 = vadd.f32 %v2295, %v2311
        %v2326 = vadd.f32 %v2296, %v2312
        %v2327 = vadd.f32 %v2297, %v2313
        %v2328 = vadd.f32 %v2298, %v2314
        %v2329 = vperm.slane %v1958, 2
        %v2330 = vperm.slane %v1959, 2
        %v2331 = vmul.f32 %v2246, %v2329
        %v2332 = vmul.f32 %v2247, %v2330
        %v2333 = vmul.f32 %v2248, %v2329
        %v2334 = vmul.f32 %v2249, %v2330
        %v2335 = vmul.f32 %v2250, %v2329
        %v2336 = vmul.f32 %v2251, %v2330
        %v2337 = vmul.f32 %v2252, %v2329
        %v2338 = vmul.f32 %v2253, %v2330
        %v2339 = vmul.f32 %v2254, %v2329
        %v2340 = vmul.f32 %v2255, %v2330
        %v2341 = vmul.f32 %v2256, %v2329
        %v2342 = vmul.f32 %v2257, %v2330
        %v2343 = vmul.f32 %v2258, %v2329
        %v2344 = vmul.f32 %v2259, %v2330
        %v2345 = vadd.f32 %v2315, %v2331
        %v2346 = vadd.f32 %v2316, %v2332
        %v2347 = vadd.f32 %v2317, %v2333
        %v2348 = vadd.f32 %v2318, %v2334
        %v2349 = vadd.f32 %v2319, %v2335
        %v2350 = vadd.f32 %v2320, %v2336
        %v2351 = vadd.f32 %v2321, %v2337
        %v2352 = vadd.f32 %v2322, %v2338
        %v2353 = vadd.f32 %v2323, %v2339
        %v2354 = vadd.f32 %v2324, %v2340
        %v2355 = vadd.f32 %v2325, %v2341
        %v2356 = vadd.f32 %v2326, %v2342
        %v2357 = vadd.f32 %v2327, %v2343
        %v2358 = vadd.f32 %v2328, %v2344
        %v2359 = vadd.f32 %v2267, 0.0
        %v2360 = vadd.f32 %v2268, 0.0
        %v2361 = vadd.f32 %v2269, %v2345
        %v2362 = vadd.f32 %v2270, %v2346
        %v2363 = vadd.f32 %v2271, %v2347
        %v2364 = vadd.f32 %v2272, %v2348
        %v2365 = vadd.f32 %v2273, %v2349
        %v2366 = vadd.f32 %v2274, %v2350
        %v2367 = vadd.f32 %v2275, %v2351
        %v2368 = vadd.f32 %v2276, %v2352
        %v2369 = vadd.f32 %v2277, %v2353
        %v2370 = vadd.f32 %v2278, %v2354
        %v2371 = vadd.f32 %v2279, %v2355
        %v2372 = vadd.f32 %v2280, %v2356
        %v2373 = vadd.f32 %v2281, %v2357
        %v2374 = vadd.f32 %v2282, %v2358
        %v2375 = vperm.slane %v1958, 3
        %v2376 = vperm.slane %v1959, 3
        %v2377 = vmul.f32 %v2165, %v2375
        %v2378 = vmul.f32 %v2166, %v2376
        %v2379 = vmul.f32 %v2167, %v2375
        %v2380 = vmul.f32 %v2168, %v2376
        %v2381 = vmul.f32 %v2169, %v2375
        %v2382 = vmul.f32 %v2170, %v2376
        %v2383 = vmul.f32 %v2171, %v2375
        %v2384 = vmul.f32 %v2172, %v2376
        %v2385 = vmul.f32 %v2173, %v2375
        %v2386 = vmul.f32 %v2174, %v2376
        %v2387 = vmul.f32 %v2175, %v2375
        %v2388 = vmul.f32 %v2176, %v2376
        %v2389 = vmul.f32 %v2177, %v2375
        %v2390 = vmul.f32 %v2178, %v2376
        %v2391 = vmul.f32 %v2179, %v2375
        %v2392 = vmul.f32 %v2180, %v2376
        %v2393 = vperm.slane %v1958, 4
        %v2394 = vperm.slane %v1959, 4
        %v2395 = vmul.f32 %v380, %v2393
        %v2396 = vmul.f32 %v381, %v2394
        %v2397 = vmul.f32 %v382, %v2393
        %v2398 = vmul.f32 %v383, %v2394
        %v2399 = vmul.f32 %v384, %v2393
        %v2400 = vmul.f32 %v385, %v2394
        %v2401 = vmul.f32 %v386, %v2393
        %v2402 = vmul.f32 %v387, %v2394
        %v2403 = vmul.f32 %v388, %v2393
        %v2404 = vmul.f32 %v389, %v2394
        %v2405 = vmul.f32 %v390, %v2393
        %v2406 = vmul.f32 %v391, %v2394
        %v2407 = vmul.f32 %v392, %v2393
        %v2408 = vmul.f32 %v393, %v2394
        %v2409 = vmul.f32 %v394, %v2393
        %v2410 = vmul.f32 %v395, %v2394
        %v2411 = vadd.f32 %v2377, %v2395
        %v2412 = vadd.f32 %v2378, %v2396
        %v2413 = vadd.f32 %v2379, %v2397
        %v2414 = vadd.f32 %v2380, %v2398
        %v2415 = vadd.f32 %v2381, %v2399
        %v2416 = vadd.f32 %v2382, %v2400
        %v2417 = vadd.f32 %v2383, %v2401
        %v2418 = vadd.f32 %v2384, %v2402
        %v2419 = vadd.f32 %v2385, %v2403
        %v2420 = vadd.f32 %v2386, %v2404
        %v2421 = vadd.f32 %v2387, %v2405
        %v2422 = vadd.f32 %v2388, %v2406
        %v2423 = vadd.f32 %v2389, %v2407
        %v2424 = vadd.f32 %v2390, %v2408
        %v2425 = vadd.f32 %v2391, %v2409
        %v2426 = vadd.f32 %v2392, %v2410
        %v2427 = vperm.slane %v1958, 5
        %v2428 = vperm.slane %v1959, 5
        %v2429 = vmul.f32 %v2246, %v2427
        %v2430 = vmul.f32 %v2247, %v2428
        %v2431 = vmul.f32 %v2248, %v2427
        %v2432 = vmul.f32 %v2249, %v2428
        %v2433 = vmul.f32 %v2250, %v2427
        %v2434 = vmul.f32 %v2251, %v2428
        %v2435 = vmul.f32 %v2252, %v2427
        %v2436 = vmul.f32 %v2253, %v2428
        %v2437 = vmul.f32 %v2254, %v2427
        %v2438 = vmul.f32 %v2255, %v2428
        %v2439 = vmul.f32 %v2256, %v2427
        %v2440 = vmul.f32 %v2257, %v2428
        %v2441 = vmul.f32 %v2258, %v2427
        %v2442 = vmul.f32 %v2259, %v2428
        %v2443 = vmul.f32 %v2260, %v2427
        %v2444 = vmul.f32 %v2261, %v2428
        %v2445 = vadd.f32 %v2411, %v2429
        %v2446 = vadd.f32 %v2412, %v2430
        %v2447 = vadd.f32 %v2413, %v2431
        %v2448 = vadd.f32 %v2414, %v2432
        %v2449 = vadd.f32 %v2415, %v2433
        %v2450 = vadd.f32 %v2416, %v2434
        %v2451 = vadd.f32 %v2417, %v2435
        %v2452 = vadd.f32 %v2418, %v2436
        %v2453 = vadd.f32 %v2419, %v2437
        %v2454 = vadd.f32 %v2420, %v2438
        %v2455 = vadd.f32 %v2421, %v2439
        %v2456 = vadd.f32 %v2422, %v2440
        %v2457 = vadd.f32 %v2423, %v2441
        %v2458 = vadd.f32 %v2424, %v2442
        %v2459 = vadd.f32 %v2425, %v2443
        %v2460 = vadd.f32 %v2426, %v2444
        %v2461 = vadd.f32 %v2359, %v2445
        %v2462 = vadd.f32 %v2360, %v2446
        %v2463 = vadd.f32 %v2361, %v2447
        %v2464 = vadd.f32 %v2362, %v2448
        %v2465 = vadd.f32 %v2363, %v2449
        %v2466 = vadd.f32 %v2364, %v2450
        %v2467 = vadd.f32 %v2365, %v2451
        %v2468 = vadd.f32 %v2366, %v2452
        %v2469 = vadd.f32 %v2367, %v2453
        %v2470 = vadd.f32 %v2368, %v2454
        %v2471 = vadd.f32 %v2369, %v2455
        %v2472 = vadd.f32 %v2370, %v2456
        %v2473 = vadd.f32 %v2371, %v2457
        %v2474 = vadd.f32 %v2372, %v2458
        %v2475 = vadd.f32 %v2373, %v2459
        %v2476 = vadd.f32 %v2374, %v2460
        %v2477 = vperm.slane %v1958, 6
        %v2478 = vperm.slane %v1959, 6
        %v2479 = vmul.f32 %v2167, %v2477
        %v2480 = vmul.f32 %v2168, %v2478
        %v2481 = vmul.f32 %v2169, %v2477
        %v2482 = vmul.f32 %v2170, %v2478
        %v2483 = vmul.f32 %v2171, %v2477
        %v2484 = vmul.f32 %v2172, %v2478
        %v2485 = vmul.f32 %v2173, %v2477
        %v2486 = vmul.f32 %v2174, %v2478
        %v2487 = vmul.f32 %v2175, %v2477
        %v2488 = vmul.f32 %v2176, %v2478
        %v2489 = vmul.f32 %v2177, %v2477
        %v2490 = vmul.f32 %v2178, %v2478
        %v2491 = vmul.f32 %v2179, %v2477
        %v2492 = vmul.f32 %v2180, %v2478
        %v2493 = vperm.slane %v1958, 7
        %v2494 = vperm.slane %v1959, 7
        %v2495 = vmul.f32 %v382, %v2493
        %v2496 = vmul.f32 %v383, %v2494
        %v2497 = vmul.f32 %v384, %v2493
        %v2498 = vmul.f32 %v385, %v2494
        %v2499 = vmul.f32 %v386, %v2493
        %v2500 = vmul.f32 %v387, %v2494
        %v2501 = vmul.f32 %v388, %v2493
        %v2502 = vmul.f32 %v389, %v2494
        %v2503 = vmul.f32 %v390, %v2493
        %v2504 = vmul.f32 %v391, %v2494
        %v2505 = vmul.f32 %v392, %v2493
        %v2506 = vmul.f32 %v393, %v2494
        %v2507 = vmul.f32 %v394, %v2493
        %v2508 = vmul.f32 %v395, %v2494
        %v2509 = vadd.f32 %v2479, %v2495
        %v2510 = vadd.f32 %v2480, %v2496
        %v2511 = vadd.f32 %v2481, %v2497
        %v2512 = vadd.f32 %v2482, %v2498
        %v2513 = vadd.f32 %v2483, %v2499
        %v2514 = vadd.f32 %v2484, %v2500
        %v2515 = vadd.f32 %v2485, %v2501
        %v2516 = vadd.f32 %v2486, %v2502
        %v2517 = vadd.f32 %v2487, %v2503
        %v2518 = vadd.f32 %v2488, %v2504
        %v2519 = vadd.f32 %v2489, %v2505
        %v2520 = vadd.f32 %v2490, %v2506
        %v2521 = vadd.f32 %v2491, %v2507
        %v2522 = vadd.f32 %v2492, %v2508
        %v2523 = vperm.slane %v1960, 0
        %v2524 = vperm.slane %v1961, 0
        %v2525 = vmul.f32 %v2248, %v2523
        %v2526 = vmul.f32 %v2249, %v2524
        %v2527 = vmul.f32 %v2250, %v2523
        %v2528 = vmul.f32 %v2251, %v2524
        %v2529 = vmul.f32 %v2252, %v2523
        %v2530 = vmul.f32 %v2253, %v2524
        %v2531 = vmul.f32 %v2254, %v2523
        %v2532 = vmul.f32 %v2255, %v2524
        %v2533 = vmul.f32 %v2256, %v2523
        %v2534 = vmul.f32 %v2257, %v2524
        %v2535 = vmul.f32 %v2258, %v2523
        %v2536 = vmul.f32 %v2259, %v2524
        %v2537 = vmul.f32 %v2260, %v2523
        %v2538 = vmul.f32 %v2261, %v2524
        %v2539 = vadd.f32 %v2509, %v2525
        %v2540 = vadd.f32 %v2510, %v2526
        %v2541 = vadd.f32 %v2511, %v2527
        %v2542 = vadd.f32 %v2512, %v2528
        %v2543 = vadd.f32 %v2513, %v2529
        %v2544 = vadd.f32 %v2514, %v2530
        %v2545 = vadd.f32 %v2515, %v2531
        %v2546 = vadd.f32 %v2516, %v2532
        %v2547 = vadd.f32 %v2517, %v2533
        %v2548 = vadd.f32 %v2518, %v2534
        %v2549 = vadd.f32 %v2519, %v2535
        %v2550 = vadd.f32 %v2520, %v2536
        %v2551 = vadd.f32 %v2521, %v2537
        %v2552 = vadd.f32 %v2522, %v2538
        %v2553 = vadd.f32 %v2461, %v2539
        %v2554 = vadd.f32 %v2462, %v2540
        %v2555 = vadd.f32 %v2463, %v2541
        %v2556 = vadd.f32 %v2464, %v2542
        %v2557 = vadd.f32 %v2465, %v2543
        %v2558 = vadd.f32 %v2466, %v2544
        %v2559 = vadd.f32 %v2467, %v2545
        %v2560 = vadd.f32 %v2468, %v2546
        %v2561 = vadd.f32 %v2469, %v2547
        %v2562 = vadd.f32 %v2470, %v2548
        %v2563 = vadd.f32 %v2471, %v2549
        %v2564 = vadd.f32 %v2472, %v2550
        %v2565 = vadd.f32 %v2473, %v2551
        %v2566 = vadd.f32 %v2474, %v2552
        %v2567 = vadd.f32 %v2475, 0.0
        %v2568 = vadd.f32 %v2476, 0.0
        %2569 = vst [vmem:[%s379] sm:$0xff] %v2553
        %2570 = vst [vmem:[%s379 + $0x8] sm:$0xff] %v2554
        %2571 = vst [vmem:[%s379 + $0x10] sm:$0xff] %v2555
        %2572 = vst [vmem:[%s379 + $0x18] sm:$0xff] %v2556
        %2573 = vst [vmem:[%s379 + $0x20] sm:$0xff] %v2557
        %2574 = vst [vmem:[%s379 + $0x28] sm:$0xff] %v2558
        %2575 = vst [vmem:[%s379 + $0x30] sm:$0xff] %v2559
        %2576 = vst [vmem:[%s379 + $0x38] sm:$0xff] %v2560
        %2577 = vst [vmem:[%s379 + $0x40] sm:$0xff] %v2561
        %2578 = vst [vmem:[%s379 + $0x48] sm:$0xff] %v2562
        %2579 = vst [vmem:[%s379 + $0x50] sm:$0xff] %v2563
        %2580 = vst [vmem:[%s379 + $0x58] sm:$0xff] %v2564
        %2581 = vst [vmem:[%s379 + $0x60] sm:$0xff] %v2565
        %2582 = vst [vmem:[%s379 + $0x68] sm:$0xff] %v2566
        %2583 = vst [vmem:[%s379 + $0x70] sm:$0xff] %v2567
        %2584 = vst [vmem:[%s379 + $0x78] sm:$0xff] %v2568
        %s2585 = sand.u32 %s187, 1
        %s2586 = scalar_lea.sflag [#allocation4], %s2585
        %s2587 = sand.u32 %s187, 1
        %s2588 = smul.addr %s2587, 128
        %s2589 = scalar_lea.vmem [#allocation13], %s2588
        // Predicated region
        $region73: #{tpu_custom_call.1} parent=47 // pred_check
          %p2590 = pneg %p197
        $region74: #{tpu_custom_call.1} parent=47 // pred_check_branch
          %2592 = sbr.rel (%p2590) target = $region76
        $region75: #{tpu_custom_call.1} parent=47 // pred_region
          %2594 = vsyncadd %s2586, 0
          %s2595 = smul.addr %s27, 16
          %s2596 = smul.addr %s2595, 8
          %s2597 = scalar_lea.hbm %s7, %s2596
          %s2598 = sshll.u32 %s2589, 4
          %s2599 = int_to_ptr.vmem [resolvable:$true] %s2598
          %s2600 = sshll.u32 %s2597, 4
          %s2601 = int_to_ptr.hbm [resolvable:$true] %s2600
          %2606 = dma.vmem_to_hbm [thread:$0]  %s2599, 2048, %s2601, %s2586, 256, 256, 16
        $region76: #{tpu_custom_call.1} parent=47 // pred_fallthru
          _
      $region48: #{tpu_custom_call.1} parent=5 // pred_fallthru
        _
      %p2607 = scmp.le.s32.totalorder 2, %s22
      // Predicated region
      $region77: #{tpu_custom_call.1} parent=5 // pred_check
        %p2608 = pneg %p2607
      $region78: #{tpu_custom_call.1} parent=5 // pred_check_branch
        %2610 = sbr.rel (%p2608) target = $region80
      $region79: #{tpu_custom_call.1} parent=5 // pred_region
        %s2611 = ssub.s32 %s22, 2
        // Predicated region
        $region81: #{tpu_custom_call.1} parent=79 // pred_check
          %p2612 = pneg %p203
        $region82: #{tpu_custom_call.1} parent=79 // pred_check_branch
          %2614 = sbr.rel (%p2612) target = $region84
        $region83: #{tpu_custom_call.1} parent=79 // pred_region
          %s2615 = sand.u32 %s188, 1
          %s2616 = scalar_lea.sflag [#allocation4], %s2615
          %s2617 = sand.u32 %s188, 1
          %s2618 = smul.addr %s2617, 128
          %s2619 = scalar_lea.vmem [#allocation13], %s2618
          %2621 = dma.done %s2616, 2048
        $region84: #{tpu_custom_call.1} parent=79 // pred_fallthru
          _
      $region80: #{tpu_custom_call.1} parent=5 // pred_fallthru
        _
    $region6: #{tpu_custom_call.1} parent=1 // loop_footer
      %s26 = sadd.s32 1, %s22
    $region7: #{tpu_custom_call.1} parent=1 // loop_footer_branch
      %21 = sbr.rel target = $region3
    $region8: #{tpu_custom_call.1} parent=1 // loop_exit
      _
    %2622 = vsyncpa [#allocation3], 1
    %s2623 = scalar_lea.sflag [#allocation3], 1
    %2624 = vsyncpa %s2623, 1
    %2625 = vsyncpa [#allocation6], 1
    %2626 = vsyncpa [#allocation9], 1
    %2627 = vsyncpa [#allocation12], 1
    %2628 = vsyncpa [#allocation4], 1
    %s2629 = scalar_lea.sflag [#allocation4], 1
    %2630 = vsyncpa %s2629, 1

// kernel: tpu_custom_call.1
$region0: #{tpu_custom_call.1}
  #allocation0 [shape = 'u32[]', space=smem, size = 0x4, offset = 0x4, fixed_abs, tag = 'smem constant byte address 0x4 - core index']
  #allocation1 [shape = 'u32[72,128]{1,0:T(1,128)}', space=vmem, size = 0x9000, scoped, tag = 'internal scratch']
  %s0 = inlined_call_operand.hbm [shape: f32[2,64,256], index: 0, kind: input, shape index: {}]
  %s1 = inlined_call_operand.hbm [shape: f32[256,512], index: 1, kind: input, shape index: {}]
  %s2 = inlined_call_operand.hbm [shape: f32[1,512], index: 2, kind: input, shape index: {}]
  %s3 = inlined_call_operand.hbm [shape: f32[64,256], index: 3, kind: input, shape index: {}]
  %s4 = inlined_call_operand.hbm [shape: f32[64,256], index: 4, kind: input, shape index: {}]
  %s5 = inlined_call_operand.hbm [shape: f32[9,256], index: 5, kind: input, shape index: {}]
  %s6 = inlined_call_operand.vmem [shape: f32[1,256], index: 6, kind: input, shape index: {}]
  %s7 = inlined_call_operand.hbm [shape: f32[2,64,256], index: 7, kind: output, shape index: {}]
  %s8 = sld [smem:[#allocation0]]
  $region85: #{tpu_custom_call.1} parent=0
    _
  %s10 = ssub.s32 1, %s8
  %s11 = scalar_select 0, %s10, %s8
  $region1: #{tpu_custom_call.1} parent=0
    #allocation2 [shape = 'u8[131072]{0}', space=vmem, size = 0x20000, scoped, tag = 'input window, operand 0']
    #allocation3 [shape = 's32[2]{0}', space=sflag, size = 0x8, scoped, tag = 'scoped memory for tpu_custom_call.1']
    #allocation4 [shape = 's32[2]{0}', space=sflag, size = 0x8, scoped, tag = 'scoped memory for tpu_custom_call.1']
    #allocation5 [shape = 'u8[524288]{0}', space=vmem, size = 0x80000, scoped, tag = 'input window, operand 1, single buffered']
    #allocation6 [shape = 's32[1]{0}', space=sflag, size = 0x4, scoped, tag = 'scoped memory for tpu_custom_call.1']
    #allocation7 [shape = 'u8[2048]{0}', space=vmem, size = 0x800, scoped, tag = 'input window, operand 2, single buffered']
    #allocation8 [shape = 'u8[65536]{0}', space=vmem, size = 0x10000, scoped, tag = 'input window, operand 3, single buffered']
    #allocation9 [shape = 's32[1]{0}', space=sflag, size = 0x4, scoped, tag = 'scoped memory for tpu_custom_call.1']
    #allocation10 [shape = 'u8[65536]{0}', space=vmem, size = 0x10000, scoped, tag = 'input window, operand 4, single buffered']
    #allocation11 [shape = 'u8[16384]{0}', space=vmem, size = 0x4000, scoped, tag = 'input window, operand 5, single buffered']
    #allocation12 [shape = 's32[1]{0}', space=sflag, size = 0x4, scoped, tag = 'scoped memory for tpu_custom_call.1']
    #allocation13 [shape = 'u8[131072]{0}', space=vmem, size = 0x20000, scoped, tag = 'output window, operand 0']
    %12 = vsyncpa [#allocation3], 0
    %s13 = scalar_lea.sflag [#allocation3], 1
    %14 = vsyncpa %s13, 0
    %15 = vsyncpa [#allocation6], 0
    %16 = vsyncpa [#allocation9], 0
    %17 = vsyncpa [#allocation12], 0
    %18 = vsyncpa [#allocation4], 0
    %s19 = scalar_lea.sflag [#allocation4], 1
    %20 = vsyncpa %s19, 0
    loop: start=0, step=1, limit=4
    $region2: #{tpu_custom_call.1} parent=1 // loop_pre_header
      _
    $region3: #{tpu_custom_call.1} parent=1 // loop_header
      %s22 = sphi 0, %s26
      %p23 = scmp.ge.s32.totalorder %s22, 4
      %s32 = sphi 0, %s34
      %s35 = sphi 0, %s32
      %s36 = sphi 0, %s35
      %s52 = sphi 0, %s36
      %s56 = sphi 0, %s56
      %s58 = sphi 0, %s56
      %s59 = sphi 0, %s58
      %s73 = sphi 0, %s59
      %s77 = sphi 0, %s77
      %s79 = sphi 0, %s77
      %s80 = sphi 0, %s79
      %s94 = sphi 0, %s80
      %s98 = sphi 0, %s98
      %s100 = sphi 0, %s98
      %s101 = sphi 0, %s100
      %s115 = sphi 0, %s101
      %s119 = sphi 0, %s119
      %s121 = sphi 0, %s119
      %s122 = sphi 0, %s121
      %s136 = sphi 0, %s122
      %s140 = sphi 0, %s140
      %s142 = sphi 0, %s140
      %s143 = sphi 0, %s142
      %s157 = sphi 0, %s143
      %s161 = sphi 0, %s161
      %s163 = sphi 0, %s161
      %s164 = sphi 0, %s163
      %s178 = sphi 0, %s164
      %s184 = sphi 0, %s186
      %s187 = sphi 0, %s184
      %s188 = sphi 0, %s187
      %s204 = sphi 0, %s188
    $region4: #{tpu_custom_call.1} parent=1 // loop_header_branch
      %25 = sbr.rel (%p23) target = $region8
    $region5: #{tpu_custom_call.1} parent=1 // loop_body
      %s27 = ssub.s32 %s22, 1
      %s28 = ssub.s32 %s22, 2
      %s29 = sadd.s32 %s22, 1
      %s30 = ssub.s32 %s22, %s29
      %p31 = scmp.eq.s32.totalorder %s30, 0
      %s33 = sadd.s32 %s32, 1
      %s34 = scalar_select %p31, %s32, %s33
      %p37 = pneg %p31
      %p38 = scmp.eq.s32.totalorder %s22, 1
      %p39 = por %p37, %p38
      %p40 = scmp.ne.s32.totalorder %s32, %s35
      %p41 = scmp.eq.s32.totalorder %s22, 0
      %p42 = por %p40, %p41
      %p43 = scmp.ne.s32.totalorder %s32, %s35
      %p44 = scmp.eq.s32.totalorder %s27, 1
      %p45 = por %p43, %p44
      %p46 = scmp.ne.s32.totalorder %s35, %s36
      %p47 = scmp.eq.s32.totalorder %s27, 0
      %p48 = por %p46, %p47
      %p49 = scmp.ne.s32.totalorder %s35, %s36
      %p50 = scmp.eq.s32.totalorder %s28, 1
      %p51 = por %p49, %p50
      %p53 = scmp.ne.s32.totalorder %s36, %s52
      %p54 = scmp.eq.s32.totalorder %s28, 0
      %p55 = por %p53, %p54
      %s57 = sadd.s32 %s56, 1
      %p60 = scmp.eq.s32.totalorder %s22, 1
      %p61 = scmp.ne.s32.totalorder %s56, %s58
      %p62 = scmp.eq.s32.totalorder %s22, 0
      %p63 = por %p61, %p62
      %p64 = scmp.ne.s32.totalorder %s56, %s58
      %p65 = scmp.eq.s32.totalorder %s27, 1
      %p66 = por %p64, %p65
      %p67 = scmp.ne.s32.totalorder %s58, %s59
      %p68 = scmp.eq.s32.totalorder %s27, 0
      %p69 = por %p67, %p68
      %p70 = scmp.ne.s32.totalorder %s58, %s59
      %p71 = scmp.eq.s32.totalorder %s28, 1
      %p72 = por %p70, %p71
      %p74 = scmp.ne.s32.totalorder %s59, %s73
      %p75 = scmp.eq.s32.totalorder %s28, 0
      %p76 = por %p74, %p75
      %s78 = sadd.s32 %s77, 1
      %p81 = scmp.eq.s32.totalorder %s22, 1
      %p82 = scmp.ne.s32.totalorder %s77, %s79
      %p83 = scmp.eq.s32.totalorder %s22, 0
      %p84 = por %p82, %p83
      %p85 = scmp.ne.s32.totalorder %s77, %s79
      %p86 = scmp.eq.s32.totalorder %s27, 1
      %p87 = por %p85, %p86
      %p88 = scmp.ne.s32.totalorder %s79, %s80
      %p89 = scmp.eq.s32.totalorder %s27, 0
      %p90 = por %p88, %p89
      %p91 = scmp.ne.s32.totalorder %s79, %s80
      %p92 = scmp.eq.s32.totalorder %s28, 1
      %p93 = por %p91, %p92
      %p95 = scmp.ne.s32.totalorder %s80, %s94
      %p96 = scmp.eq.s32.totalorder %s28, 0
      %p97 = por %p95, %p96
      %s99 = sadd.s32 %s98, 1
      %p102 = scmp.eq.s32.totalorder %s22, 1
      %p103 = scmp.ne.s32.totalorder %s98, %s100
      %p104 = scmp.eq.s32.totalorder %s22, 0
      %p105 = por %p103, %p104
      %p106 = scmp.ne.s32.totalorder %s98, %s100
      %p107 = scmp.eq.s32.totalorder %s27, 1
      %p108 = por %p106, %p107
      %p109 = scmp.ne.s32.totalorder %s100, %s101
      %p110 = scmp.eq.s32.totalorder %s27, 0
      %p111 = por %p109, %p110
      %p112 = scmp.ne.s32.totalorder %s100, %s101
      %p113 = scmp.eq.s32.totalorder %s28, 1
      %p114 = por %p112, %p113
      %p116 = scmp.ne.s32.totalorder %s101, %s115
      %p117 = scmp.eq.s32.totalorder %s28, 0
      %p118 = por %p116, %p117
      %s120 = sadd.s32 %s119, 1
      %p123 = scmp.eq.s32.totalorder %s22, 1
      %p124 = scmp.ne.s32.totalorder %s119, %s121
      %p125 = scmp.eq.s32.totalorder %s22, 0
      %p126 = por %p124, %p125
      %p127 = scmp.ne.s32.totalorder %s119, %s121
      %p128 = scmp.eq.s32.totalorder %s27, 1
      %p129 = por %p127, %p128
      %p130 = scmp.ne.s32.totalorder %s121, %s122
      %p131 = scmp.eq.s32.totalorder %s27, 0
      %p132 = por %p130, %p131
      %p133 = scmp.ne.s32.totalorder %s121, %s122
      %p134 = scmp.eq.s32.totalorder %s28, 1
      %p135 = por %p133, %p134
      %p137 = scmp.ne.s32.totalorder %s122, %s136
      %p138 = scmp.eq.s32.totalorder %s28, 0
      %p139 = por %p137, %p138
      %s141 = sadd.s32 %s140, 1
      %p144 = scmp.eq.s32.totalorder %s22, 1
      %p145 = scmp.ne.s32.totalorder %s140, %s142
      %p146 = scmp.eq.s32.totalorder %s22, 0
      %p147 = por %p145, %p146
      %p148 = scmp.ne.s32.totalorder %s140, %s142
      %p149 = scmp.eq.s32.totalorder %s27, 1
      %p150 = por %p148, %p149
      %p151 = scmp.ne.s32.totalorder %s142, %s143
      %p152 = scmp.eq.s32.totalorder %s27, 0
      %p153 = por %p151, %p152
      %p154 = scmp.ne.s32.totalorder %s142, %s143
      %p155 = scmp.eq.s32.totalorder %s28, 1
      %p156 = por %p154, %p155
      %p158 = scmp.ne.s32.totalorder %s143, %s157
      %p159 = scmp.eq.s32.totalorder %s28, 0
      %p160 = por %p158, %p159
      %s162 = sadd.s32 %s161, 1
      %p165 = scmp.eq.s32.totalorder %s22, 1
      %p166 = scmp.ne.s32.totalorder %s161, %s163
      %p167 = scmp.eq.s32.totalorder %s22, 0
      %p168 = por %p166, %p167
      %p169 = scmp.ne.s32.totalorder %s161, %s163
      %p170 = scmp.eq.s32.totalorder %s27, 1
      %p171 = por %p169, %p170
      %p172 = scmp.ne.s32.totalorder %s163, %s164
      %p173 = scmp.eq.s32.totalorder %s27, 0
      %p174 = por %p172, %p173
      %p175 = scmp.ne.s32.totalorder %s163, %s164
      %p176 = scmp.eq.s32.totalorder %s28, 1
      %p177 = por %p175, %p176
      %p179 = scmp.ne.s32.totalorder %s164, %s178
      %p180 = scmp.eq.s32.totalorder %s28, 0
      %p181 = por %p179, %p180
      %s182 = ssub.s32 %s22, %s29
      %p183 = scmp.eq.s32.totalorder %s182, 0
      %s185 = sadd.s32 %s184, 1
      %s186 = scalar_select %p183, %s184, %s185
      %p189 = pneg %p183
      %p190 = scmp.eq.s32.totalorder %s22, 1
      %p191 = por %p189, %p190
      %p192 = scmp.ne.s32.totalorder %s184, %s187
      %p193 = scmp.eq.s32.totalorder %s22, 0
      %p194 = por %p192, %p193
      %p195 = scmp.ne.s32.totalorder %s184, %s187
      %p196 = scmp.eq.s32.totalorder %s27, 1
      %p197 = por %p195, %p196
      %p198 = scmp.ne.s32.totalorder %s187, %s188
      %p199 = scmp.eq.s32.totalorder %s27, 0
      %p200 = por %p198, %p199
      %p201 = scmp.ne.s32.totalorder %s187, %s188
      %p202 = scmp.eq.s32.totalorder %s28, 1
      %p203 = por %p201, %p202
      %p205 = scmp.ne.s32.totalorder %s188, %s204
      %p206 = scmp.eq.s32.totalorder %s28, 0
      %p207 = por %p205, %p206
      %p208 = scmp.le.s32.totalorder 1, %s22
      %p209 = scmp.lt.s32.totalorder %s22, 3
      %p210 = pnand %p208, %p209
      %p211 = pneg %p210
      // Predicated region
      $region9: #{tpu_custom_call.1} parent=5 // pred_check
        _
      $region10: #{tpu_custom_call.1} parent=5 // pred_check_branch
        %213 = sbr.rel (%p210) target = $region12
      $region11: #{tpu_custom_call.1} parent=5 // pred_region
        %s214 = ssub.s32 %s22, 1
        // Predicated region
        $region13: #{tpu_custom_call.1} parent=11 // pred_check
          %p215 = pneg %p69
        $region14: #{tpu_custom_call.1} parent=11 // pred_check_branch
          %217 = sbr.rel (%p215) target = $region16
        $region15: #{tpu_custom_call.1} parent=11 // pred_region
          %219 = vsyncadd [#allocation6], 0
          %s220 = sshll.u32 %s1, 4
          %s221 = int_to_ptr.hbm [resolvable:$true] %s220
          %s222 = sshll.u32 [#allocation5], 4
          %s223 = int_to_ptr.vmem [resolvable:$true] %s222
          %228 = dma.hbm_to_vmem [thread:$0]  %s221, 16384, %s223, [#allocation6], 512, 512, 32
        $region16: #{tpu_custom_call.1} parent=11 // pred_fallthru
          _
        // Predicated region
        $region17: #{tpu_custom_call.1} parent=11 // pred_check
          %p229 = pneg %p90
        $region18: #{tpu_custom_call.1} parent=11 // pred_check_branch
          %231 = sbr.rel (%p229) target = $region20
        $region19: #{tpu_custom_call.1} parent=11 // pred_region
          %233 = vsyncadd [#allocation6], 0
          %s235 = sshll.u32 %s2, 4
          %s236 = int_to_ptr.hbm [resolvable:$true] %s235
          %s237 = sshll.u32 [#allocation7], 4
          %s238 = int_to_ptr.vmem [resolvable:$true] %s237
          %240 = dma.hbm_to_vmem [thread:$0]  %s236, 64, %s238, [#allocation6]
        $region20: #{tpu_custom_call.1} parent=11 // pred_fallthru
          _
        // Predicated region
        $region21: #{tpu_custom_call.1} parent=11 // pred_check
          %p241 = pneg %p111
        $region22: #{tpu_custom_call.1} parent=11 // pred_check_branch
          %243 = sbr.rel (%p241) target = $region24
        $region23: #{tpu_custom_call.1} parent=11 // pred_region
          %245 = vsyncadd [#allocation9], 0
          %s246 = sshll.u32 %s3, 4
          %s247 = int_to_ptr.hbm [resolvable:$true] %s246
          %s248 = sshll.u32 [#allocation8], 4
          %s249 = int_to_ptr.vmem [resolvable:$true] %s248
          %254 = dma.hbm_to_vmem [thread:$0]  %s247, 2048, %s249, [#allocation9], 256, 256, 16
        $region24: #{tpu_custom_call.1} parent=11 // pred_fallthru
          _
        // Predicated region
        $region25: #{tpu_custom_call.1} parent=11 // pred_check
          %p255 = pneg %p132
        $region26: #{tpu_custom_call.1} parent=11 // pred_check_branch
          %257 = sbr.rel (%p255) target = $region28
        $region27: #{tpu_custom_call.1} parent=11 // pred_region
          %259 = vsyncadd [#allocation9], 0
          %s260 = sshll.u32 %s4, 4
          %s261 = int_to_ptr.hbm [resolvable:$true] %s260
          %s262 = sshll.u32 [#allocation10], 4
          %s263 = int_to_ptr.vmem [resolvable:$true] %s262
          %268 = dma.hbm_to_vmem [thread:$0]  %s261, 2048, %s263, [#allocation9], 256, 256, 16
        $region28: #{tpu_custom_call.1} parent=11 // pred_fallthru
          _
        // Predicated region
        $region29: #{tpu_custom_call.1} parent=11 // pred_check
          %p269 = pneg %p153
        $region30: #{tpu_custom_call.1} parent=11 // pred_check_branch
          %271 = sbr.rel (%p269) target = $region32
        $region31: #{tpu_custom_call.1} parent=11 // pred_region
          %273 = vsyncadd [#allocation12], 0
          %s274 = sshll.u32 %s5, 4
          %s275 = int_to_ptr.hbm [resolvable:$true] %s274
          %s276 = sshll.u32 [#allocation11], 4
          %s277 = int_to_ptr.vmem [resolvable:$true] %s276
          %282 = dma.hbm_to_vmem [thread:$0]  %s275, 512, %s277, [#allocation12], 256, 256, 16
        $region32: #{tpu_custom_call.1} parent=11 // pred_fallthru
          _
        // Predicated region
        $region33: #{tpu_custom_call.1} parent=11 // pred_check
          %p283 = pneg %p174
        $region34: #{tpu_custom_call.1} parent=11 // pred_check_branch
          %285 = sbr.rel (%p283) target = $region36
        $region35: #{tpu_custom_call.1} parent=11 // pred_region
          _
        $region36: #{tpu_custom_call.1} parent=11 // pred_fallthru
          _
      $region12: #{tpu_custom_call.1} parent=5 // pred_fallthru
        _
      %p286 = scmp.lt.s32.totalorder %s22, 2
      // Predicated region
      $region37: #{tpu_custom_call.1} parent=5 // pred_check
        %p287 = pneg %p286
      $region38: #{tpu_custom_call.1} parent=5 // pred_check_branch
        %289 = sbr.rel (%p287) target = $region40
      $region39: #{tpu_custom_call.1} parent=5 // pred_region
        // Predicated region
        $region41: #{tpu_custom_call.1} parent=39 // pred_check
          %p290 = pneg %p42
        $region42: #{tpu_custom_call.1} parent=39 // pred_check_branch
          %292 = sbr.rel (%p290) target = $region44
        $region43: #{tpu_custom_call.1} parent=39 // pred_region
          %s293 = sand.u32 %s32, 1
          %s294 = scalar_lea.sflag [#allocation3], %s293
          %s295 = sand.u32 %s32, 1
          %s296 = smul.addr %s295, 128
          %s297 = scalar_lea.vmem [#allocation2], %s296
          %299 = vsyncadd %s294, 0
          %s300 = smul.addr %s22, 16
          %s301 = smul.addr %s300, 8
          %s302 = scalar_lea.hbm %s0, %s301
          %s303 = sshll.u32 %s302, 4
          %s304 = int_to_ptr.hbm [resolvable:$true] %s303
          %s305 = sshll.u32 %s297, 4
          %s306 = int_to_ptr.vmem [resolvable:$true] %s305
          %311 = dma.hbm_to_vmem [thread:$0]  %s304, 2048, %s306, %s294, 256, 256, 16
        $region44: #{tpu_custom_call.1} parent=39 // pred_fallthru
          _
      $region40: #{tpu_custom_call.1} parent=5 // pred_fallthru
        _
      %p312 = scmp.le.s32.totalorder 1, %s22
      %p313 = scmp.lt.s32.totalorder %s22, 3
      %p314 = pnand %p312, %p313
      %p315 = pneg %p314
      // Predicated region
      $region45: #{tpu_custom_call.1} parent=5 // pred_check
        _
      $region46: #{tpu_custom_call.1} parent=5 // pred_check_branch
        %317 = sbr.rel (%p314) target = $region48
      $region47: #{tpu_custom_call.1} parent=5 // pred_region
        %s318 = ssub.s32 %s22, 1
        %s319 = sand.u32 %s35, 1
        %s320 = scalar_lea.sflag [#allocation3], %s319
        %s321 = sand.u32 %s35, 1
        %s322 = smul.addr %s321, 128
        %s323 = scalar_lea.vmem [#allocation2], %s322
        // Predicated region
        $region49: #{tpu_custom_call.1} parent=47 // pred_check
          %p324 = pneg %p48
        $region50: #{tpu_custom_call.1} parent=47 // pred_check_branch
          %326 = sbr.rel (%p324) target = $region52
        $region51: #{tpu_custom_call.1} parent=47 // pred_region
          %328 = dma.done %s320, 2048
        $region52: #{tpu_custom_call.1} parent=47 // pred_fallthru
          _
        // Predicated region
        $region53: #{tpu_custom_call.1} parent=47 // pred_check
          %p329 = pneg %p69
        $region54: #{tpu_custom_call.1} parent=47 // pred_check_branch
          %331 = sbr.rel (%p329) target = $region56
        $region55: #{tpu_custom_call.1} parent=47 // pred_region
          %333 = dma.done [#allocation6], 16384
        $region56: #{tpu_custom_call.1} parent=47 // pred_fallthru
          _
        // Predicated region
        $region57: #{tpu_custom_call.1} parent=47 // pred_check
          %p334 = pneg %p90
        $region58: #{tpu_custom_call.1} parent=47 // pred_check_branch
          %336 = sbr.rel (%p334) target = $region60
        $region59: #{tpu_custom_call.1} parent=47 // pred_region
          %338 = dma.done [#allocation6], 64
        $region60: #{tpu_custom_call.1} parent=47 // pred_fallthru
          _
        // Predicated region
        $region61: #{tpu_custom_call.1} parent=47 // pred_check
          %p339 = pneg %p111
        $region62: #{tpu_custom_call.1} parent=47 // pred_check_branch
          %341 = sbr.rel (%p339) target = $region64
        $region63: #{tpu_custom_call.1} parent=47 // pred_region
          %343 = dma.done [#allocation9], 2048
        $region64: #{tpu_custom_call.1} parent=47 // pred_fallthru
          _
        // Predicated region
        $region65: #{tpu_custom_call.1} parent=47 // pred_check
          %p344 = pneg %p132
        $region66: #{tpu_custom_call.1} parent=47 // pred_check_branch
          %346 = sbr.rel (%p344) target = $region68
        $region67: #{tpu_custom_call.1} parent=47 // pred_region
          %348 = dma.done [#allocation9], 2048
        $region68: #{tpu_custom_call.1} parent=47 // pred_fallthru
          _
        // Predicated region
        $region69: #{tpu_custom_call.1} parent=47 // pred_check
          %p349 = pneg %p153
        $region70: #{tpu_custom_call.1} parent=47 // pred_check_branch
          %351 = sbr.rel (%p349) target = $region72
        $region71: #{tpu_custom_call.1} parent=47 // pred_region
          %353 = dma.done [#allocation12], 512
        $region72: #{tpu_custom_call.1} parent=47 // pred_fallthru
          _
        %s354 = sand.u32 %s35, 1
        %s355 = scalar_lea.sflag [#allocation3], %s354
        %s356 = sand.u32 %s35, 1
        %s357 = smul.addr %s356, 128
        %s358 = scalar_lea.vmem [#allocation2], %s357
        %p359 = pneg %p48
        %p360 = pneg %p45
        %p361 = pneg %p69
        %p362 = pneg %p66
        %p363 = pneg %p90
        %p364 = pneg %p87
        %p365 = pneg %p111
        %p366 = pneg %p108
        %p367 = pneg %p132
        %p368 = pneg %p129
        %p369 = pneg %p153
        %p370 = pneg %p150
        %p371 = pneg %p174
        %p372 = pneg %p171
        %p373 = pneg %p200
        %p374 = pneg %p197
        %s375 = sand.u32 %s187, 1
        %s376 = scalar_lea.sflag [#allocation4], %s375
        %s377 = sand.u32 %s187, 1
        %s378 = smul.addr %s377, 128
        %s379 = scalar_lea.vmem [#allocation13], %s378
        %v380 = vld [vmem:[%s323] sm:$0xff]
        %v381 = vld [vmem:[%s323 + $0x8] sm:$0xff]
        %v382 = vld [vmem:[%s323 + $0x10] sm:$0xff]
        %v383 = vld [vmem:[%s323 + $0x18] sm:$0xff]
        %v384 = vld [vmem:[%s323 + $0x20] sm:$0xff]
        %v385 = vld [vmem:[%s323 + $0x28] sm:$0xff]
        %v386 = vld [vmem:[%s323 + $0x30] sm:$0xff]
        %v387 = vld [vmem:[%s323 + $0x38] sm:$0xff]
        %v388 = vld [vmem:[%s323 + $0x40] sm:$0xff]
        %v389 = vld [vmem:[%s323 + $0x48] sm:$0xff]
        %v390 = vld [vmem:[%s323 + $0x50] sm:$0xff]
        %v391 = vld [vmem:[%s323 + $0x58] sm:$0xff]
        %v392 = vld [vmem:[%s323 + $0x60] sm:$0xff]
        %v393 = vld [vmem:[%s323 + $0x68] sm:$0xff]
        %v394 = vld [vmem:[%s323 + $0x70] sm:$0xff]
        %v395 = vld [vmem:[%s323 + $0x78] sm:$0xff]
        %v396 = vld [vmem:[#allocation5] sm:$0xff]
        %v397 = vld [vmem:[#allocation5 + $0x8] sm:$0xff]
        %v398 = vld [vmem:[#allocation5 + $0x10] sm:$0xff]
        %v399 = vld [vmem:[#allocation5 + $0x18] sm:$0xff]
        %v400 = vld [vmem:[#allocation5 + $0x20] sm:$0xff]
        %v401 = vld [vmem:[#allocation5 + $0x28] sm:$0xff]
        %v402 = vld [vmem:[#allocation5 + $0x30] sm:$0xff]
        %v403 = vld [vmem:[#allocation5 + $0x38] sm:$0xff]
        %v404 = vld [vmem:[#allocation5 + $0x40] sm:$0xff]
        %v405 = vld [vmem:[#allocation5 + $0x48] sm:$0xff]
        %v406 = vld [vmem:[#allocation5 + $0x50] sm:$0xff]
        %v407 = vld [vmem:[#allocation5 + $0x58] sm:$0xff]
        %v408 = vld [vmem:[#allocation5 + $0x60] sm:$0xff]
        %v409 = vld [vmem:[#allocation5 + $0x68] sm:$0xff]
        %v410 = vld [vmem:[#allocation5 + $0x70] sm:$0xff]
        %v411 = vld [vmem:[#allocation5 + $0x78] sm:$0xff]
        %v412 = vld [vmem:[#allocation5 + $0x80] sm:$0xff]
        %v413 = vld [vmem:[#allocation5 + $0x88] sm:$0xff]
        %v414 = vld [vmem:[#allocation5 + $0x90] sm:$0xff]
        %v415 = vld [vmem:[#allocation5 + $0x98] sm:$0xff]
        %v416 = vld [vmem:[#allocation5 + $0xa0] sm:$0xff]
        %v417 = vld [vmem:[#allocation5 + $0xa8] sm:$0xff]
        %v418 = vld [vmem:[#allocation5 + $0xb0] sm:$0xff]
        %v419 = vld [vmem:[#allocation5 + $0xb8] sm:$0xff]
        %v420 = vld [vmem:[#allocation5 + $0xc0] sm:$0xff]
        %v421 = vld [vmem:[#allocation5 + $0xc8] sm:$0xff]
        %v422 = vld [vmem:[#allocation5 + $0xd0] sm:$0xff]
        %v423 = vld [vmem:[#allocation5 + $0xd8] sm:$0xff]
        %v424 = vld [vmem:[#allocation5 + $0xe0] sm:$0xff]
        %v425 = vld [vmem:[#allocation5 + $0xe8] sm:$0xff]
        %v426 = vld [vmem:[#allocation5 + $0xf0] sm:$0xff]
        %v427 = vld [vmem:[#allocation5 + $0xf8] sm:$0xff]
        %v428 = vld [vmem:[#allocation5 + $0x100] sm:$0xff]
        %v429 = vld [vmem:[#allocation5 + $0x108] sm:$0xff]
        %v430 = vld [vmem:[#allocation5 + $0x110] sm:$0xff]
        %v431 = vld [vmem:[#allocation5 + $0x118] sm:$0xff]
        %v432 = vld [vmem:[#allocation5 + $0x120] sm:$0xff]
        %v433 = vld [vmem:[#allocation5 + $0x128] sm:$0xff]
        %v434 = vld [vmem:[#allocation5 + $0x130] sm:$0xff]
        %v435 = vld [vmem:[#allocation5 + $0x138] sm:$0xff]
        %v436 = vld [vmem:[#allocation5 + $0x140] sm:$0xff]
        %v437 = vld [vmem:[#allocation5 + $0x148] sm:$0xff]
        %v438 = vld [vmem:[#allocation5 + $0x150] sm:$0xff]
        %v439 = vld [vmem:[#allocation5 + $0x158] sm:$0xff]
        %v440 = vld [vmem:[#allocation5 + $0x160] sm:$0xff]
        %v441 = vld [vmem:[#allocation5 + $0x168] sm:$0xff]
        %v442 = vld [vmem:[#allocation5 + $0x170] sm:$0xff]
        %v443 = vld [vmem:[#allocation5 + $0x178] sm:$0xff]
        %v444 = vld [vmem:[#allocation5 + $0x180] sm:$0xff]
        %v445 = vld [vmem:[#allocation5 + $0x188] sm:$0xff]
        %v446 = vld [vmem:[#allocation5 + $0x190] sm:$0xff]
        %v447 = vld [vmem:[#allocation5 + $0x198] sm:$0xff]
        %v448 = vld [vmem:[#allocation5 + $0x1a0] sm:$0xff]
        %v449 = vld [vmem:[#allocation5 + $0x1a8] sm:$0xff]
        %v450 = vld [vmem:[#allocation5 + $0x1b0] sm:$0xff]
        %v451 = vld [vmem:[#allocation5 + $0x1b8] sm:$0xff]
        %v452 = vld [vmem:[#allocation5 + $0x1c0] sm:$0xff]
        %v453 = vld [vmem:[#allocation5 + $0x1c8] sm:$0xff]
        %v454 = vld [vmem:[#allocation5 + $0x1d0] sm:$0xff]
        %v455 = vld [vmem:[#allocation5 + $0x1d8] sm:$0xff]
        %v456 = vld [vmem:[#allocation5 + $0x1e0] sm:$0xff]
        %v457 = vld [vmem:[#allocation5 + $0x1e8] sm:$0xff]
        %v458 = vld [vmem:[#allocation5 + $0x1f0] sm:$0xff]
        %v459 = vld [vmem:[#allocation5 + $0x1f8] sm:$0xff]
        %v460 = vld [vmem:[#allocation5 + $0x200] sm:$0xff]
        %v461 = vld [vmem:[#allocation5 + $0x208] sm:$0xff]
        %v462 = vld [vmem:[#allocation5 + $0x210] sm:$0xff]
        %v463 = vld [vmem:[#allocation5 + $0x218] sm:$0xff]
        %v464 = vld [vmem:[#allocation5 + $0x220] sm:$0xff]
        %v465 = vld [vmem:[#allocation5 + $0x228] sm:$0xff]
        %v466 = vld [vmem:[#allocation5 + $0x230] sm:$0xff]
        %v467 = vld [vmem:[#allocation5 + $0x238] sm:$0xff]
        %v468 = vld [vmem:[#allocation5 + $0x240] sm:$0xff]
        %v469 = vld [vmem:[#allocation5 + $0x248] sm:$0xff]
        %v470 = vld [vmem:[#allocation5 + $0x250] sm:$0xff]
        %v471 = vld [vmem:[#allocation5 + $0x258] sm:$0xff]
        %v472 = vld [vmem:[#allocation5 + $0x260] sm:$0xff]
        %v473 = vld [vmem:[#allocation5 + $0x268] sm:$0xff]
        %v474 = vld [vmem:[#allocation5 + $0x270] sm:$0xff]
        %v475 = vld [vmem:[#allocation5 + $0x278] sm:$0xff]
        %v476 = vld [vmem:[#allocation5 + $0x280] sm:$0xff]
        %v477 = vld [vmem:[#allocation5 + $0x288] sm:$0xff]
        %v478 = vld [vmem:[#allocation5 + $0x290] sm:$0xff]
        %v479 = vld [vmem:[#allocation5 + $0x298] sm:$0xff]
        %v480 = vld [vmem:[#allocation5 + $0x2a0] sm:$0xff]
        %v481 = vld [vmem:[#allocation5 + $0x2a8] sm:$0xff]
        %v482 = vld [vmem:[#allocation5 + $0x2b0] sm:$0xff]
        %v483 = vld [vmem:[#allocation5 + $0x2b8] sm:$0xff]
        %v484 = vld [vmem:[#allocation5 + $0x2c0] sm:$0xff]
        %v485 = vld [vmem:[#allocation5 + $0x2c8] sm:$0xff]
        %v486 = vld [vmem:[#allocation5 + $0x2d0] sm:$0xff]
        %v487 = vld [vmem:[#allocation5 + $0x2d8] sm:$0xff]
        %v488 = vld [vmem:[#allocation5 + $0x2e0] sm:$0xff]
        %v489 = vld [vmem:[#allocation5 + $0x2e8] sm:$0xff]
        %v490 = vld [vmem:[#allocation5 + $0x2f0] sm:$0xff]
        %v491 = vld [vmem:[#allocation5 + $0x2f8] sm:$0xff]
        %v492 = vld [vmem:[#allocation5 + $0x300] sm:$0xff]
        %v493 = vld [vmem:[#allocation5 + $0x308] sm:$0xff]
        %v494 = vld [vmem:[#allocation5 + $0x310] sm:$0xff]
        %v495 = vld [vmem:[#allocation5 + $0x318] sm:$0xff]
        %v496 = vld [vmem:[#allocation5 + $0x320] sm:$0xff]
        %v497 = vld [vmem:[#allocation5 + $0x328] sm:$0xff]
        %v498 = vld [vmem:[#allocation5 + $0x330] sm:$0xff]
        %v499 = vld [vmem:[#allocation5 + $0x338] sm:$0xff]
        %v500 = vld [vmem:[#allocation5 + $0x340] sm:$0xff]
        %v501 = vld [vmem:[#allocation5 + $0x348] sm:$0xff]
        %v502 = vld [vmem:[#allocation5 + $0x350] sm:$0xff]
        %v503 = vld [vmem:[#allocation5 + $0x358] sm:$0xff]
        %v504 = vld [vmem:[#allocation5 + $0x360] sm:$0xff]
        %v505 = vld [vmem:[#allocation5 + $0x368] sm:$0xff]
        %v506 = vld [vmem:[#allocation5 + $0x370] sm:$0xff]
        %v507 = vld [vmem:[#allocation5 + $0x378] sm:$0xff]
        %v508 = vld [vmem:[#allocation5 + $0x380] sm:$0xff]
        %v509 = vld [vmem:[#allocation5 + $0x388] sm:$0xff]
        %v510 = vld [vmem:[#allocation5 + $0x390] sm:$0xff]
        %v511 = vld [vmem:[#allocation5 + $0x398] sm:$0xff]
        %v512 = vld [vmem:[#allocation5 + $0x3a0] sm:$0xff]
        %v513 = vld [vmem:[#allocation5 + $0x3a8] sm:$0xff]
        %v514 = vld [vmem:[#allocation5 + $0x3b0] sm:$0xff]
        %v515 = vld [vmem:[#allocation5 + $0x3b8] sm:$0xff]
        %v516 = vld [vmem:[#allocation5 + $0x3c0] sm:$0xff]
        %v517 = vld [vmem:[#allocation5 + $0x3c8] sm:$0xff]
        %v518 = vld [vmem:[#allocation5 + $0x3d0] sm:$0xff]
        %v519 = vld [vmem:[#allocation5 + $0x3d8] sm:$0xff]
        %v520 = vld [vmem:[#allocation5 + $0x3e0] sm:$0xff]
        %v521 = vld [vmem:[#allocation5 + $0x3e8] sm:$0xff]
        %v522 = vld [vmem:[#allocation5 + $0x3f0] sm:$0xff]
        %v523 = vld [vmem:[#allocation5 + $0x3f8] sm:$0xff]
        %v524 = vld [vmem:[#allocation7] sm:$0xf]
        %v526 = vperm.slane %v524, 0
        %v527 = vperm.slane %v524, 1
        %v528 = vperm.slane %v524, 2
        %v529 = vperm.slane %v524, 3
        %534 = vmatpush.msra.mxu0 %v456
        %535 = vmatpush.msra.mxu0 %v452
        %536 = vmatpush.msra.mxu0 %v448
        %537 = vmatpush.msra.mxu0 %v444
        %538 = vmatpush.msra.mxu0 %v440
        %539 = vmatpush.msra.mxu0 %v436
        %540 = vmatpush.msra.mxu0 %v432
        %541 = vmatpush.msra.mxu0 %v428
        %542 = vmatpush.msra.mxu0 %v424
        %543 = vmatpush.msra.mxu0 %v420
        %544 = vmatpush.msra.mxu0 %v416
        %545 = vmatpush.msra.mxu0 %v412
        %546 = vmatpush.msra.mxu0 %v408
        %547 = vmatpush.msra.mxu0 %v404
        %548 = vmatpush.msra.mxu0 %v400
        %549 = vmatpush.msra.mxu0 %v396
        %550 = vmatmul.f32.gmra.mxu0 %v380
        %v551 = vpop.f32.mrf.mxu0
        %v552 = vadd.f32 %v526, %v551
        %553 = vmatmul.f32.gmra.mxu0 %v382
        %v554 = vpop.f32.mrf.mxu0
        %v555 = vadd.f32 %v526, %v554
        %556 = vmatmul.f32.gmra.mxu0 %v384
        %v557 = vpop.f32.mrf.mxu0
        %v558 = vadd.f32 %v526, %v557
        %559 = vmatmul.f32.gmra.mxu0 %v386
        %v560 = vpop.f32.mrf.mxu0
        %v561 = vadd.f32 %v526, %v560
        %562 = vmatmul.f32.gmra.mxu0 %v388
        %v563 = vpop.f32.mrf.mxu0
        %v564 = vadd.f32 %v526, %v563
        %565 = vmatmul.f32.gmra.mxu0 %v390
        %v566 = vpop.f32.mrf.mxu0
        %v567 = vadd.f32 %v526, %v566
        %568 = vmatmul.f32.gmra.mxu0 %v392
        %v569 = vpop.f32.mrf.mxu0
        %v570 = vadd.f32 %v526, %v569
        %571 = vmatmul.f32.gmra.mxu0 %v394
        %v572 = vpop.f32.mrf.mxu0
        %v573 = vadd.f32 %v526, %v572
        %574 = vdwg.mxu0
        %575 = vmatpush.msra.mxu0 %v520
        %576 = vmatpush.msra.mxu0 %v516
        %577 = vmatpush.msra.mxu0 %v512
        %578 = vmatpush.msra.mxu0 %v508
        %579 = vmatpush.msra.mxu0 %v504
        %580 = vmatpush.msra.mxu0 %v500
        %581 = vmatpush.msra.mxu0 %v496
        %582 = vmatpush.msra.mxu0 %v492
        %583 = vmatpush.msra.mxu0 %v488
        %584 = vmatpush.msra.mxu0 %v484
        %585 = vmatpush.msra.mxu0 %v480
        %586 = vmatpush.msra.mxu0 %v476
        %587 = vmatpush.msra.mxu0 %v472
        %588 = vmatpush.msra.mxu0 %v468
        %589 = vmatpush.msra.mxu0 %v464
        %590 = vmatpush.msra.mxu0 %v460
        %591 = vmatmul.f32.gmra.mxu0 %v381
        %v592 = vpop.f32.mrf.mxu0
        %v593 = vadd.f32 %v552, %v592
        %594 = vmatmul.f32.gmra.mxu0 %v383
        %v595 = vpop.f32.mrf.mxu0
        %v596 = vadd.f32 %v555, %v595
        %597 = vmatmul.f32.gmra.mxu0 %v385
        %v598 = vpop.f32.mrf.mxu0
        %v599 = vadd.f32 %v558, %v598
        %600 = vmatmul.f32.gmra.mxu0 %v387
        %v601 = vpop.f32.mrf.mxu0
        %v602 = vadd.f32 %v561, %v601
        %603 = vmatmul.f32.gmra.mxu0 %v389
        %v604 = vpop.f32.mrf.mxu0
        %v605 = vadd.f32 %v564, %v604
        %606 = vmatmul.f32.gmra.mxu0 %v391
        %v607 = vpop.f32.mrf.mxu0
        %v608 = vadd.f32 %v567, %v607
        %609 = vmatmul.f32.gmra.mxu0 %v393
        %v610 = vpop.f32.mrf.mxu0
        %v611 = vadd.f32 %v570, %v610
        %612 = vmatmul.f32.gmra.mxu0 %v395
        %v613 = vpop.f32.mrf.mxu0
        %v614 = vadd.f32 %v573, %v613
        %615 = vdwg.mxu0
        %616 = vmatpush.msra.mxu0 %v457
        %617 = vmatpush.msra.mxu0 %v453
        %618 = vmatpush.msra.mxu0 %v449
        %619 = vmatpush.msra.mxu0 %v445
        %620 = vmatpush.msra.mxu0 %v441
        %621 = vmatpush.msra.mxu0 %v437
        %622 = vmatpush.msra.mxu0 %v433
        %623 = vmatpush.msra.mxu0 %v429
        %624 = vmatpush.msra.mxu0 %v425
        %625 = vmatpush.msra.mxu0 %v421
        %626 = vmatpush.msra.mxu0 %v417
        %627 = vmatpush.msra.mxu0 %v413
        %628 = vmatpush.msra.mxu0 %v409
        %629 = vmatpush.msra.mxu0 %v405
        %630 = vmatpush.msra.mxu0 %v401
        %631 = vmatpush.msra.mxu0 %v397
        %632 = vmatmul.f32.gmra.mxu0 %v380
        %v633 = vpop.f32.mrf.mxu0
        %v634 = vadd.f32 %v527, %v633
        %635 = vmatmul.f32.gmra.mxu0 %v382
        %v636 = vpop.f32.mrf.mxu0
        %v637 = vadd.f32 %v527, %v636
        %638 = vmatmul.f32.gmra.mxu0 %v384
        %v639 = vpop.f32.mrf.mxu0
        %v640 = vadd.f32 %v527, %v639
        %641 = vmatmul.f32.gmra.mxu0 %v386
        %v642 = vpop.f32.mrf.mxu0
        %v643 = vadd.f32 %v527, %v642
        %644 = vmatmul.f32.gmra.mxu0 %v388
        %v645 = vpop.f32.mrf.mxu0
        %v646 = vadd.f32 %v527, %v645
        %647 = vmatmul.f32.gmra.mxu0 %v390
        %v648 = vpop.f32.mrf.mxu0
        %v649 = vadd.f32 %v527, %v648
        %650 = vmatmul.f32.gmra.mxu0 %v392
        %v651 = vpop.f32.mrf.mxu0
        %v652 = vadd.f32 %v527, %v651
        %653 = vmatmul.f32.gmra.mxu0 %v394
        %v654 = vpop.f32.mrf.mxu0
        %v655 = vadd.f32 %v527, %v654
        %656 = vdwg.mxu0
        %657 = vmatpush.msra.mxu0 %v521
        %658 = vmatpush.msra.mxu0 %v517
        %659 = vmatpush.msra.mxu0 %v513
        %660 = vmatpush.msra.mxu0 %v509
        %661 = vmatpush.msra.mxu0 %v505
        %662 = vmatpush.msra.mxu0 %v501
        %663 = vmatpush.msra.mxu0 %v497
        %664 = vmatpush.msra.mxu0 %v493
        %665 = vmatpush.msra.mxu0 %v489
        %666 = vmatpush.msra.mxu0 %v485
        %667 = vmatpush.msra.mxu0 %v481
        %668 = vmatpush.msra.mxu0 %v477
        %669 = vmatpush.msra.mxu0 %v473
        %670 = vmatpush.msra.mxu0 %v469
        %671 = vmatpush.msra.mxu0 %v465
        %672 = vmatpush.msra.mxu0 %v461
        %673 = vmatmul.f32.gmra.mxu0 %v381
        %v674 = vpop.f32.mrf.mxu0
        %v675 = vadd.f32 %v634, %v674
        %676 = vmatmul.f32.gmra.mxu0 %v383
        %v677 = vpop.f32.mrf.mxu0
        %v678 = vadd.f32 %v637, %v677
        %679 = vmatmul.f32.gmra.mxu0 %v385
        %v680 = vpop.f32.mrf.mxu0
        %v681 = vadd.f32 %v640, %v680
        %682 = vmatmul.f32.gmra.mxu0 %v387
        %v683 = vpop.f32.mrf.mxu0
        %v684 = vadd.f32 %v643, %v683
        %685 = vmatmul.f32.gmra.mxu0 %v389
        %v686 = vpop.f32.mrf.mxu0
        %v687 = vadd.f32 %v646, %v686
        %688 = vmatmul.f32.gmra.mxu0 %v391
        %v689 = vpop.f32.mrf.mxu0
        %v690 = vadd.f32 %v649, %v689
        %691 = vmatmul.f32.gmra.mxu0 %v393
        %v692 = vpop.f32.mrf.mxu0
        %v693 = vadd.f32 %v652, %v692
        %694 = vmatmul.f32.gmra.mxu0 %v395
        %v695 = vpop.f32.mrf.mxu0
        %v696 = vadd.f32 %v655, %v695
        %697 = vdwg.mxu0
        %698 = vmatpush.msra.mxu0 %v458
        %699 = vmatpush.msra.mxu0 %v454
        %700 = vmatpush.msra.mxu0 %v450
        %701 = vmatpush.msra.mxu0 %v446
        %702 = vmatpush.msra.mxu0 %v442
        %703 = vmatpush.msra.mxu0 %v438
        %704 = vmatpush.msra.mxu0 %v434
        %705 = vmatpush.msra.mxu0 %v430
        %706 = vmatpush.msra.mxu0 %v426
        %707 = vmatpush.msra.mxu0 %v422
        %708 = vmatpush.msra.mxu0 %v418
        %709 = vmatpush.msra.mxu0 %v414
        %710 = vmatpush.msra.mxu0 %v410
        %711 = vmatpush.msra.mxu0 %v406
        %712 = vmatpush.msra.mxu0 %v402
        %713 = vmatpush.msra.mxu0 %v398
        %714 = vmatmul.f32.gmra.mxu0 %v380
        %v715 = vpop.f32.mrf.mxu0
        %v716 = vadd.f32 %v528, %v715
        %717 = vmatmul.f32.gmra.mxu0 %v382
        %v718 = vpop.f32.mrf.mxu0
        %v719 = vadd.f32 %v528, %v718
        %720 = vmatmul.f32.gmra.mxu0 %v384
        %v721 = vpop.f32.mrf.mxu0
        %v722 = vadd.f32 %v528, %v721
        %723 = vmatmul.f32.gmra.mxu0 %v386
        %v724 = vpop.f32.mrf.mxu0
        %v725 = vadd.f32 %v528, %v724
        %726 = vmatmul.f32.gmra.mxu0 %v388
        %v727 = vpop.f32.mrf.mxu0
        %v728 = vadd.f32 %v528, %v727
        %729 = vmatmul.f32.gmra.mxu0 %v390
        %v730 = vpop.f32.mrf.mxu0
        %v731 = vadd.f32 %v528, %v730
        %732 = vmatmul.f32.gmra.mxu0 %v392
        %v733 = vpop.f32.mrf.mxu0
        %v734 = vadd.f32 %v528, %v733
        %735 = vmatmul.f32.gmra.mxu0 %v394
        %v736 = vpop.f32.mrf.mxu0
        %v737 = vadd.f32 %v528, %v736
        %738 = vdwg.mxu0
        %739 = vmatpush.msra.mxu0 %v522
        %740 = vmatpush.msra.mxu0 %v518
        %741 = vmatpush.msra.mxu0 %v514
        %742 = vmatpush.msra.mxu0 %v510
        %743 = vmatpush.msra.mxu0 %v506
        %744 = vmatpush.msra.mxu0 %v502
        %745 = vmatpush.msra.mxu0 %v498
        %746 = vmatpush.msra.mxu0 %v494
        %747 = vmatpush.msra.mxu0 %v490
        %748 = vmatpush.msra.mxu0 %v486
        %749 = vmatpush.msra.mxu0 %v482
        %750 = vmatpush.msra.mxu0 %v478
        %751 = vmatpush.msra.mxu0 %v474
        %752 = vmatpush.msra.mxu0 %v470
        %753 = vmatpush.msra.mxu0 %v466
        %754 = vmatpush.msra.mxu0 %v462
        %755 = vmatmul.f32.gmra.mxu0 %v381
        %v756 = vpop.f32.mrf.mxu0
        %v757 = vadd.f32 %v716, %v756
        %758 = vmatmul.f32.gmra.mxu0 %v383
        %v759 = vpop.f32.mrf.mxu0
        %v760 = vadd.f32 %v719, %v759
        %761 = vmatmul.f32.gmra.mxu0 %v385
        %v762 = vpop.f32.mrf.mxu0
        %v763 = vadd.f32 %v722, %v762
        %764 = vmatmul.f32.gmra.mxu0 %v387
        %v765 = vpop.f32.mrf.mxu0
        %v766 = vadd.f32 %v725, %v765
        %767 = vmatmul.f32.gmra.mxu0 %v389
        %v768 = vpop.f32.mrf.mxu0
        %v769 = vadd.f32 %v728, %v768
        %770 = vmatmul.f32.gmra.mxu0 %v391
        %v771 = vpop.f32.mrf.mxu0
        %v772 = vadd.f32 %v731, %v771
        %773 = vmatmul.f32.gmra.mxu0 %v393
        %v774 = vpop.f32.mrf.mxu0
        %v775 = vadd.f32 %v734, %v774
        %776 = vmatmul.f32.gmra.mxu0 %v395
        %v777 = vpop.f32.mrf.mxu0
        %v778 = vadd.f32 %v737, %v777
        %779 = vdwg.mxu0
        %780 = vmatpush.msra.mxu0 %v459
        %781 = vmatpush.msra.mxu0 %v455
        %782 = vmatpush.msra.mxu0 %v451
        %783 = vmatpush.msra.mxu0 %v447
        %784 = vmatpush.msra.mxu0 %v443
        %785 = vmatpush.msra.mxu0 %v439
        %786 = vmatpush.msra.mxu0 %v435
        %787 = vmatpush.msra.mxu0 %v431
        %788 = vmatpush.msra.mxu0 %v427
        %789 = vmatpush.msra.mxu0 %v423
        %790 = vmatpush.msra.mxu0 %v419
        %791 = vmatpush.msra.mxu0 %v415
        %792 = vmatpush.msra.mxu0 %v411
        %793 = vmatpush.msra.mxu0 %v407
        %794 = vmatpush.msra.mxu0 %v403
        %795 = vmatpush.msra.mxu0 %v399
        %796 = vmatmul.f32.gmra.mxu0 %v380
        %v797 = vpop.f32.mrf.mxu0
        %v798 = vadd.f32 %v529, %v797
        %799 = vmatmul.f32.gmra.mxu0 %v382
        %v800 = vpop.f32.mrf.mxu0
        %v801 = vadd.f32 %v529, %v800
        %802 = vmatmul.f32.gmra.mxu0 %v384
        %v803 = vpop.f32.mrf.mxu0
        %v804 = vadd.f32 %v529, %v803
        %805 = vmatmul.f32.gmra.mxu0 %v386
        %v806 = vpop.f32.mrf.mxu0
        %v807 = vadd.f32 %v529, %v806
        %808 = vmatmul.f32.gmra.mxu0 %v388
        %v809 = vpop.f32.mrf.mxu0
        %v810 = vadd.f32 %v529, %v809
        %811 = vmatmul.f32.gmra.mxu0 %v390
        %v812 = vpop.f32.mrf.mxu0
        %v813 = vadd.f32 %v529, %v812
        %814 = vmatmul.f32.gmra.mxu0 %v392
        %v815 = vpop.f32.mrf.mxu0
        %v816 = vadd.f32 %v529, %v815
        %817 = vmatmul.f32.gmra.mxu0 %v394
        %v818 = vpop.f32.mrf.mxu0
        %v819 = vadd.f32 %v529, %v818
        %820 = vdwg.mxu0
        %821 = vmatpush.msra.mxu0 %v523
        %822 = vmatpush.msra.mxu0 %v519
        %823 = vmatpush.msra.mxu0 %v515
        %824 = vmatpush.msra.mxu0 %v511
        %825 = vmatpush.msra.mxu0 %v507
        %826 = vmatpush.msra.mxu0 %v503
        %827 = vmatpush.msra.mxu0 %v499
        %828 = vmatpush.msra.mxu0 %v495
        %829 = vmatpush.msra.mxu0 %v491
        %830 = vmatpush.msra.mxu0 %v487
        %831 = vmatpush.msra.mxu0 %v483
        %832 = vmatpush.msra.mxu0 %v479
        %833 = vmatpush.msra.mxu0 %v475
        %834 = vmatpush.msra.mxu0 %v471
        %835 = vmatpush.msra.mxu0 %v467
        %836 = vmatpush.msra.mxu0 %v463
        %837 = vmatmul.f32.gmra.mxu0 %v381
        %v838 = vpop.f32.mrf.mxu0
        %v839 = vadd.f32 %v798, %v838
        %840 = vmatmul.f32.gmra.mxu0 %v383
        %v841 = vpop.f32.mrf.mxu0
        %v842 = vadd.f32 %v801, %v841
        %843 = vmatmul.f32.gmra.mxu0 %v385
        %v844 = vpop.f32.mrf.mxu0
        %v845 = vadd.f32 %v804, %v844
        %846 = vmatmul.f32.gmra.mxu0 %v387
        %v847 = vpop.f32.mrf.mxu0
        %v848 = vadd.f32 %v807, %v847
        %849 = vmatmul.f32.gmra.mxu0 %v389
        %v850 = vpop.f32.mrf.mxu0
        %v851 = vadd.f32 %v810, %v850
        %852 = vmatmul.f32.gmra.mxu0 %v391
        %v853 = vpop.f32.mrf.mxu0
        %v854 = vadd.f32 %v813, %v853
        %855 = vmatmul.f32.gmra.mxu0 %v393
        %v856 = vpop.f32.mrf.mxu0
        %v857 = vadd.f32 %v816, %v856
        %858 = vmatmul.f32.gmra.mxu0 %v395
        %v859 = vpop.f32.mrf.mxu0
        %v860 = vadd.f32 %v819, %v859
        %861 = vdwg.mxu0
        %vm862 = vcmp.gt.f32.partialorder %v593, 0.0
        %vm863 = vcmp.gt.f32.partialorder %v675, 0.0
        %vm864 = vcmp.gt.f32.partialorder %v596, 0.0
        %vm865 = vcmp.gt.f32.partialorder %v678, 0.0
        %vm866 = vcmp.gt.f32.partialorder %v599, 0.0
        %vm867 = vcmp.gt.f32.partialorder %v681, 0.0
        %vm868 = vcmp.gt.f32.partialorder %v602, 0.0
        %vm869 = vcmp.gt.f32.partialorder %v684, 0.0
        %vm870 = vcmp.gt.f32.partialorder %v605, 0.0
        %vm871 = vcmp.gt.f32.partialorder %v687, 0.0
        %vm872 = vcmp.gt.f32.partialorder %v608, 0.0
        %vm873 = vcmp.gt.f32.partialorder %v690, 0.0
        %vm874 = vcmp.gt.f32.partialorder %v611, 0.0
        %vm875 = vcmp.gt.f32.partialorder %v693, 0.0
        %vm876 = vcmp.gt.f32.partialorder %v614, 0.0
        %vm877 = vcmp.gt.f32.partialorder %v696, 0.0
        %v878 = vadd.f32 %v593, 1.0
        %v879 = vadd.f32 %v675, 1.0
        %v880 = vadd.f32 %v596, 1.0
        %v881 = vadd.f32 %v678, 1.0
        %v882 = vadd.f32 %v599, 1.0
        %v883 = vadd.f32 %v681, 1.0
        %v884 = vadd.f32 %v602, 1.0
        %v885 = vadd.f32 %v684, 1.0
        %v886 = vadd.f32 %v605, 1.0
        %v887 = vadd.f32 %v687, 1.0
        %v888 = vadd.f32 %v608, 1.0
        %v889 = vadd.f32 %v690, 1.0
        %v890 = vadd.f32 %v611, 1.0
        %v891 = vadd.f32 %v693, 1.0
        %v892 = vadd.f32 %v614, 1.0
        %v893 = vadd.f32 %v696, 1.0
        %v894 = vmul.f32 %v593, 1.442695
        %v895 = vpow.pop %v894
        %v896 = vmul.f32 %v675, 1.442695
        %v897 = vpow.pop %v896
        %v898 = vmul.f32 %v596, 1.442695
        %v899 = vpow.pop %v898
        %v900 = vmul.f32 %v678, 1.442695
        %v901 = vpow.pop %v900
        %v902 = vmul.f32 %v599, 1.442695
        %v903 = vpow.pop %v902
        %v904 = vmul.f32 %v681, 1.442695
        %v905 = vpow.pop %v904
        %v906 = vmul.f32 %v602, 1.442695
        %v907 = vpow.pop %v906
        %v908 = vmul.f32 %v684, 1.442695
        %v909 = vpow.pop %v908
        %v910 = vmul.f32 %v605, 1.442695
        %v911 = vpow.pop %v910
        %v912 = vmul.f32 %v687, 1.442695
        %v913 = vpow.pop %v912
        %v914 = vmul.f32 %v608, 1.442695
        %v915 = vpow.pop %v914
        %v916 = vmul.f32 %v690, 1.442695
        %v917 = vpow.pop %v916
        %v918 = vmul.f32 %v611, 1.442695
        %v919 = vpow.pop %v918
        %v920 = vmul.f32 %v693, 1.442695
        %v921 = vpow.pop %v920
        %v922 = vmul.f32 %v614, 1.442695
        %v923 = vpow.pop %v922
        %v924 = vmul.f32 %v696, 1.442695
        %v925 = vpow.pop %v924
        %v926 = vsel %vm862, %v878, %v895
        %v927 = vsel %vm863, %v879, %v897
        %v928 = vsel %vm864, %v880, %v899
        %v929 = vsel %vm865, %v881, %v901
        %v930 = vsel %vm866, %v882, %v903
        %v931 = vsel %vm867, %v883, %v905
        %v932 = vsel %vm868, %v884, %v907
        %v933 = vsel %vm869, %v885, %v909
        %v934 = vsel %vm870, %v886, %v911
        %v935 = vsel %vm871, %v887, %v913
        %v936 = vsel %vm872, %v888, %v915
        %v937 = vsel %vm873, %v889, %v917
        %v938 = vsel %vm874, %v890, %v919
        %v939 = vsel %vm875, %v891, %v921
        %v940 = vsel %vm876, %v892, %v923
        %v941 = vsel %vm877, %v893, %v925
        %vm942 = vcmp.gt.f32.partialorder %v757, 0.0
        %vm943 = vcmp.gt.f32.partialorder %v839, 0.0
        %vm944 = vcmp.gt.f32.partialorder %v760, 0.0
        %vm945 = vcmp.gt.f32.partialorder %v842, 0.0
        %vm946 = vcmp.gt.f32.partialorder %v763, 0.0
        %vm947 = vcmp.gt.f32.partialorder %v845, 0.0
        %vm948 = vcmp.gt.f32.partialorder %v766, 0.0
        %vm949 = vcmp.gt.f32.partialorder %v848, 0.0
        %vm950 = vcmp.gt.f32.partialorder %v769, 0.0
        %vm951 = vcmp.gt.f32.partialorder %v851, 0.0
        %vm952 = vcmp.gt.f32.partialorder %v772, 0.0
        %vm953 = vcmp.gt.f32.partialorder %v854, 0.0
        %vm954 = vcmp.gt.f32.partialorder %v775, 0.0
        %vm955 = vcmp.gt.f32.partialorder %v857, 0.0
        %vm956 = vcmp.gt.f32.partialorder %v778, 0.0
        %vm957 = vcmp.gt.f32.partialorder %v860, 0.0
        %v958 = vadd.f32 %v757, 1.0
        %v959 = vadd.f32 %v839, 1.0
        %v960 = vadd.f32 %v760, 1.0
        %v961 = vadd.f32 %v842, 1.0
        %v962 = vadd.f32 %v763, 1.0
        %v963 = vadd.f32 %v845, 1.0
        %v964 = vadd.f32 %v766, 1.0
        %v965 = vadd.f32 %v848, 1.0
        %v966 = vadd.f32 %v769, 1.0
        %v967 = vadd.f32 %v851, 1.0
        %v968 = vadd.f32 %v772, 1.0
        %v969 = vadd.f32 %v854, 1.0
        %v970 = vadd.f32 %v775, 1.0
        %v971 = vadd.f32 %v857, 1.0
        %v972 = vadd.f32 %v778, 1.0
        %v973 = vadd.f32 %v860, 1.0
        %v974 = vmul.f32 %v757, 1.442695
        %v975 = vpow.pop %v974
        %v976 = vmul.f32 %v839, 1.442695
        %v977 = vpow.pop %v976
        %v978 = vmul.f32 %v760, 1.442695
        %v979 = vpow.pop %v978
        %v980 = vmul.f32 %v842, 1.442695
        %v981 = vpow.pop %v980
        %v982 = vmul.f32 %v763, 1.442695
        %v983 = vpow.pop %v982
        %v984 = vmul.f32 %v845, 1.442695
        %v985 = vpow.pop %v984
        %v986 = vmul.f32 %v766, 1.442695
        %v987 = vpow.pop %v986
        %v988 = vmul.f32 %v848, 1.442695
        %v989 = vpow.pop %v988
        %v990 = vmul.f32 %v769, 1.442695
        %v991 = vpow.pop %v990
        %v992 = vmul.f32 %v851, 1.442695
        %v993 = vpow.pop %v992
        %v994 = vmul.f32 %v772, 1.442695
        %v995 = vpow.pop %v994
        %v996 = vmul.f32 %v854, 1.442695
        %v997 = vpow.pop %v996
        %v998 = vmul.f32 %v775, 1.442695
        %v999 = vpow.pop %v998
        %v1000 = vmul.f32 %v857, 1.442695
        %v1001 = vpow.pop %v1000
        %v1002 = vmul.f32 %v778, 1.442695
        %v1003 = vpow.pop %v1002
        %v1004 = vmul.f32 %v860, 1.442695
        %v1005 = vpow.pop %v1004
        %v1006 = vsel %vm942, %v958, %v975
        %v1007 = vsel %vm943, %v959, %v977
        %v1008 = vsel %vm944, %v960, %v979
        %v1009 = vsel %vm945, %v961, %v981
        %v1010 = vsel %vm946, %v962, %v983
        %v1011 = vsel %vm947, %v963, %v985
        %v1012 = vsel %vm948, %v964, %v987
        %v1013 = vsel %vm949, %v965, %v989
        %v1014 = vsel %vm950, %v966, %v991
        %v1015 = vsel %vm951, %v967, %v993
        %v1016 = vsel %vm952, %v968, %v995
        %v1017 = vsel %vm953, %v969, %v997
        %v1018 = vsel %vm954, %v970, %v999
        %v1019 = vsel %vm955, %v971, %v1001
        %v1020 = vsel %vm956, %v972, %v1003
        %v1021 = vsel %vm957, %v973, %v1005
        %v1022 = vld [vmem:[#allocation8] sm:$0xff]
        %v1023 = vld [vmem:[#allocation8 + $0x8] sm:$0xff]
        %v1024 = vld [vmem:[#allocation8 + $0x10] sm:$0xff]
        %v1025 = vld [vmem:[#allocation8 + $0x18] sm:$0xff]
        %v1026 = vld [vmem:[#allocation8 + $0x20] sm:$0xff]
        %v1027 = vld [vmem:[#allocation8 + $0x28] sm:$0xff]
        %v1028 = vld [vmem:[#allocation8 + $0x30] sm:$0xff]
        %v1029 = vld [vmem:[#allocation8 + $0x38] sm:$0xff]
        %v1030 = vld [vmem:[#allocation8 + $0x40] sm:$0xff]
        %v1031 = vld [vmem:[#allocation8 + $0x48] sm:$0xff]
        %v1032 = vld [vmem:[#allocation8 + $0x50] sm:$0xff]
        %v1033 = vld [vmem:[#allocation8 + $0x58] sm:$0xff]
        %v1034 = vld [vmem:[#allocation8 + $0x60] sm:$0xff]
        %v1035 = vld [vmem:[#allocation8 + $0x68] sm:$0xff]
        %v1036 = vld [vmem:[#allocation8 + $0x70] sm:$0xff]
        %v1037 = vld [vmem:[#allocation8 + $0x78] sm:$0xff]
        %v1038 = vld [vmem:[#allocation10] sm:$0xff]
        %v1039 = vld [vmem:[#allocation10 + $0x8] sm:$0xff]
        %v1040 = vld [vmem:[#allocation10 + $0x10] sm:$0xff]
        %v1041 = vld [vmem:[#allocation10 + $0x18] sm:$0xff]
        %v1042 = vld [vmem:[#allocation10 + $0x20] sm:$0xff]
        %v1043 = vld [vmem:[#allocation10 + $0x28] sm:$0xff]
        %v1044 = vld [vmem:[#allocation10 + $0x30] sm:$0xff]
        %v1045 = vld [vmem:[#allocation10 + $0x38] sm:$0xff]
        %v1046 = vld [vmem:[#allocation10 + $0x40] sm:$0xff]
        %v1047 = vld [vmem:[#allocation10 + $0x48] sm:$0xff]
        %v1048 = vld [vmem:[#allocation10 + $0x50] sm:$0xff]
        %v1049 = vld [vmem:[#allocation10 + $0x58] sm:$0xff]
        %v1050 = vld [vmem:[#allocation10 + $0x60] sm:$0xff]
        %v1051 = vld [vmem:[#allocation10 + $0x68] sm:$0xff]
        %v1052 = vld [vmem:[#allocation10 + $0x70] sm:$0xff]
        %v1053 = vld [vmem:[#allocation10 + $0x78] sm:$0xff]
        %v1054 = vadd.f32 %v1006, %v1008
        %v1055 = vadd.f32 %v1054, %v1010
        %v1056 = vadd.f32 %v1055, %v1012
        %v1057 = vadd.f32 %v1056, %v1014
        %v1058 = vadd.f32 %v1057, %v1016
        %v1059 = vadd.f32 %v1058, %v1018
        %v1060 = vadd.f32 %v1059, %v1020
        %v1061 = vrot.slane %v1060, 4
        %v1062 = vadd.f32 %v1060, %v1061
        %v1063 = vrot.slane %v1062, 2
        %v1064 = vadd.f32 %v1062, %v1063
        %v1065 = vrot.slane %v1064, 1
        %v1066 = vadd.f32 %v1064, %v1065
        %v1067 = vadd.f32 %v1007, %v1009
        %v1068 = vadd.f32 %v1067, %v1011
        %v1069 = vadd.f32 %v1068, %v1013
        %v1070 = vadd.f32 %v1069, %v1015
        %v1071 = vadd.f32 %v1070, %v1017
        %v1072 = vadd.f32 %v1071, %v1019
        %v1073 = vadd.f32 %v1072, %v1021
        %v1074 = vrot.slane %v1073, 4
        %v1075 = vadd.f32 %v1073, %v1074
        %v1076 = vrot.slane %v1075, 2
        %v1077 = vadd.f32 %v1075, %v1076
        %v1078 = vrot.slane %v1077, 1
        %v1079 = vadd.f32 %v1077, %v1078
        %v1080 = vrcp.pop 64.0
        %v1081 = vmul.f32 64.0, %v1080
        %v1082 = vsub.f32 1.0, %v1081
        %v1083 = vmul.f32 %v1080, %v1082
        %v1084 = vadd.f32 %v1080, %v1083
        %vm1085 = vweird.f32 %v1080
        %v1086 = vsel %vm1085, %v1080, %v1084
        %v1087 = vmul.f32 %v1066, %v1086
        %v1088 = vmul.f32 %v1079, %v1086
        %v1089 = vmul.f32 %v926, %v1087
        %v1090 = vmul.f32 %v928, %v1087
        %v1091 = vmul.f32 %v930, %v1087
        %v1092 = vmul.f32 %v932, %v1087
        %v1093 = vmul.f32 %v934, %v1087
        %v1094 = vmul.f32 %v936, %v1087
        %v1095 = vmul.f32 %v938, %v1087
        %v1096 = vmul.f32 %v940, %v1087
        %1097 = vadd.xlane.f32.xlu0 %v1089
        %v1098 = vpop.xlane.xlu0 %1097
        %1099 = vadd.xlane.f32.xlu0 %v1090
        %v1100 = vpop.xlane.xlu0 %1099
        %1101 = vadd.xlane.f32.xlu0 %v1091
        %v1102 = vpop.xlane.xlu0 %1101
        %1103 = vadd.xlane.f32.xlu0 %v1092
        %v1104 = vpop.xlane.xlu0 %1103
        %1105 = vadd.xlane.f32.xlu0 %v1093
        %v1106 = vpop.xlane.xlu0 %1105
        %1107 = vadd.xlane.f32.xlu0 %v1094
        %v1108 = vpop.xlane.xlu0 %1107
        %1109 = vadd.xlane.f32.xlu0 %v1095
        %v1110 = vpop.xlane.xlu0 %1109
        %1111 = vadd.xlane.f32.xlu0 %v1096
        %v1112 = vpop.xlane.xlu0 %1111
        %v1113 = vadd.f32 %v1098, 1e-06
        %v1114 = vadd.f32 %v1100, 1e-06
        %v1115 = vadd.f32 %v1102, 1e-06
        %v1116 = vadd.f32 %v1104, 1e-06
        %v1117 = vadd.f32 %v1106, 1e-06
        %v1118 = vadd.f32 %v1108, 1e-06
        %v1119 = vadd.f32 %v1110, 1e-06
        %v1120 = vadd.f32 %v1112, 1e-06
        %v1121 = vrcp.pop %v1113
        %v1122 = vmul.f32 %v1113, %v1121
        %v1123 = vsub.f32 1.0, %v1122
        %v1124 = vmul.f32 %v1121, %v1123
        %v1125 = vadd.f32 %v1121, %v1124
        %vm1126 = vweird.f32 %v1113
        %vm1127 = vweird.f32 %v1121
        %vm1128 = vmor %vm1126, %vm1127
        %v1129 = vsel %vm1128, %v1121, %v1125
        %v1130 = vand.u32 2147483647, %v1113
        %vm1131 = vcmp.eq.f32.partialorder %v1130, 8.507059e+37
        %v1132 = vand.u32 %v1113, 2147483648
        %v1133 = vor.u32 1.1754944e-38, %v1132
        %v1134 = vsel %vm1131, %v1133, %v1129
        %v1135 = vmul.f32 1.0, %v1134
        %v1136 = vrcp.pop %v1114
        %v1137 = vmul.f32 %v1114, %v1136
        %v1138 = vsub.f32 1.0, %v1137
        %v1139 = vmul.f32 %v1136, %v1138
        %v1140 = vadd.f32 %v1136, %v1139
        %vm1141 = vweird.f32 %v1114
        %vm1142 = vweird.f32 %v1136
        %vm1143 = vmor %vm1141, %vm1142
        %v1144 = vsel %vm1143, %v1136, %v1140
        %v1145 = vand.u32 2147483647, %v1114
        %vm1146 = vcmp.eq.f32.partialorder %v1145, 8.507059e+37
        %v1147 = vand.u32 %v1114, 2147483648
        %v1148 = vor.u32 1.1754944e-38, %v1147
        %v1149 = vsel %vm1146, %v1148, %v1144
        %v1150 = vmul.f32 1.0, %v1149
        %v1151 = vrcp.pop %v1115
        %v1152 = vmul.f32 %v1115, %v1151
        %v1153 = vsub.f32 1.0, %v1152
        %v1154 = vmul.f32 %v1151, %v1153
        %v1155 = vadd.f32 %v1151, %v1154
        %vm1156 = vweird.f32 %v1115
        %vm1157 = vweird.f32 %v1151
        %vm1158 = vmor %vm1156, %vm1157
        %v1159 = vsel %vm1158, %v1151, %v1155
        %v1160 = vand.u32 2147483647, %v1115
        %vm1161 = vcmp.eq.f32.partialorder %v1160, 8.507059e+37
        %v1162 = vand.u32 %v1115, 2147483648
        %v1163 = vor.u32 1.1754944e-38, %v1162
        %v1164 = vsel %vm1161, %v1163, %v1159
        %v1165 = vmul.f32 1.0, %v1164
        %v1166 = vrcp.pop %v1116
        %v1167 = vmul.f32 %v1116, %v1166
        %v1168 = vsub.f32 1.0, %v1167
        %v1169 = vmul.f32 %v1166, %v1168
        %v1170 = vadd.f32 %v1166, %v1169
        %vm1171 = vweird.f32 %v1116
        %vm1172 = vweird.f32 %v1166
        %vm1173 = vmor %vm1171, %vm1172
        %v1174 = vsel %vm1173, %v1166, %v1170
        %v1175 = vand.u32 2147483647, %v1116
        %vm1176 = vcmp.eq.f32.partialorder %v1175, 8.507059e+37
        %v1177 = vand.u32 %v1116, 2147483648
        %v1178 = vor.u32 1.1754944e-38, %v1177
        %v1179 = vsel %vm1176, %v1178, %v1174
        %v1180 = vmul.f32 1.0, %v1179
        %v1181 = vrcp.pop %v1117
        %v1182 = vmul.f32 %v1117, %v1181
        %v1183 = vsub.f32 1.0, %v1182
        %v1184 = vmul.f32 %v1181, %v1183
        %v1185 = vadd.f32 %v1181, %v1184
        %vm1186 = vweird.f32 %v1117
        %vm1187 = vweird.f32 %v1181
        %vm1188 = vmor %vm1186, %vm1187
        %v1189 = vsel %vm1188, %v1181, %v1185
        %v1190 = vand.u32 2147483647, %v1117
        %vm1191 = vcmp.eq.f32.partialorder %v1190, 8.507059e+37
        %v1192 = vand.u32 %v1117, 2147483648
        %v1193 = vor.u32 1.1754944e-38, %v1192
        %v1194 = vsel %vm1191, %v1193, %v1189
        %v1195 = vmul.f32 1.0, %v1194
        %v1196 = vrcp.pop %v1118
        %v1197 = vmul.f32 %v1118, %v1196
        %v1198 = vsub.f32 1.0, %v1197
        %v1199 = vmul.f32 %v1196, %v1198
        %v1200 = vadd.f32 %v1196, %v1199
        %vm1201 = vweird.f32 %v1118
        %vm1202 = vweird.f32 %v1196
        %vm1203 = vmor %vm1201, %vm1202
        %v1204 = vsel %vm1203, %v1196, %v1200
        %v1205 = vand.u32 2147483647, %v1118
        %vm1206 = vcmp.eq.f32.partialorder %v1205, 8.507059e+37
        %v1207 = vand.u32 %v1118, 2147483648
        %v1208 = vor.u32 1.1754944e-38, %v1207
        %v1209 = vsel %vm1206, %v1208, %v1204
        %v1210 = vmul.f32 1.0, %v1209
        %v1211 = vrcp.pop %v1119
        %v1212 = vmul.f32 %v1119, %v1211
        %v1213 = vsub.f32 1.0, %v1212
        %v1214 = vmul.f32 %v1211, %v1213
        %v1215 = vadd.f32 %v1211, %v1214
        %vm1216 = vweird.f32 %v1119
        %vm1217 = vweird.f32 %v1211
        %vm1218 = vmor %vm1216, %vm1217
        %v1219 = vsel %vm1218, %v1211, %v1215
        %v1220 = vand.u32 2147483647, %v1119
        %vm1221 = vcmp.eq.f32.partialorder %v1220, 8.507059e+37
        %v1222 = vand.u32 %v1119, 2147483648
        %v1223 = vor.u32 1.1754944e-38, %v1222
        %v1224 = vsel %vm1221, %v1223, %v1219
        %v1225 = vmul.f32 1.0, %v1224
        %v1226 = vrcp.pop %v1120
        %v1227 = vmul.f32 %v1120, %v1226
        %v1228 = vsub.f32 1.0, %v1227
        %v1229 = vmul.f32 %v1226, %v1228
        %v1230 = vadd.f32 %v1226, %v1229
        %vm1231 = vweird.f32 %v1120
        %vm1232 = vweird.f32 %v1226
        %vm1233 = vmor %vm1231, %vm1232
        %v1234 = vsel %vm1233, %v1226, %v1230
        %v1235 = vand.u32 2147483647, %v1120
        %vm1236 = vcmp.eq.f32.partialorder %v1235, 8.507059e+37
        %v1237 = vand.u32 %v1120, 2147483648
        %v1238 = vor.u32 1.1754944e-38, %v1237
        %v1239 = vsel %vm1236, %v1238, %v1234
        %v1240 = vmul.f32 1.0, %v1239
        %v1241 = vmul.f32 %v1022, %v926
        %v1242 = vmul.f32 %v1024, %v928
        %v1243 = vmul.f32 %v1026, %v930
        %v1244 = vmul.f32 %v1028, %v932
        %v1245 = vmul.f32 %v1030, %v934
        %v1246 = vmul.f32 %v1032, %v936
        %v1247 = vmul.f32 %v1034, %v938
        %v1248 = vmul.f32 %v1036, %v940
        %1249 = vrot.lane.b32.xlu0 %v926, 64
        %v1250 = vpop.permute.xlu0 %1249
        %1251 = vrot.lane.b32.xlu0 %v928, 64
        %v1252 = vpop.permute.xlu0 %1251
        %1253 = vrot.lane.b32.xlu0 %v930, 64
        %v1254 = vpop.permute.xlu0 %1253
        %1255 = vrot.lane.b32.xlu0 %v932, 64
        %v1256 = vpop.permute.xlu0 %1255
        %1257 = vrot.lane.b32.xlu0 %v934, 64
        %v1258 = vpop.permute.xlu0 %1257
        %1259 = vrot.lane.b32.xlu0 %v936, 64
        %v1260 = vpop.permute.xlu0 %1259
        %1261 = vrot.lane.b32.xlu0 %v938, 64
        %v1262 = vpop.permute.xlu0 %1261
        %1263 = vrot.lane.b32.xlu0 %v940, 64
        %v1264 = vpop.permute.xlu0 %1263
        %v1265 = vmul.f32 %v1038, %v1250
        %v1266 = vmul.f32 %v1040, %v1252
        %v1267 = vmul.f32 %v1042, %v1254
        %v1268 = vmul.f32 %v1044, %v1256
        %v1269 = vmul.f32 %v1046, %v1258
        %v1270 = vmul.f32 %v1048, %v1260
        %v1271 = vmul.f32 %v1050, %v1262
        %v1272 = vmul.f32 %v1052, %v1264
        %v1273 = vadd.f32 %v1241, %v1265
        %v1274 = vadd.f32 %v1242, %v1266
        %v1275 = vadd.f32 %v1243, %v1267
        %v1276 = vadd.f32 %v1244, %v1268
        %v1277 = vadd.f32 %v1245, %v1269
        %v1278 = vadd.f32 %v1246, %v1270
        %v1279 = vadd.f32 %v1247, %v1271
        %v1280 = vadd.f32 %v1248, %v1272
        %v1281 = vmul.f32 %v1022, %v1006
        %v1282 = vmul.f32 %v1024, %v1008
        %v1283 = vmul.f32 %v1026, %v1010
        %v1284 = vmul.f32 %v1028, %v1012
        %v1285 = vmul.f32 %v1030, %v1014
        %v1286 = vmul.f32 %v1032, %v1016
        %v1287 = vmul.f32 %v1034, %v1018
        %v1288 = vmul.f32 %v1036, %v1020
        %1289 = vrot.lane.b32.xlu0 %v1006, 64
        %v1290 = vpop.permute.xlu0 %1289
        %1291 = vrot.lane.b32.xlu0 %v1008, 64
        %v1292 = vpop.permute.xlu0 %1291
        %1293 = vrot.lane.b32.xlu0 %v1010, 64
        %v1294 = vpop.permute.xlu0 %1293
        %1295 = vrot.lane.b32.xlu0 %v1012, 64
        %v1296 = vpop.permute.xlu0 %1295
        %1297 = vrot.lane.b32.xlu0 %v1014, 64
        %v1298 = vpop.permute.xlu0 %1297
        %1299 = vrot.lane.b32.xlu0 %v1016, 64
        %v1300 = vpop.permute.xlu0 %1299
        %1301 = vrot.lane.b32.xlu0 %v1018, 64
        %v1302 = vpop.permute.xlu0 %1301
        %1303 = vrot.lane.b32.xlu0 %v1020, 64
        %v1304 = vpop.permute.xlu0 %1303
        %v1305 = vmul.f32 %v1038, %v1290
        %v1306 = vmul.f32 %v1040, %v1292
        %v1307 = vmul.f32 %v1042, %v1294
        %v1308 = vmul.f32 %v1044, %v1296
        %v1309 = vmul.f32 %v1046, %v1298
        %v1310 = vmul.f32 %v1048, %v1300
        %v1311 = vmul.f32 %v1050, %v1302
        %v1312 = vmul.f32 %v1052, %v1304
        %v1313 = vadd.f32 %v1281, %v1305
        %v1314 = vadd.f32 %v1282, %v1306
        %v1315 = vadd.f32 %v1283, %v1307
        %v1316 = vadd.f32 %v1284, %v1308
        %v1317 = vadd.f32 %v1285, %v1309
        %v1318 = vadd.f32 %v1286, %v1310
        %v1319 = vadd.f32 %v1287, %v1311
        %v1320 = vadd.f32 %v1288, %v1312
        %1321 = vxpose.xlu0.b32.start [1/16] %v1313, 128
        %1322 = vxpose.xlu0.b32.cont [2/16] %v1314, 128
        %1323 = vxpose.xlu0.b32.cont [3/16] %v1315, 128
        %1324 = vxpose.xlu0.b32.cont [4/16] %v1316, 128
        %1325 = vxpose.xlu0.b32.cont [5/16] %v1317, 128
        %1326 = vxpose.xlu0.b32.cont [6/16] %v1318, 128
        %1327 = vxpose.xlu0.b32.cont [7/16] %v1319, 128
        %1328 = vxpose.xlu0.b32.cont [8/16] %v1320, 128
        %1329 = vxpose.xlu0.b32.cont [9/16] 0.0, 128
        %1330 = vxpose.xlu0.b32.cont [10/16] 0.0, 128
        %1331 = vxpose.xlu0.b32.cont [11/16] 0.0, 128
        %1332 = vxpose.xlu0.b32.cont [12/16] 0.0, 128
        %1333 = vxpose.xlu0.b32.cont [13/16] 0.0, 128
        %1334 = vxpose.xlu0.b32.cont [14/16] 0.0, 128
        %1335 = vxpose.xlu0.b32.cont [15/16] 0.0, 128
        %1336 = vxpose.xlu0.b32.end [16/16] 0.0, 128
        %v1337 = vpop.trf.xlu0
        %v1338 = vpop.trf.xlu0
        %v1339 = vpop.trf.xlu0
        %v1340 = vpop.trf.xlu0
        %v1341 = vpop.trf.xlu0
        %v1342 = vpop.trf.xlu0
        %v1343 = vpop.trf.xlu0
        %v1344 = vpop.trf.xlu0
        %v1345 = vpop.trf.xlu0
        %v1346 = vpop.trf.xlu0
        %v1347 = vpop.trf.xlu0
        %v1348 = vpop.trf.xlu0
        %v1349 = vpop.trf.xlu0
        %v1350 = vpop.trf.xlu0
        %v1351 = vpop.trf.xlu0
        %v1352 = vpop.trf.xlu0
        %vm1353 = vcmask 523264
        %v1355 = vsel %vm1353, %v1337, 0
        %v1358 = vsel %vm1353, %v1338, 0
        %v1361 = vsel %vm1353, %v1339, 0
        %v1364 = vsel %vm1353, %v1340, 0
        %v1367 = vsel %vm1353, %v1341, 0
        %v1370 = vsel %vm1353, %v1342, 0
        %v1373 = vsel %vm1353, %v1343, 0
        %v1376 = vsel %vm1353, %v1344, 0
        %v1379 = vsel %vm1353, %v1345, 0
        %v1382 = vsel %vm1353, %v1346, 0
        %v1385 = vsel %vm1353, %v1347, 0
        %v1388 = vsel %vm1353, %v1348, 0
        %v1391 = vsel %vm1353, %v1349, 0
        %v1394 = vsel %vm1353, %v1350, 0
        %v1397 = vsel %vm1353, %v1351, 0
        %v1400 = vsel %vm1353, %v1352, 0
        %1402 = vmatpush.msra.mxu0 0.0
        %1403 = vmatpush.msra.mxu0 0.0
        %1404 = vmatpush.msra.mxu0 0.0
        %1405 = vmatpush.msra.mxu0 0.0
        %1406 = vmatpush.msra.mxu0 0.0
        %1407 = vmatpush.msra.mxu0 0.0
        %1408 = vmatpush.msra.mxu0 0.0
        %1409 = vmatpush.msra.mxu0 0.0
        %1410 = vmatpush.msra.mxu0 %v394
        %1411 = vmatpush.msra.mxu0 %v392
        %1412 = vmatpush.msra.mxu0 %v390
        %1413 = vmatpush.msra.mxu0 %v388
        %1414 = vmatpush.msra.mxu0 %v386
        %1415 = vmatpush.msra.mxu0 %v384
        %1416 = vmatpush.msra.mxu0 %v382
        %1417 = vmatpush.msra.mxu0 %v380
        %1418 = vmatmul.f32.gmra.mxu0 %v1355
        %v1419 = vpop.f32.mrf.mxu0
        %v1420 = vadd.f32 0.0, %v1419
        %1421 = vmatmul.f32.gmra.mxu0 %v1358
        %v1422 = vpop.f32.mrf.mxu0
        %v1423 = vadd.f32 0.0, %v1422
        %1424 = vmatmul.f32.gmra.mxu0 %v1361
        %v1425 = vpop.f32.mrf.mxu0
        %v1426 = vadd.f32 0.0, %v1425
        %1427 = vmatmul.f32.gmra.mxu0 %v1364
        %v1428 = vpop.f32.mrf.mxu0
        %v1429 = vadd.f32 0.0, %v1428
        %1430 = vmatmul.f32.gmra.mxu0 %v1367
        %v1431 = vpop.f32.mrf.mxu0
        %v1432 = vadd.f32 0.0, %v1431
        %1433 = vmatmul.f32.gmra.mxu0 %v1370
        %v1434 = vpop.f32.mrf.mxu0
        %v1435 = vadd.f32 0.0, %v1434
        %1436 = vmatmul.f32.gmra.mxu0 %v1373
        %v1437 = vpop.f32.mrf.mxu0
        %v1438 = vadd.f32 0.0, %v1437
        %1439 = vmatmul.f32.gmra.mxu0 %v1376
        %v1440 = vpop.f32.mrf.mxu0
        %v1441 = vadd.f32 0.0, %v1440
        %1442 = vmatmul.f32.gmra.mxu0 %v1379
        %v1443 = vpop.f32.mrf.mxu0
        %v1444 = vadd.f32 0.0, %v1443
        %1445 = vmatmul.f32.gmra.mxu0 %v1382
        %v1446 = vpop.f32.mrf.mxu0
        %v1447 = vadd.f32 0.0, %v1446
        %1448 = vmatmul.f32.gmra.mxu0 %v1385
        %v1449 = vpop.f32.mrf.mxu0
        %v1450 = vadd.f32 0.0, %v1449
        %1451 = vmatmul.f32.gmra.mxu0 %v1388
        %v1452 = vpop.f32.mrf.mxu0
        %v1453 = vadd.f32 0.0, %v1452
        %1454 = vmatmul.f32.gmra.mxu0 %v1391
        %v1455 = vpop.f32.mrf.mxu0
        %v1456 = vadd.f32 0.0, %v1455
        %1457 = vmatmul.f32.gmra.mxu0 %v1394
        %v1458 = vpop.f32.mrf.mxu0
        %v1459 = vadd.f32 0.0, %v1458
        %1460 = vmatmul.f32.gmra.mxu0 %v1397
        %v1461 = vpop.f32.mrf.mxu0
        %v1462 = vadd.f32 0.0, %v1461
        %1463 = vmatmul.f32.gmra.mxu0 %v1400
        %v1464 = vpop.f32.mrf.mxu0
        %v1465 = vadd.f32 0.0, %v1464
        %1466 = vdwg.mxu0
        %1467 = vmatpush.msra.mxu0 %v1465
        %1468 = vmatpush.msra.mxu0 %v1462
        %1469 = vmatpush.msra.mxu0 %v1459
        %1470 = vmatpush.msra.mxu0 %v1456
        %1471 = vmatpush.msra.mxu0 %v1453
        %1472 = vmatpush.msra.mxu0 %v1450
        %1473 = vmatpush.msra.mxu0 %v1447
        %1474 = vmatpush.msra.mxu0 %v1444
        %1475 = vmatpush.msra.mxu0 %v1441
        %1476 = vmatpush.msra.mxu0 %v1438
        %1477 = vmatpush.msra.mxu0 %v1435
        %1478 = vmatpush.msra.mxu0 %v1432
        %1479 = vmatpush.msra.mxu0 %v1429
        %1480 = vmatpush.msra.mxu0 %v1426
        %1481 = vmatpush.msra.mxu0 %v1423
        %1482 = vmatpush.msra.mxu0 %v1420
        %1483 = vmatmul.f32.gmra.mxu0 %v1273
        %v1484 = vpop.f32.mrf.mxu0
        %v1485 = vadd.f32 0.0, %v1484
        %1486 = vmatmul.f32.gmra.mxu0 %v1274
        %v1487 = vpop.f32.mrf.mxu0
        %v1488 = vadd.f32 0.0, %v1487
        %1489 = vmatmul.f32.gmra.mxu0 %v1275
        %v1490 = vpop.f32.mrf.mxu0
        %v1491 = vadd.f32 0.0, %v1490
        %1492 = vmatmul.f32.gmra.mxu0 %v1276
        %v1493 = vpop.f32.mrf.mxu0
        %v1494 = vadd.f32 0.0, %v1493
        %1495 = vmatmul.f32.gmra.mxu0 %v1277
        %v1496 = vpop.f32.mrf.mxu0
        %v1497 = vadd.f32 0.0, %v1496
        %1498 = vmatmul.f32.gmra.mxu0 %v1278
        %v1499 = vpop.f32.mrf.mxu0
        %v1500 = vadd.f32 0.0, %v1499
        %1501 = vmatmul.f32.gmra.mxu0 %v1279
        %v1502 = vpop.f32.mrf.mxu0
        %v1503 = vadd.f32 0.0, %v1502
        %1504 = vmatmul.f32.gmra.mxu0 %v1280
        %v1505 = vpop.f32.mrf.mxu0
        %v1506 = vadd.f32 0.0, %v1505
        %1507 = vdwg.mxu0
        %v1508 = vmul.f32 %v1135, 0.015625
        %v1509 = vmul.f32 %v1150, 0.015625
        %v1510 = vmul.f32 %v1165, 0.015625
        %v1511 = vmul.f32 %v1180, 0.015625
        %v1512 = vmul.f32 %v1195, 0.015625
        %v1513 = vmul.f32 %v1210, 0.015625
        %v1514 = vmul.f32 %v1225, 0.015625
        %v1515 = vmul.f32 %v1240, 0.015625
        %v1516 = vmul.f32 %v1485, %v1508
        %v1517 = vmul.f32 %v1488, %v1509
        %v1518 = vmul.f32 %v1491, %v1510
        %v1519 = vmul.f32 %v1494, %v1511
        %v1520 = vmul.f32 %v1497, %v1512
        %v1521 = vmul.f32 %v1500, %v1513
        %v1522 = vmul.f32 %v1503, %v1514
        %v1523 = vmul.f32 %v1506, %v1515
        %v1524 = vmul.f32 %v927, %v1088
        %v1525 = vmul.f32 %v929, %v1088
        %v1526 = vmul.f32 %v931, %v1088
        %v1527 = vmul.f32 %v933, %v1088
        %v1528 = vmul.f32 %v935, %v1088
        %v1529 = vmul.f32 %v937, %v1088
        %v1530 = vmul.f32 %v939, %v1088
        %v1531 = vmul.f32 %v941, %v1088
        %1532 = vadd.xlane.f32.xlu0 %v1524
        %v1533 = vpop.xlane.xlu0 %1532
        %1534 = vadd.xlane.f32.xlu0 %v1525
        %v1535 = vpop.xlane.xlu0 %1534
        %1536 = vadd.xlane.f32.xlu0 %v1526
        %v1537 = vpop.xlane.xlu0 %1536
        %1538 = vadd.xlane.f32.xlu0 %v1527
        %v1539 = vpop.xlane.xlu0 %1538
        %1540 = vadd.xlane.f32.xlu0 %v1528
        %v1541 = vpop.xlane.xlu0 %1540
        %1542 = vadd.xlane.f32.xlu0 %v1529
        %v1543 = vpop.xlane.xlu0 %1542
        %1544 = vadd.xlane.f32.xlu0 %v1530
        %v1545 = vpop.xlane.xlu0 %1544
        %1546 = vadd.xlane.f32.xlu0 %v1531
        %v1547 = vpop.xlane.xlu0 %1546
        %v1548 = vadd.f32 %v1533, 1e-06
        %v1549 = vadd.f32 %v1535, 1e-06
        %v1550 = vadd.f32 %v1537, 1e-06
        %v1551 = vadd.f32 %v1539, 1e-06
        %v1552 = vadd.f32 %v1541, 1e-06
        %v1553 = vadd.f32 %v1543, 1e-06
        %v1554 = vadd.f32 %v1545, 1e-06
        %v1555 = vadd.f32 %v1547, 1e-06
        %v1556 = vrcp.pop %v1548
        %v1557 = vmul.f32 %v1548, %v1556
        %v1558 = vsub.f32 1.0, %v1557
        %v1559 = vmul.f32 %v1556, %v1558
        %v1560 = vadd.f32 %v1556, %v1559
        %vm1561 = vweird.f32 %v1548
        %vm1562 = vweird.f32 %v1556
        %vm1563 = vmor %vm1561, %vm1562
        %v1564 = vsel %vm1563, %v1556, %v1560
        %v1565 = vand.u32 2147483647, %v1548
        %vm1566 = vcmp.eq.f32.partialorder %v1565, 8.507059e+37
        %v1567 = vand.u32 %v1548, 2147483648
        %v1568 = vor.u32 1.1754944e-38, %v1567
        %v1569 = vsel %vm1566, %v1568, %v1564
        %v1570 = vmul.f32 1.0, %v1569
        %v1571 = vrcp.pop %v1549
        %v1572 = vmul.f32 %v1549, %v1571
        %v1573 = vsub.f32 1.0, %v1572
        %v1574 = vmul.f32 %v1571, %v1573
        %v1575 = vadd.f32 %v1571, %v1574
        %vm1576 = vweird.f32 %v1549
        %vm1577 = vweird.f32 %v1571
        %vm1578 = vmor %vm1576, %vm1577
        %v1579 = vsel %vm1578, %v1571, %v1575
        %v1580 = vand.u32 2147483647, %v1549
        %vm1581 = vcmp.eq.f32.partialorder %v1580, 8.507059e+37
        %v1582 = vand.u32 %v1549, 2147483648
        %v1583 = vor.u32 1.1754944e-38, %v1582
        %v1584 = vsel %vm1581, %v1583, %v1579
        %v1585 = vmul.f32 1.0, %v1584
        %v1586 = vrcp.pop %v1550
        %v1587 = vmul.f32 %v1550, %v1586
        %v1588 = vsub.f32 1.0, %v1587
        %v1589 = vmul.f32 %v1586, %v1588
        %v1590 = vadd.f32 %v1586, %v1589
        %vm1591 = vweird.f32 %v1550
        %vm1592 = vweird.f32 %v1586
        %vm1593 = vmor %vm1591, %vm1592
        %v1594 = vsel %vm1593, %v1586, %v1590
        %v1595 = vand.u32 2147483647, %v1550
        %vm1596 = vcmp.eq.f32.partialorder %v1595, 8.507059e+37
        %v1597 = vand.u32 %v1550, 2147483648
        %v1598 = vor.u32 1.1754944e-38, %v1597
        %v1599 = vsel %vm1596, %v1598, %v1594
        %v1600 = vmul.f32 1.0, %v1599
        %v1601 = vrcp.pop %v1551
        %v1602 = vmul.f32 %v1551, %v1601
        %v1603 = vsub.f32 1.0, %v1602
        %v1604 = vmul.f32 %v1601, %v1603
        %v1605 = vadd.f32 %v1601, %v1604
        %vm1606 = vweird.f32 %v1551
        %vm1607 = vweird.f32 %v1601
        %vm1608 = vmor %vm1606, %vm1607
        %v1609 = vsel %vm1608, %v1601, %v1605
        %v1610 = vand.u32 2147483647, %v1551
        %vm1611 = vcmp.eq.f32.partialorder %v1610, 8.507059e+37
        %v1612 = vand.u32 %v1551, 2147483648
        %v1613 = vor.u32 1.1754944e-38, %v1612
        %v1614 = vsel %vm1611, %v1613, %v1609
        %v1615 = vmul.f32 1.0, %v1614
        %v1616 = vrcp.pop %v1552
        %v1617 = vmul.f32 %v1552, %v1616
        %v1618 = vsub.f32 1.0, %v1617
        %v1619 = vmul.f32 %v1616, %v1618
        %v1620 = vadd.f32 %v1616, %v1619
        %vm1621 = vweird.f32 %v1552
        %vm1622 = vweird.f32 %v1616
        %vm1623 = vmor %vm1621, %vm1622
        %v1624 = vsel %vm1623, %v1616, %v1620
        %v1625 = vand.u32 2147483647, %v1552
        %vm1626 = vcmp.eq.f32.partialorder %v1625, 8.507059e+37
        %v1627 = vand.u32 %v1552, 2147483648
        %v1628 = vor.u32 1.1754944e-38, %v1627
        %v1629 = vsel %vm1626, %v1628, %v1624
        %v1630 = vmul.f32 1.0, %v1629
        %v1631 = vrcp.pop %v1553
        %v1632 = vmul.f32 %v1553, %v1631
        %v1633 = vsub.f32 1.0, %v1632
        %v1634 = vmul.f32 %v1631, %v1633
        %v1635 = vadd.f32 %v1631, %v1634
        %vm1636 = vweird.f32 %v1553
        %vm1637 = vweird.f32 %v1631
        %vm1638 = vmor %vm1636, %vm1637
        %v1639 = vsel %vm1638, %v1631, %v1635
        %v1640 = vand.u32 2147483647, %v1553
        %vm1641 = vcmp.eq.f32.partialorder %v1640, 8.507059e+37
        %v1642 = vand.u32 %v1553, 2147483648
        %v1643 = vor.u32 1.1754944e-38, %v1642
        %v1644 = vsel %vm1641, %v1643, %v1639
        %v1645 = vmul.f32 1.0, %v1644
        %v1646 = vrcp.pop %v1554
        %v1647 = vmul.f32 %v1554, %v1646
        %v1648 = vsub.f32 1.0, %v1647
        %v1649 = vmul.f32 %v1646, %v1648
        %v1650 = vadd.f32 %v1646, %v1649
        %vm1651 = vweird.f32 %v1554
        %vm1652 = vweird.f32 %v1646
        %vm1653 = vmor %vm1651, %vm1652
        %v1654 = vsel %vm1653, %v1646, %v1650
        %v1655 = vand.u32 2147483647, %v1554
        %vm1656 = vcmp.eq.f32.partialorder %v1655, 8.507059e+37
        %v1657 = vand.u32 %v1554, 2147483648
        %v1658 = vor.u32 1.1754944e-38, %v1657
        %v1659 = vsel %vm1656, %v1658, %v1654
        %v1660 = vmul.f32 1.0, %v1659
        %v1661 = vrcp.pop %v1555
        %v1662 = vmul.f32 %v1555, %v1661
        %v1663 = vsub.f32 1.0, %v1662
        %v1664 = vmul.f32 %v1661, %v1663
        %v1665 = vadd.f32 %v1661, %v1664
        %vm1666 = vweird.f32 %v1555
        %vm1667 = vweird.f32 %v1661
        %vm1668 = vmor %vm1666, %vm1667
        %v1669 = vsel %vm1668, %v1661, %v1665
        %v1670 = vand.u32 2147483647, %v1555
        %vm1671 = vcmp.eq.f32.partialorder %v1670, 8.507059e+37
        %v1672 = vand.u32 %v1555, 2147483648
        %v1673 = vor.u32 1.1754944e-38, %v1672
        %v1674 = vsel %vm1671, %v1673, %v1669
        %v1675 = vmul.f32 1.0, %v1674
        %v1676 = vmul.f32 %v1023, %v927
        %v1677 = vmul.f32 %v1025, %v929
        %v1678 = vmul.f32 %v1027, %v931
        %v1679 = vmul.f32 %v1029, %v933
        %v1680 = vmul.f32 %v1031, %v935
        %v1681 = vmul.f32 %v1033, %v937
        %v1682 = vmul.f32 %v1035, %v939
        %v1683 = vmul.f32 %v1037, %v941
        %1684 = vrot.lane.b32.xlu0 %v927, 64
        %v1685 = vpop.permute.xlu0 %1684
        %1686 = vrot.lane.b32.xlu0 %v929, 64
        %v1687 = vpop.permute.xlu0 %1686
        %1688 = vrot.lane.b32.xlu0 %v931, 64
        %v1689 = vpop.permute.xlu0 %1688
        %1690 = vrot.lane.b32.xlu0 %v933, 64
        %v1691 = vpop.permute.xlu0 %1690
        %1692 = vrot.lane.b32.xlu0 %v935, 64
        %v1693 = vpop.permute.xlu0 %1692
        %1694 = vrot.lane.b32.xlu0 %v937, 64
        %v1695 = vpop.permute.xlu0 %1694
        %1696 = vrot.lane.b32.xlu0 %v939, 64
        %v1697 = vpop.permute.xlu0 %1696
        %1698 = vrot.lane.b32.xlu0 %v941, 64
        %v1699 = vpop.permute.xlu0 %1698
        %v1700 = vmul.f32 %v1039, %v1685
        %v1701 = vmul.f32 %v1041, %v1687
        %v1702 = vmul.f32 %v1043, %v1689
        %v1703 = vmul.f32 %v1045, %v1691
        %v1704 = vmul.f32 %v1047, %v1693
        %v1705 = vmul.f32 %v1049, %v1695
        %v1706 = vmul.f32 %v1051, %v1697
        %v1707 = vmul.f32 %v1053, %v1699
        %v1708 = vadd.f32 %v1676, %v1700
        %v1709 = vadd.f32 %v1677, %v1701
        %v1710 = vadd.f32 %v1678, %v1702
        %v1711 = vadd.f32 %v1679, %v1703
        %v1712 = vadd.f32 %v1680, %v1704
        %v1713 = vadd.f32 %v1681, %v1705
        %v1714 = vadd.f32 %v1682, %v1706
        %v1715 = vadd.f32 %v1683, %v1707
        %v1716 = vmul.f32 %v1023, %v1007
        %v1717 = vmul.f32 %v1025, %v1009
        %v1718 = vmul.f32 %v1027, %v1011
        %v1719 = vmul.f32 %v1029, %v1013
        %v1720 = vmul.f32 %v1031, %v1015
        %v1721 = vmul.f32 %v1033, %v1017
        %v1722 = vmul.f32 %v1035, %v1019
        %v1723 = vmul.f32 %v1037, %v1021
        %1724 = vrot.lane.b32.xlu0 %v1007, 64
        %v1725 = vpop.permute.xlu0 %1724
        %1726 = vrot.lane.b32.xlu0 %v1009, 64
        %v1727 = vpop.permute.xlu0 %1726
        %1728 = vrot.lane.b32.xlu0 %v1011, 64
        %v1729 = vpop.permute.xlu0 %1728
        %1730 = vrot.lane.b32.xlu0 %v1013, 64
        %v1731 = vpop.permute.xlu0 %1730
        %1732 = vrot.lane.b32.xlu0 %v1015, 64
        %v1733 = vpop.permute.xlu0 %1732
        %1734 = vrot.lane.b32.xlu0 %v1017, 64
        %v1735 = vpop.permute.xlu0 %1734
        %1736 = vrot.lane.b32.xlu0 %v1019, 64
        %v1737 = vpop.permute.xlu0 %1736
        %1738 = vrot.lane.b32.xlu0 %v1021, 64
        %v1739 = vpop.permute.xlu0 %1738
        %v1740 = vmul.f32 %v1039, %v1725
        %v1741 = vmul.f32 %v1041, %v1727
        %v1742 = vmul.f32 %v1043, %v1729
        %v1743 = vmul.f32 %v1045, %v1731
        %v1744 = vmul.f32 %v1047, %v1733
        %v1745 = vmul.f32 %v1049, %v1735
        %v1746 = vmul.f32 %v1051, %v1737
        %v1747 = vmul.f32 %v1053, %v1739
        %v1748 = vadd.f32 %v1716, %v1740
        %v1749 = vadd.f32 %v1717, %v1741
        %v1750 = vadd.f32 %v1718, %v1742
        %v1751 = vadd.f32 %v1719, %v1743
        %v1752 = vadd.f32 %v1720, %v1744
        %v1753 = vadd.f32 %v1721, %v1745
        %v1754 = vadd.f32 %v1722, %v1746
        %v1755 = vadd.f32 %v1723, %v1747
        %1756 = vxpose.xlu0.b32.start [1/16] %v1748, 128
        %1757 = vxpose.xlu0.b32.cont [2/16] %v1749, 128
        %1758 = vxpose.xlu0.b32.cont [3/16] %v1750, 128
        %1759 = vxpose.xlu0.b32.cont [4/16] %v1751, 128
        %1760 = vxpose.xlu0.b32.cont [5/16] %v1752, 128
        %1761 = vxpose.xlu0.b32.cont [6/16] %v1753, 128
        %1762 = vxpose.xlu0.b32.cont [7/16] %v1754, 128
        %1763 = vxpose.xlu0.b32.cont [8/16] %v1755, 128
        %1764 = vxpose.xlu0.b32.cont [9/16] 0.0, 128
        %1765 = vxpose.xlu0.b32.cont [10/16] 0.0, 128
        %1766 = vxpose.xlu0.b32.cont [11/16] 0.0, 128
        %1767 = vxpose.xlu0.b32.cont [12/16] 0.0, 128
        %1768 = vxpose.xlu0.b32.cont [13/16] 0.0, 128
        %1769 = vxpose.xlu0.b32.cont [14/16] 0.0, 128
        %1770 = vxpose.xlu0.b32.cont [15/16] 0.0, 128
        %1771 = vxpose.xlu0.b32.end [16/16] 0.0, 128
        %v1772 = vpop.trf.xlu0
        %v1773 = vpop.trf.xlu0
        %v1774 = vpop.trf.xlu0
        %v1775 = vpop.trf.xlu0
        %v1776 = vpop.trf.xlu0
        %v1777 = vpop.trf.xlu0
        %v1778 = vpop.trf.xlu0
        %v1779 = vpop.trf.xlu0
        %v1780 = vpop.trf.xlu0
        %v1781 = vpop.trf.xlu0
        %v1782 = vpop.trf.xlu0
        %v1783 = vpop.trf.xlu0
        %v1784 = vpop.trf.xlu0
        %v1785 = vpop.trf.xlu0
        %v1786 = vpop.trf.xlu0
        %v1787 = vpop.trf.xlu0
        %v1789 = vsel %vm1353, %v1772, 0
        %v1792 = vsel %vm1353, %v1773, 0
        %v1795 = vsel %vm1353, %v1774, 0
        %v1798 = vsel %vm1353, %v1775, 0
        %v1801 = vsel %vm1353, %v1776, 0
        %v1804 = vsel %vm1353, %v1777, 0
        %v1807 = vsel %vm1353, %v1778, 0
        %v1810 = vsel %vm1353, %v1779, 0
        %v1813 = vsel %vm1353, %v1780, 0
        %v1816 = vsel %vm1353, %v1781, 0
        %v1819 = vsel %vm1353, %v1782, 0
        %v1822 = vsel %vm1353, %v1783, 0
        %v1825 = vsel %vm1353, %v1784, 0
        %v1828 = vsel %vm1353, %v1785, 0
        %v1831 = vsel %vm1353, %v1786, 0
        %v1834 = vsel %vm1353, %v1787, 0
        %1836 = vmatpush.msra.mxu0 0.0
        %1837 = vmatpush.msra.mxu0 0.0
        %1838 = vmatpush.msra.mxu0 0.0
        %1839 = vmatpush.msra.mxu0 0.0
        %1840 = vmatpush.msra.mxu0 0.0
        %1841 = vmatpush.msra.mxu0 0.0
        %1842 = vmatpush.msra.mxu0 0.0
        %1843 = vmatpush.msra.mxu0 0.0
        %1844 = vmatpush.msra.mxu0 %v395
        %1845 = vmatpush.msra.mxu0 %v393
        %1846 = vmatpush.msra.mxu0 %v391
        %1847 = vmatpush.msra.mxu0 %v389
        %1848 = vmatpush.msra.mxu0 %v387
        %1849 = vmatpush.msra.mxu0 %v385
        %1850 = vmatpush.msra.mxu0 %v383
        %1851 = vmatpush.msra.mxu0 %v381
        %1852 = vmatmul.f32.gmra.mxu0 %v1789
        %v1853 = vpop.f32.mrf.mxu0
        %v1854 = vadd.f32 0.0, %v1853
        %1855 = vmatmul.f32.gmra.mxu0 %v1792
        %v1856 = vpop.f32.mrf.mxu0
        %v1857 = vadd.f32 0.0, %v1856
        %1858 = vmatmul.f32.gmra.mxu0 %v1795
        %v1859 = vpop.f32.mrf.mxu0
        %v1860 = vadd.f32 0.0, %v1859
        %1861 = vmatmul.f32.gmra.mxu0 %v1798
        %v1862 = vpop.f32.mrf.mxu0
        %v1863 = vadd.f32 0.0, %v1862
        %1864 = vmatmul.f32.gmra.mxu0 %v1801
        %v1865 = vpop.f32.mrf.mxu0
        %v1866 = vadd.f32 0.0, %v1865
        %1867 = vmatmul.f32.gmra.mxu0 %v1804
        %v1868 = vpop.f32.mrf.mxu0
        %v1869 = vadd.f32 0.0, %v1868
        %1870 = vmatmul.f32.gmra.mxu0 %v1807
        %v1871 = vpop.f32.mrf.mxu0
        %v1872 = vadd.f32 0.0, %v1871
        %1873 = vmatmul.f32.gmra.mxu0 %v1810
        %v1874 = vpop.f32.mrf.mxu0
        %v1875 = vadd.f32 0.0, %v1874
        %1876 = vmatmul.f32.gmra.mxu0 %v1813
        %v1877 = vpop.f32.mrf.mxu0
        %v1878 = vadd.f32 0.0, %v1877
        %1879 = vmatmul.f32.gmra.mxu0 %v1816
        %v1880 = vpop.f32.mrf.mxu0
        %v1881 = vadd.f32 0.0, %v1880
        %1882 = vmatmul.f32.gmra.mxu0 %v1819
        %v1883 = vpop.f32.mrf.mxu0
        %v1884 = vadd.f32 0.0, %v1883
        %1885 = vmatmul.f32.gmra.mxu0 %v1822
        %v1886 = vpop.f32.mrf.mxu0
        %v1887 = vadd.f32 0.0, %v1886
        %1888 = vmatmul.f32.gmra.mxu0 %v1825
        %v1889 = vpop.f32.mrf.mxu0
        %v1890 = vadd.f32 0.0, %v1889
        %1891 = vmatmul.f32.gmra.mxu0 %v1828
        %v1892 = vpop.f32.mrf.mxu0
        %v1893 = vadd.f32 0.0, %v1892
        %1894 = vmatmul.f32.gmra.mxu0 %v1831
        %v1895 = vpop.f32.mrf.mxu0
        %v1896 = vadd.f32 0.0, %v1895
        %1897 = vmatmul.f32.gmra.mxu0 %v1834
        %v1898 = vpop.f32.mrf.mxu0
        %v1899 = vadd.f32 0.0, %v1898
        %1900 = vdwg.mxu0
        %1901 = vmatpush.msra.mxu0 %v1899
        %1902 = vmatpush.msra.mxu0 %v1896
        %1903 = vmatpush.msra.mxu0 %v1893
        %1904 = vmatpush.msra.mxu0 %v1890
        %1905 = vmatpush.msra.mxu0 %v1887
        %1906 = vmatpush.msra.mxu0 %v1884
        %1907 = vmatpush.msra.mxu0 %v1881
        %1908 = vmatpush.msra.mxu0 %v1878
        %1909 = vmatpush.msra.mxu0 %v1875
        %1910 = vmatpush.msra.mxu0 %v1872
        %1911 = vmatpush.msra.mxu0 %v1869
        %1912 = vmatpush.msra.mxu0 %v1866
        %1913 = vmatpush.msra.mxu0 %v1863
        %1914 = vmatpush.msra.mxu0 %v1860
        %1915 = vmatpush.msra.mxu0 %v1857
        %1916 = vmatpush.msra.mxu0 %v1854
        %1917 = vmatmul.f32.gmra.mxu0 %v1708
        %v1918 = vpop.f32.mrf.mxu0
        %v1919 = vadd.f32 0.0, %v1918
        %1920 = vmatmul.f32.gmra.mxu0 %v1709
        %v1921 = vpop.f32.mrf.mxu0
        %v1922 = vadd.f32 0.0, %v1921
        %1923 = vmatmul.f32.gmra.mxu0 %v1710
        %v1924 = vpop.f32.mrf.mxu0
        %v1925 = vadd.f32 0.0, %v1924
        %1926 = vmatmul.f32.gmra.mxu0 %v1711
        %v1927 = vpop.f32.mrf.mxu0
        %v1928 = vadd.f32 0.0, %v1927
        %1929 = vmatmul.f32.gmra.mxu0 %v1712
        %v1930 = vpop.f32.mrf.mxu0
        %v1931 = vadd.f32 0.0, %v1930
        %1932 = vmatmul.f32.gmra.mxu0 %v1713
        %v1933 = vpop.f32.mrf.mxu0
        %v1934 = vadd.f32 0.0, %v1933
        %1935 = vmatmul.f32.gmra.mxu0 %v1714
        %v1936 = vpop.f32.mrf.mxu0
        %v1937 = vadd.f32 0.0, %v1936
        %1938 = vmatmul.f32.gmra.mxu0 %v1715
        %v1939 = vpop.f32.mrf.mxu0
        %v1940 = vadd.f32 0.0, %v1939
        %1941 = vdwg.mxu0
        %v1942 = vmul.f32 %v1570, 0.015625
        %v1943 = vmul.f32 %v1585, 0.015625
        %v1944 = vmul.f32 %v1600, 0.015625
        %v1945 = vmul.f32 %v1615, 0.015625
        %v1946 = vmul.f32 %v1630, 0.015625
        %v1947 = vmul.f32 %v1645, 0.015625
        %v1948 = vmul.f32 %v1660, 0.015625
        %v1949 = vmul.f32 %v1675, 0.015625
        %v1950 = vmul.f32 %v1919, %v1942
        %v1951 = vmul.f32 %v1922, %v1943
        %v1952 = vmul.f32 %v1925, %v1944
        %v1953 = vmul.f32 %v1928, %v1945
        %v1954 = vmul.f32 %v1931, %v1946
        %v1955 = vmul.f32 %v1934, %v1947
        %v1956 = vmul.f32 %v1937, %v1948
        %v1957 = vmul.f32 %v1940, %v1949
        %v1958 = vld [vmem:[#allocation11] sm:$0xff]
        %v1959 = vld [vmem:[#allocation11 + $0x8] sm:$0xff]
        %v1960 = vld [vmem:[#allocation11 + $0x10] sm:$0x1]
        %v1961 = vld [vmem:[#allocation11 + $0x18] sm:$0x1]
        %v1962 = vld [vmem:[%s6] sm:$0x3]
        %v1963 = vlaneseq
        %v1964 = vshrl.u32 %v1963, 7
        %v1965 = vadd.s32 %v1964, 8
        %v1966 = vadd.s32 %v1964, 16
        %v1967 = vadd.s32 %v1964, 24
        %v1968 = vadd.s32 %v1964, 32
        %v1969 = vadd.s32 %v1964, 40
        %v1970 = vadd.s32 %v1964, 48
        %v1971 = vadd.s32 %v1964, 56
        %vm1972 = vcmp.lt.s32.totalorder %v1964, 0
        %v1973 = vsub.s32 0, %v1964
        %v1974 = vsel %vm1972, %v1973, %v1964
        %v1975 = vshrl.u32 %v1974, 3
        %v1976 = vand.u32 %v1974, 7
        %v1977 = vsub.s32 0, %v1976
        %v1978 = vsel %vm1972, %v1977, %v1976
        %vm1979 = vcmp.lt.s32.totalorder %v1965, 0
        %v1980 = vsub.s32 0, %v1965
        %v1981 = vsel %vm1979, %v1980, %v1965
        %v1982 = vshrl.u32 %v1981, 3
        %v1983 = vand.u32 %v1981, 7
        %v1984 = vsub.s32 0, %v1983
        %v1985 = vsel %vm1979, %v1984, %v1983
        %vm1986 = vcmp.lt.s32.totalorder %v1966, 0
        %v1987 = vsub.s32 0, %v1966
        %v1988 = vsel %vm1986, %v1987, %v1966
        %v1989 = vshrl.u32 %v1988, 3
        %v1990 = vand.u32 %v1988, 7
        %v1991 = vsub.s32 0, %v1990
        %v1992 = vsel %vm1986, %v1991, %v1990
        %vm1993 = vcmp.lt.s32.totalorder %v1967, 0
        %v1994 = vsub.s32 0, %v1967
        %v1995 = vsel %vm1993, %v1994, %v1967
        %v1996 = vshrl.u32 %v1995, 3
        %v1997 = vand.u32 %v1995, 7
        %v1998 = vsub.s32 0, %v1997
        %v1999 = vsel %vm1993, %v1998, %v1997
        %vm2000 = vcmp.lt.s32.totalorder %v1968, 0
        %v2001 = vsub.s32 0, %v1968
        %v2002 = vsel %vm2000, %v2001, %v1968
        %v2003 = vshrl.u32 %v2002, 3
        %v2004 = vand.u32 %v2002, 7
        %v2005 = vsub.s32 0, %v2004
        %v2006 = vsel %vm2000, %v2005, %v2004
        %vm2007 = vcmp.lt.s32.totalorder %v1969, 0
        %v2008 = vsub.s32 0, %v1969
        %v2009 = vsel %vm2007, %v2008, %v1969
        %v2010 = vshrl.u32 %v2009, 3
        %v2011 = vand.u32 %v2009, 7
        %v2012 = vsub.s32 0, %v2011
        %v2013 = vsel %vm2007, %v2012, %v2011
        %vm2014 = vcmp.lt.s32.totalorder %v1970, 0
        %v2015 = vsub.s32 0, %v1970
        %v2016 = vsel %vm2014, %v2015, %v1970
        %v2017 = vshrl.u32 %v2016, 3
        %v2018 = vand.u32 %v2016, 7
        %v2019 = vsub.s32 0, %v2018
        %v2020 = vsel %vm2014, %v2019, %v2018
        %vm2021 = vcmp.lt.s32.totalorder %v1971, 0
        %v2022 = vsub.s32 0, %v1971
        %v2023 = vsel %vm2021, %v2022, %v1971
        %v2024 = vshrl.u32 %v2023, 3
        %v2025 = vand.u32 %v2023, 7
        %v2026 = vsub.s32 0, %v2025
        %v2027 = vsel %vm2021, %v2026, %v2025
        %vm2028 = vcmp.ne.s32.totalorder %v1978, 0
        %vm2029 = vcmp.ne.s32.totalorder %v1985, 0
        %vm2030 = vcmp.ne.s32.totalorder %v1992, 0
        %vm2031 = vcmp.ne.s32.totalorder %v1999, 0
        %vm2032 = vcmp.ne.s32.totalorder %v2006, 0
        %vm2033 = vcmp.ne.s32.totalorder %v2013, 0
        %vm2034 = vcmp.ne.s32.totalorder %v2020, 0
        %vm2035 = vcmp.ne.s32.totalorder %v2027, 0
        %vm2036 = vcmp.lt.s32.totalorder %v1978, 0
        %vm2037 = vcmp.lt.s32.totalorder %v1985, 0
        %vm2038 = vcmp.lt.s32.totalorder %v1992, 0
        %vm2039 = vcmp.lt.s32.totalorder %v1999, 0
        %vm2040 = vcmp.lt.s32.totalorder %v2006, 0
        %vm2041 = vcmp.lt.s32.totalorder %v2013, 0
        %vm2042 = vcmp.lt.s32.totalorder %v2020, 0
        %vm2043 = vcmp.lt.s32.totalorder %v2027, 0
        %vm2044 = vmand %vm2036, %vm2028
        %vm2045 = vmand %vm2037, %vm2029
        %vm2046 = vmand %vm2038, %vm2030
        %vm2047 = vmand %vm2039, %vm2031
        %vm2048 = vmand %vm2040, %vm2032
        %vm2049 = vmand %vm2041, %vm2033
        %vm2050 = vmand %vm2042, %vm2034
        %vm2051 = vmand %vm2043, %vm2035
        %v2052 = vadd.s32 %v1978, 8
        %v2053 = vadd.s32 %v1985, 8
        %v2054 = vadd.s32 %v1992, 8
        %v2055 = vadd.s32 %v1999, 8
        %v2056 = vadd.s32 %v2006, 8
        %v2057 = vadd.s32 %v2013, 8
        %v2058 = vadd.s32 %v2020, 8
        %v2059 = vadd.s32 %v2027, 8
        %v2060 = vsel %vm2044, %v2052, %v1978
        %v2061 = vsel %vm2045, %v2053, %v1985
        %v2062 = vsel %vm2046, %v2054, %v1992
        %v2063 = vsel %vm2047, %v2055, %v1999
        %v2064 = vsel %vm2048, %v2056, %v2006
        %v2065 = vsel %vm2049, %v2057, %v2013
        %v2066 = vsel %vm2050, %v2058, %v2020
        %v2067 = vsel %vm2051, %v2059, %v2027
        %vm2068 = vcmp.ne.s32.totalorder %v2060, 0
        %vm2069 = vcmp.ne.s32.totalorder %v2061, 0
        %vm2070 = vcmp.ne.s32.totalorder %v2062, 0
        %vm2071 = vcmp.ne.s32.totalorder %v2063, 0
        %vm2072 = vcmp.ne.s32.totalorder %v2064, 0
        %vm2073 = vcmp.ne.s32.totalorder %v2065, 0
        %vm2074 = vcmp.ne.s32.totalorder %v2066, 0
        %vm2075 = vcmp.ne.s32.totalorder %v2067, 0
        %vm2076 = vcmp.ne.s32.totalorder %v2060, 7
        %vm2077 = vcmp.ne.s32.totalorder %v2061, 7
        %vm2078 = vcmp.ne.s32.totalorder %v2062, 7
        %vm2079 = vcmp.ne.s32.totalorder %v2063, 7
        %vm2080 = vcmp.ne.s32.totalorder %v2064, 7
        %vm2081 = vcmp.ne.s32.totalorder %v2065, 7
        %vm2082 = vcmp.ne.s32.totalorder %v2066, 7
        %vm2083 = vcmp.ne.s32.totalorder %v2067, 7
        %vm2100 = vcmask 1040384
        %v2101 = vrot.slane %v380, 7
        %v2102 = vrot.slane %v381, 7
        %v2103 = vrot.slane %v382, 7
        %v2104 = vsel %vm2100, %v2101, %v2103
        %v2105 = vrot.slane %v383, 7
        %v2106 = vsel %vm2100, %v2102, %v2105
        %v2107 = vrot.slane %v384, 7
        %v2108 = vsel %vm2100, %v2103, %v2107
        %v2109 = vrot.slane %v385, 7
        %v2110 = vsel %vm2100, %v2105, %v2109
        %v2111 = vrot.slane %v386, 7
        %v2112 = vsel %vm2100, %v2107, %v2111
        %v2113 = vrot.slane %v387, 7
        %v2114 = vsel %vm2100, %v2109, %v2113
        %v2115 = vrot.slane %v388, 7
        %v2116 = vsel %vm2100, %v2111, %v2115
        %v2117 = vrot.slane %v389, 7
        %v2118 = vsel %vm2100, %v2113, %v2117
        %v2119 = vrot.slane %v390, 7
        %v2120 = vsel %vm2100, %v2115, %v2119
        %v2121 = vrot.slane %v391, 7
        %v2122 = vsel %vm2100, %v2117, %v2121
        %v2123 = vrot.slane %v392, 7
        %v2124 = vsel %vm2100, %v2119, %v2123
        %v2125 = vrot.slane %v393, 7
        %v2126 = vsel %vm2100, %v2121, %v2125
        %v2127 = vrot.slane %v394, 7
        %v2128 = vsel %vm2100, %v2123, %v2127
        %v2129 = vrot.slane %v395, 7
        %v2130 = vsel %vm2100, %v2125, %v2129
        %v2147 = vsel %vm2100, 0.0, %v2101
        %v2148 = vsel %vm2100, 0.0, %v2102
        %v2149 = vsel %vm2068, 1, 0
        %v2150 = vsel %vm2069, 1, 0
        %v2151 = vsel %vm2070, 1, 0
        %v2152 = vsel %vm2071, 1, 0
        %v2153 = vsel %vm2072, 1, 0
        %v2154 = vsel %vm2073, 1, 0
        %v2155 = vsel %vm2074, 1, 0
        %v2156 = vsel %vm2075, 1, 0
        %vm2157 = vcmp.eq.s32.totalorder %v2149, 1
        %vm2158 = vcmp.eq.s32.totalorder %v2150, 1
        %vm2159 = vcmp.eq.s32.totalorder %v2151, 1
        %vm2160 = vcmp.eq.s32.totalorder %v2152, 1
        %vm2161 = vcmp.eq.s32.totalorder %v2153, 1
        %vm2162 = vcmp.eq.s32.totalorder %v2154, 1
        %vm2163 = vcmp.eq.s32.totalorder %v2155, 1
        %vm2164 = vcmp.eq.s32.totalorder %v2156, 1
        %v2165 = vsel %vm2157, %v2147, 0.0
        %v2166 = vsel %vm2157, %v2148, 0.0
        %v2167 = vsel %vm2158, %v2104, 0.0
        %v2168 = vsel %vm2158, %v2106, 0.0
        %v2169 = vsel %vm2159, %v2108, 0.0
        %v2170 = vsel %vm2159, %v2110, 0.0
        %v2171 = vsel %vm2160, %v2112, 0.0
        %v2172 = vsel %vm2160, %v2114, 0.0
        %v2173 = vsel %vm2161, %v2116, 0.0
        %v2174 = vsel %vm2161, %v2118, 0.0
        %v2175 = vsel %vm2162, %v2120, 0.0
        %v2176 = vsel %vm2162, %v2122, 0.0
        %v2177 = vsel %vm2163, %v2124, 0.0
        %v2178 = vsel %vm2163, %v2126, 0.0
        %v2179 = vsel %vm2164, %v2128, 0.0
        %v2180 = vsel %vm2164, %v2130, 0.0
        %vm2181 = vcmask 1046528
        %v2182 = vrot.slane %v380, 1
        %v2183 = vrot.slane %v382, 1
        %v2184 = vsel %vm2181, %v2182, %v2183
        %v2185 = vrot.slane %v381, 1
        %v2186 = vrot.slane %v383, 1
        %v2187 = vsel %vm2181, %v2185, %v2186
        %v2188 = vrot.slane %v384, 1
        %v2189 = vsel %vm2181, %v2183, %v2188
        %v2190 = vrot.slane %v385, 1
        %v2191 = vsel %vm2181, %v2186, %v2190
        %v2192 = vrot.slane %v386, 1
        %v2193 = vsel %vm2181, %v2188, %v2192
        %v2194 = vrot.slane %v387, 1
        %v2195 = vsel %vm2181, %v2190, %v2194
        %v2196 = vrot.slane %v388, 1
        %v2197 = vsel %vm2181, %v2192, %v2196
        %v2198 = vrot.slane %v389, 1
        %v2199 = vsel %vm2181, %v2194, %v2198
        %v2200 = vrot.slane %v390, 1
        %v2201 = vsel %vm2181, %v2196, %v2200
        %v2202 = vrot.slane %v391, 1
        %v2203 = vsel %vm2181, %v2198, %v2202
        %v2204 = vrot.slane %v392, 1
        %v2205 = vsel %vm2181, %v2200, %v2204
        %v2206 = vrot.slane %v393, 1
        %v2207 = vsel %vm2181, %v2202, %v2206
        %v2208 = vrot.slane %v394, 1
        %v2209 = vsel %vm2181, %v2204, %v2208
        %v2210 = vrot.slane %v395, 1
        %v2211 = vsel %vm2181, %v2206, %v2210
        %v2228 = vsel %vm2181, %v2208, 0.0
        %v2229 = vsel %vm2181, %v2210, 0.0
        %v2230 = vsel %vm2076, 1, 0
        %v2231 = vsel %vm2077, 1, 0
        %v2232 = vsel %vm2078, 1, 0
        %v2233 = vsel %vm2079, 1, 0
        %v2234 = vsel %vm2080, 1, 0
        %v2235 = vsel %vm2081, 1, 0
        %v2236 = vsel %vm2082, 1, 0
        %v2237 = vsel %vm2083, 1, 0
        %vm2238 = vcmp.eq.s32.totalorder %v2230, 1
        %vm2239 = vcmp.eq.s32.totalorder %v2231, 1
        %vm2240 = vcmp.eq.s32.totalorder %v2232, 1
        %vm2241 = vcmp.eq.s32.totalorder %v2233, 1
        %vm2242 = vcmp.eq.s32.totalorder %v2234, 1
        %vm2243 = vcmp.eq.s32.totalorder %v2235, 1
        %vm2244 = vcmp.eq.s32.totalorder %v2236, 1
        %vm2245 = vcmp.eq.s32.totalorder %v2237, 1
        %v2246 = vsel %vm2238, %v2184, 0.0
        %v2247 = vsel %vm2238, %v2187, 0.0
        %v2248 = vsel %vm2239, %v2189, 0.0
        %v2249 = vsel %vm2239, %v2191, 0.0
        %v2250 = vsel %vm2240, %v2193, 0.0
        %v2251 = vsel %vm2240, %v2195, 0.0
        %v2252 = vsel %vm2241, %v2197, 0.0
        %v2253 = vsel %vm2241, %v2199, 0.0
        %v2254 = vsel %vm2242, %v2201, 0.0
        %v2255 = vsel %vm2242, %v2203, 0.0
        %v2256 = vsel %vm2243, %v2205, 0.0
        %v2257 = vsel %vm2243, %v2207, 0.0
        %v2258 = vsel %vm2244, %v2209, 0.0
        %v2259 = vsel %vm2244, %v2211, 0.0
        %v2260 = vsel %vm2245, %v2228, 0.0
        %v2261 = vsel %vm2245, %v2229, 0.0
        %v2263 = vperm.slane %v1962, 0
        %v2264 = vperm.slane %v1962, 1
        %v2267 = vadd.f32 %v1516, %v2263
        %v2268 = vadd.f32 %v1950, %v2264
        %v2269 = vadd.f32 %v1517, %v2263
        %v2270 = vadd.f32 %v1951, %v2264
        %v2271 = vadd.f32 %v1518, %v2263
        %v2272 = vadd.f32 %v1952, %v2264
        %v2273 = vadd.f32 %v1519, %v2263
        %v2274 = vadd.f32 %v1953, %v2264
        %v2275 = vadd.f32 %v1520, %v2263
        %v2276 = vadd.f32 %v1954, %v2264
        %v2277 = vadd.f32 %v1521, %v2263
        %v2278 = vadd.f32 %v1955, %v2264
        %v2279 = vadd.f32 %v1522, %v2263
        %v2280 = vadd.f32 %v1956, %v2264
        %v2281 = vadd.f32 %v1523, %v2263
        %v2282 = vadd.f32 %v1957, %v2264
        %v2283 = vperm.slane %v1958, 0
        %v2284 = vperm.slane %v1959, 0
        %v2285 = vmul.f32 %v2165, %v2283
        %v2286 = vmul.f32 %v2166, %v2284
        %v2287 = vmul.f32 %v2167, %v2283
        %v2288 = vmul.f32 %v2168, %v2284
        %v2289 = vmul.f32 %v2169, %v2283
        %v2290 = vmul.f32 %v2170, %v2284
        %v2291 = vmul.f32 %v2171, %v2283
        %v2292 = vmul.f32 %v2172, %v2284
        %v2293 = vmul.f32 %v2173, %v2283
        %v2294 = vmul.f32 %v2174, %v2284
        %v2295 = vmul.f32 %v2175, %v2283
        %v2296 = vmul.f32 %v2176, %v2284
        %v2297 = vmul.f32 %v2177, %v2283
        %v2298 = vmul.f32 %v2178, %v2284
        %v2299 = vperm.slane %v1958, 1
        %v2300 = vperm.slane %v1959, 1
        %v2301 = vmul.f32 %v380, %v2299
        %v2302 = vmul.f32 %v381, %v2300
        %v2303 = vmul.f32 %v382, %v2299
        %v2304 = vmul.f32 %v383, %v2300
        %v2305 = vmul.f32 %v384, %v2299
        %v2306 = vmul.f32 %v385, %v2300
        %v2307 = vmul.f32 %v386, %v2299
        %v2308 = vmul.f32 %v387, %v2300
        %v2309 = vmul.f32 %v388, %v2299
        %v2310 = vmul.f32 %v389, %v2300
        %v2311 = vmul.f32 %v390, %v2299
        %v2312 = vmul.f32 %v391, %v2300
        %v2313 = vmul.f32 %v392, %v2299
        %v2314 = vmul.f32 %v393, %v2300
        %v2315 = vadd.f32 %v2285, %v2301
        %v2316 = vadd.f32 %v2286, %v2302
        %v2317 = vadd.f32 %v2287, %v2303
        %v2318 = vadd.f32 %v2288, %v2304
        %v2319 = vadd.f32 %v2289, %v2305
        %v2320 = vadd.f32 %v2290, %v2306
        %v2321 = vadd.f32 %v2291, %v2307
        %v2322 = vadd.f32 %v2292, %v2308
        %v2323 = vadd.f32 %v2293, %v2309
        %v2324 = vadd.f32 %v2294, %v2310
        %v2325 = vadd.f32 %v2295, %v2311
        %v2326 = vadd.f32 %v2296, %v2312
        %v2327 = vadd.f32 %v2297, %v2313
        %v2328 = vadd.f32 %v2298, %v2314
        %v2329 = vperm.slane %v1958, 2
        %v2330 = vperm.slane %v1959, 2
        %v2331 = vmul.f32 %v2246, %v2329
        %v2332 = vmul.f32 %v2247, %v2330
        %v2333 = vmul.f32 %v2248, %v2329
        %v2334 = vmul.f32 %v2249, %v2330
        %v2335 = vmul.f32 %v2250, %v2329
        %v2336 = vmul.f32 %v2251, %v2330
        %v2337 = vmul.f32 %v2252, %v2329
        %v2338 = vmul.f32 %v2253, %v2330
        %v2339 = vmul.f32 %v2254, %v2329
        %v2340 = vmul.f32 %v2255, %v2330
        %v2341 = vmul.f32 %v2256, %v2329
        %v2342 = vmul.f32 %v2257, %v2330
        %v2343 = vmul.f32 %v2258, %v2329
        %v2344 = vmul.f32 %v2259, %v2330
        %v2345 = vadd.f32 %v2315, %v2331
        %v2346 = vadd.f32 %v2316, %v2332
        %v2347 = vadd.f32 %v2317, %v2333
        %v2348 = vadd.f32 %v2318, %v2334
        %v2349 = vadd.f32 %v2319, %v2335
        %v2350 = vadd.f32 %v2320, %v2336
        %v2351 = vadd.f32 %v2321, %v2337
        %v2352 = vadd.f32 %v2322, %v2338
        %v2353 = vadd.f32 %v2323, %v2339
        %v2354 = vadd.f32 %v2324, %v2340
        %v2355 = vadd.f32 %v2325, %v2341
        %v2356 = vadd.f32 %v2326, %v2342
        %v2357 = vadd.f32 %v2327, %v2343
        %v2358 = vadd.f32 %v2328, %v2344
        %v2359 = vadd.f32 %v2267, 0.0
        %v2360 = vadd.f32 %v2268, 0.0
        %v2361 = vadd.f32 %v2269, %v2345
        %v2362 = vadd.f32 %v2270, %v2346
        %v2363 = vadd.f32 %v2271, %v2347
        %v2364 = vadd.f32 %v2272, %v2348
        %v2365 = vadd.f32 %v2273, %v2349
        %v2366 = vadd.f32 %v2274, %v2350
        %v2367 = vadd.f32 %v2275, %v2351
        %v2368 = vadd.f32 %v2276, %v2352
        %v2369 = vadd.f32 %v2277, %v2353
        %v2370 = vadd.f32 %v2278, %v2354
        %v2371 = vadd.f32 %v2279, %v2355
        %v2372 = vadd.f32 %v2280, %v2356
        %v2373 = vadd.f32 %v2281, %v2357
        %v2374 = vadd.f32 %v2282, %v2358
        %v2375 = vperm.slane %v1958, 3
        %v2376 = vperm.slane %v1959, 3
        %v2377 = vmul.f32 %v2165, %v2375
        %v2378 = vmul.f32 %v2166, %v2376
        %v2379 = vmul.f32 %v2167, %v2375
        %v2380 = vmul.f32 %v2168, %v2376
        %v2381 = vmul.f32 %v2169, %v2375
        %v2382 = vmul.f32 %v2170, %v2376
        %v2383 = vmul.f32 %v2171, %v2375
        %v2384 = vmul.f32 %v2172, %v2376
        %v2385 = vmul.f32 %v2173, %v2375
        %v2386 = vmul.f32 %v2174, %v2376
        %v2387 = vmul.f32 %v2175, %v2375
        %v2388 = vmul.f32 %v2176, %v2376
        %v2389 = vmul.f32 %v2177, %v2375
        %v2390 = vmul.f32 %v2178, %v2376
        %v2391 = vmul.f32 %v2179, %v2375
        %v2392 = vmul.f32 %v2180, %v2376
        %v2393 = vperm.slane %v1958, 4
        %v2394 = vperm.slane %v1959, 4
        %v2395 = vmul.f32 %v380, %v2393
        %v2396 = vmul.f32 %v381, %v2394
        %v2397 = vmul.f32 %v382, %v2393
        %v2398 = vmul.f32 %v383, %v2394
        %v2399 = vmul.f32 %v384, %v2393
        %v2400 = vmul.f32 %v385, %v2394
        %v2401 = vmul.f32 %v386, %v2393
        %v2402 = vmul.f32 %v387, %v2394
        %v2403 = vmul.f32 %v388, %v2393
        %v2404 = vmul.f32 %v389, %v2394
        %v2405 = vmul.f32 %v390, %v2393
        %v2406 = vmul.f32 %v391, %v2394
        %v2407 = vmul.f32 %v392, %v2393
        %v2408 = vmul.f32 %v393, %v2394
        %v2409 = vmul.f32 %v394, %v2393
        %v2410 = vmul.f32 %v395, %v2394
        %v2411 = vadd.f32 %v2377, %v2395
        %v2412 = vadd.f32 %v2378, %v2396
        %v2413 = vadd.f32 %v2379, %v2397
        %v2414 = vadd.f32 %v2380, %v2398
        %v2415 = vadd.f32 %v2381, %v2399
        %v2416 = vadd.f32 %v2382, %v2400
        %v2417 = vadd.f32 %v2383, %v2401
        %v2418 = vadd.f32 %v2384, %v2402
        %v2419 = vadd.f32 %v2385, %v2403
        %v2420 = vadd.f32 %v2386, %v2404
        %v2421 = vadd.f32 %v2387, %v2405
        %v2422 = vadd.f32 %v2388, %v2406
        %v2423 = vadd.f32 %v2389, %v2407
        %v2424 = vadd.f32 %v2390, %v2408
        %v2425 = vadd.f32 %v2391, %v2409
        %v2426 = vadd.f32 %v2392, %v2410
        %v2427 = vperm.slane %v1958, 5
        %v2428 = vperm.slane %v1959, 5
        %v2429 = vmul.f32 %v2246, %v2427
        %v2430 = vmul.f32 %v2247, %v2428
        %v2431 = vmul.f32 %v2248, %v2427
        %v2432 = vmul.f32 %v2249, %v2428
        %v2433 = vmul.f32 %v2250, %v2427
        %v2434 = vmul.f32 %v2251, %v2428
        %v2435 = vmul.f32 %v2252, %v2427
        %v2436 = vmul.f32 %v2253, %v2428
        %v2437 = vmul.f32 %v2254, %v2427
        %v2438 = vmul.f32 %v2255, %v2428
        %v2439 = vmul.f32 %v2256, %v2427
        %v2440 = vmul.f32 %v2257, %v2428
        %v2441 = vmul.f32 %v2258, %v2427
        %v2442 = vmul.f32 %v2259, %v2428
        %v2443 = vmul.f32 %v2260, %v2427
        %v2444 = vmul.f32 %v2261, %v2428
        %v2445 = vadd.f32 %v2411, %v2429
        %v2446 = vadd.f32 %v2412, %v2430
        %v2447 = vadd.f32 %v2413, %v2431
        %v2448 = vadd.f32 %v2414, %v2432
        %v2449 = vadd.f32 %v2415, %v2433
        %v2450 = vadd.f32 %v2416, %v2434
        %v2451 = vadd.f32 %v2417, %v2435
        %v2452 = vadd.f32 %v2418, %v2436
        %v2453 = vadd.f32 %v2419, %v2437
        %v2454 = vadd.f32 %v2420, %v2438
        %v2455 = vadd.f32 %v2421, %v2439
        %v2456 = vadd.f32 %v2422, %v2440
        %v2457 = vadd.f32 %v2423, %v2441
        %v2458 = vadd.f32 %v2424, %v2442
        %v2459 = vadd.f32 %v2425, %v2443
        %v2460 = vadd.f32 %v2426, %v2444
        %v2461 = vadd.f32 %v2359, %v2445
        %v2462 = vadd.f32 %v2360, %v2446
        %v2463 = vadd.f32 %v2361, %v2447
        %v2464 = vadd.f32 %v2362, %v2448
        %v2465 = vadd.f32 %v2363, %v2449
        %v2466 = vadd.f32 %v2364, %v2450
        %v2467 = vadd.f32 %v2365, %v2451
        %v2468 = vadd.f32 %v2366, %v2452
        %v2469 = vadd.f32 %v2367, %v2453
        %v2470 = vadd.f32 %v2368, %v2454
        %v2471 = vadd.f32 %v2369, %v2455
        %v2472 = vadd.f32 %v2370, %v2456
        %v2473 = vadd.f32 %v2371, %v2457
        %v2474 = vadd.f32 %v2372, %v2458
        %v2475 = vadd.f32 %v2373, %v2459
        %v2476 = vadd.f32 %v2374, %v2460
        %v2477 = vperm.slane %v1958, 6
        %v2478 = vperm.slane %v1959, 6
        %v2479 = vmul.f32 %v2167, %v2477
        %v2480 = vmul.f32 %v2168, %v2478
        %v2481 = vmul.f32 %v2169, %v2477
        %v2482 = vmul.f32 %v2170, %v2478
        %v2483 = vmul.f32 %v2171, %v2477
        %v2484 = vmul.f32 %v2172, %v2478
        %v2485 = vmul.f32 %v2173, %v2477
        %v2486 = vmul.f32 %v2174, %v2478
        %v2487 = vmul.f32 %v2175, %v2477
        %v2488 = vmul.f32 %v2176, %v2478
        %v2489 = vmul.f32 %v2177, %v2477
        %v2490 = vmul.f32 %v2178, %v2478
        %v2491 = vmul.f32 %v2179, %v2477
        %v2492 = vmul.f32 %v2180, %v2478
        %v2493 = vperm.slane %v1958, 7
        %v2494 = vperm.slane %v1959, 7
        %v2495 = vmul.f32 %v382, %v2493
        %v2496 = vmul.f32 %v383, %v2494
        %v2497 = vmul.f32 %v384, %v2493
        %v2498 = vmul.f32 %v385, %v2494
        %v2499 = vmul.f32 %v386, %v2493
        %v2500 = vmul.f32 %v387, %v2494
        %v2501 = vmul.f32 %v388, %v2493
        %v2502 = vmul.f32 %v389, %v2494
        %v2503 = vmul.f32 %v390, %v2493
        %v2504 = vmul.f32 %v391, %v2494
        %v2505 = vmul.f32 %v392, %v2493
        %v2506 = vmul.f32 %v393, %v2494
        %v2507 = vmul.f32 %v394, %v2493
        %v2508 = vmul.f32 %v395, %v2494
        %v2509 = vadd.f32 %v2479, %v2495
        %v2510 = vadd.f32 %v2480, %v2496
        %v2511 = vadd.f32 %v2481, %v2497
        %v2512 = vadd.f32 %v2482, %v2498
        %v2513 = vadd.f32 %v2483, %v2499
        %v2514 = vadd.f32 %v2484, %v2500
        %v2515 = vadd.f32 %v2485, %v2501
        %v2516 = vadd.f32 %v2486, %v2502
        %v2517 = vadd.f32 %v2487, %v2503
        %v2518 = vadd.f32 %v2488, %v2504
        %v2519 = vadd.f32 %v2489, %v2505
        %v2520 = vadd.f32 %v2490, %v2506
        %v2521 = vadd.f32 %v2491, %v2507
        %v2522 = vadd.f32 %v2492, %v2508
        %v2523 = vperm.slane %v1960, 0
        %v2524 = vperm.slane %v1961, 0
        %v2525 = vmul.f32 %v2248, %v2523
        %v2526 = vmul.f32 %v2249, %v2524
        %v2527 = vmul.f32 %v2250, %v2523
        %v2528 = vmul.f32 %v2251, %v2524
        %v2529 = vmul.f32 %v2252, %v2523
        %v2530 = vmul.f32 %v2253, %v2524
        %v2531 = vmul.f32 %v2254, %v2523
        %v2532 = vmul.f32 %v2255, %v2524
        %v2533 = vmul.f32 %v2256, %v2523
        %v2534 = vmul.f32 %v2257, %v2524
        %v2535 = vmul.f32 %v2258, %v2523
        %v2536 = vmul.f32 %v2259, %v2524
        %v2537 = vmul.f32 %v2260, %v2523
        %v2538 = vmul.f32 %v2261, %v2524
        %v2539 = vadd.f32 %v2509, %v2525
        %v2540 = vadd.f32 %v2510, %v2526
        %v2541 = vadd.f32 %v2511, %v2527
        %v2542 = vadd.f32 %v2512, %v2528
        %v2543 = vadd.f32 %v2513, %v2529
        %v2544 = vadd.f32 %v2514, %v2530
        %v2545 = vadd.f32 %v2515, %v2531
        %v2546 = vadd.f32 %v2516, %v2532
        %v2547 = vadd.f32 %v2517, %v2533
        %v2548 = vadd.f32 %v2518, %v2534
        %v2549 = vadd.f32 %v2519, %v2535
        %v2550 = vadd.f32 %v2520, %v2536
        %v2551 = vadd.f32 %v2521, %v2537
        %v2552 = vadd.f32 %v2522, %v2538
        %v2553 = vadd.f32 %v2461, %v2539
        %v2554 = vadd.f32 %v2462, %v2540
        %v2555 = vadd.f32 %v2463, %v2541
        %v2556 = vadd.f32 %v2464, %v2542
        %v2557 = vadd.f32 %v2465, %v2543
        %v2558 = vadd.f32 %v2466, %v2544
        %v2559 = vadd.f32 %v2467, %v2545
        %v2560 = vadd.f32 %v2468, %v2546
        %v2561 = vadd.f32 %v2469, %v2547
        %v2562 = vadd.f32 %v2470, %v2548
        %v2563 = vadd.f32 %v2471, %v2549
        %v2564 = vadd.f32 %v2472, %v2550
        %v2565 = vadd.f32 %v2473, %v2551
        %v2566 = vadd.f32 %v2474, %v2552
        %v2567 = vadd.f32 %v2475, 0.0
        %v2568 = vadd.f32 %v2476, 0.0
        %2569 = vst [vmem:[%s379] sm:$0xff] %v2553
        %2570 = vst [vmem:[%s379 + $0x8] sm:$0xff] %v2554
        %2571 = vst [vmem:[%s379 + $0x10] sm:$0xff] %v2555
        %2572 = vst [vmem:[%s379 + $0x18] sm:$0xff] %v2556
        %2573 = vst [vmem:[%s379 + $0x20] sm:$0xff] %v2557
        %2574 = vst [vmem:[%s379 + $0x28] sm:$0xff] %v2558
        %2575 = vst [vmem:[%s379 + $0x30] sm:$0xff] %v2559
        %2576 = vst [vmem:[%s379 + $0x38] sm:$0xff] %v2560
        %2577 = vst [vmem:[%s379 + $0x40] sm:$0xff] %v2561
        %2578 = vst [vmem:[%s379 + $0x48] sm:$0xff] %v2562
        %2579 = vst [vmem:[%s379 + $0x50] sm:$0xff] %v2563
        %2580 = vst [vmem:[%s379 + $0x58] sm:$0xff] %v2564
        %2581 = vst [vmem:[%s379 + $0x60] sm:$0xff] %v2565
        %2582 = vst [vmem:[%s379 + $0x68] sm:$0xff] %v2566
        %2583 = vst [vmem:[%s379 + $0x70] sm:$0xff] %v2567
        %2584 = vst [vmem:[%s379 + $0x78] sm:$0xff] %v2568
        %s2585 = sand.u32 %s187, 1
        %s2586 = scalar_lea.sflag [#allocation4], %s2585
        %s2587 = sand.u32 %s187, 1
        %s2588 = smul.addr %s2587, 128
        %s2589 = scalar_lea.vmem [#allocation13], %s2588
        // Predicated region
        $region73: #{tpu_custom_call.1} parent=47 // pred_check
          %p2590 = pneg %p197
        $region74: #{tpu_custom_call.1} parent=47 // pred_check_branch
          %2592 = sbr.rel (%p2590) target = $region76
        $region75: #{tpu_custom_call.1} parent=47 // pred_region
          %2594 = vsyncadd %s2586, 0
          %s2595 = smul.addr %s27, 16
          %s2596 = smul.addr %s2595, 8
          %s2597 = scalar_lea.hbm %s7, %s2596
          %s2598 = sshll.u32 %s2589, 4
          %s2599 = int_to_ptr.vmem [resolvable:$true] %s2598
          %s2600 = sshll.u32 %s2597, 4
          %s2601 = int_to_ptr.hbm [resolvable:$true] %s2600
          %2606 = dma.vmem_to_hbm [thread:$0]  %s2599, 2048, %s2601, %s2586, 256, 256, 16
        $region76: #{tpu_custom_call.1} parent=47 // pred_fallthru
          _
      $region48: #{tpu_custom_call.1} parent=5 // pred_fallthru
        _
      %p2607 = scmp.le.s32.totalorder 2, %s22
      // Predicated region
      $region77: #{tpu_custom_call.1} parent=5 // pred_check
        %p2608 = pneg %p2607
      $region78: #{tpu_custom_call.1} parent=5 // pred_check_branch
        %2610 = sbr.rel (%p2608) target = $region80
      $region79: #{tpu_custom_call.1} parent=5 // pred_region
        %s2611 = ssub.s32 %s22, 2
        // Predicated region
        $region81: #{tpu_custom_call.1} parent=79 // pred_check
          %p2612 = pneg %p203
        $region82: #{tpu_custom_call.1} parent=79 // pred_check_branch
          %2614 = sbr.rel (%p2612) target = $region84
        $region83: #{tpu_custom_call.1} parent=79 // pred_region
          %s2615 = sand.u32 %s188, 1
          %s2616 = scalar_lea.sflag [#allocation4], %s2615
          %s2617 = sand.u32 %s188, 1
          %s2618 = smul.addr %s2617, 128
          %s2619 = scalar_lea.vmem [#allocation13], %s2618
          %2621 = dma.done %s2616, 2048
        $region84: #{tpu_custom_call.1} parent=79 // pred_fallthru
          _
      $region80: #{tpu_custom_call.1} parent=5 // pred_fallthru
        _
    $region6: #{tpu_custom_call.1} parent=1 // loop_footer
      %s26 = sadd.s32 1, %s22
    $region7: #{tpu_custom_call.1} parent=1 // loop_footer_branch
      %21 = sbr.rel target = $region3
    $region8: #{tpu_custom_call.1} parent=1 // loop_exit
      _
    %2622 = vsyncpa [#allocation3], 1
    %s2623 = scalar_lea.sflag [#allocation3], 1
    %2624 = vsyncpa %s2623, 1
    %2625 = vsyncpa [#allocation6], 1
    %2626 = vsyncpa [#allocation9], 1
    %2627 = vsyncpa [#allocation12], 1
    %2628 = vsyncpa [#allocation4], 1
    %s2629 = scalar_lea.sflag [#allocation4], 1
    %2630 = vsyncpa %s2629, 1

</llo_original>
